<compile_context>
chip_gen: v5e
topology: v5e:2x2
jax: 0.10.0
libtpu: 0.0.40
codegen_flags: <defaults>
</compile_context>

<pallas_src>
import functools

import numpy as np
import jax
import jax.numpy as jnp
from jax.experimental import pallas as pl
from jax.experimental.pallas import tpu as pltpu


def _round_up(x, m):
    return ((x + m - 1) // m) * m


def _pe_combine_kernel(row_ref, col_ref, out_ref):
    """out[k, r, j] = row[0,k,r,0]*col[0,k,0,j] + row[1,k,r,0]*col[1,k,0,j].

    row_ref: (2, 2C, th, 1)   col_ref: (2, 2C, 1, tw)   out_ref: (2C, th, tw)
    Pure broadcasting FMAs on the VPU — no transcendentals, no matmul.
    """
    out_ref[...] = row_ref[0] * col_ref[0] + row_ref[1] * col_ref[1]


def _tpu_vmem_budget_and_limit():
    """Generation-aware VMEM budget (for tile picking) and scoped-VMEM limit."""
    cap = None
    try:
        cap = getattr(pltpu.get_tpu_info(), "vmem_capacity_bytes", None)
    except Exception:
        cap = None
    if not cap:
        cap = 64 << 20  # conservative fallback: v7x per-TensorCore capacity
    limit = min(cap // 2, 64 << 20)
    budget = min((cap * 3) // 8, 48 << 20, limit - (2 << 20))
    return budget, limit


def _num_tensorcores():
    """Best-effort TensorCore-per-device count (1 is always a safe answer)."""
    try:
        info = pltpu.get_tpu_info()
        for name in ("num_cores", "core_count", "num_tensorcores"):
            v = getattr(info, name, None)
            if isinstance(v, int) and v > 0:
                return v
    except Exception:
        pass
    try:
        kind = jax.devices()[0].device_kind.lower()
        if any(tag in kind for tag in ("v4", "v5p", "v7", "7x")):
            return 2
    except Exception:
        pass
    return 1


def _pick_tiles(h, w, two_c, budget_bytes, num_cores):
    """Choose (th, tw): biggest tiles fitting the VMEM budget; on multi-TC
    chips prefer a grid whose step count is a (>=1x) multiple of num_cores."""

    def vmem_bytes(th, tw):
        thp = _round_up(th, 8)
        twp = _round_up(tw, 128)
        row_blk = 2 * two_c * thp * 128 * 4   # (2,2C,th,1): lane pads 1 -> 128
        col_blk = 2 * two_c * 8 * twp * 4     # (2,2C,1,tw): sublane pads 1 -> 8
        out_blk = two_c * thp * twp * 4       # (2C,th,tw)
        return 2 * (row_blk + col_blk + out_blk)  # double-buffered

    if h % 8 == 0:
        th_cands = [t for t in range(8, h + 1, 8) if h % t == 0]
    else:
        th_cands = [h]  # full-height block is always a legal BlockSpec
    min_th = th_cands[0]

    # Width tile: full w if it fits; else the largest 128-multiple divisor.
    tw = w
    if vmem_bytes(min_th, tw) > budget_bytes:
        cand = (w // 128) * 128
        while cand >= 128:
            if w % cand == 0 and vmem_bytes(min_th, cand) <= budget_bytes:
                tw = cand
                break
            cand -= 128
    gw = -(-w // tw)

    fitting = [t for t in th_cands if vmem_bytes(t, tw) <= budget_bytes] or [min_th]
    th = max(fitting)
    if num_cores > 1:
        pref = [t for t in fitting
                if (-(-h // t)) * gw >= num_cores
                and ((-(-h // t)) * gw) % num_cores == 0]
        if pref:
            th = max(pref)
    return th, tw


def _build_tables(size, gaussian_matrix):
    """Tiny per-row / per-column sin-cos tables (all transcendentals live here)."""
    h, w = size
    g = (2.0 * np.pi) * gaussian_matrix.astype(jnp.float32)          # (2, C)

    # Pixel-centre coordinates normalized to [0, 1] then mapped to [-1, 1].
    y = 2.0 * (jnp.arange(h, dtype=jnp.float32) + 0.5) / h - 1.0     # (h,)
    x = 2.0 * (jnp.arange(w, dtype=jnp.float32) + 0.5) / w - 1.0     # (w,)

    ay = g[1][:, None] * y[None, :]                                  # (C, h)
    ax = g[0][:, None] * x[None, :]                                  # (C, w)
    sin_y, cos_y = jnp.sin(ay), jnp.cos(ay)
    sin_x, cos_x = jnp.sin(ax), jnp.cos(ax)

    #  k <  C (sin half): sinB*cosA + cosB*sinA = sin(A+B)
    #  k >= C (cos half): cosB*cosA - sinB*sinA = cos(A+B)
    row_a = jnp.concatenate([sin_y, cos_y], axis=0)                  # (2C, h)
    row_b = jnp.concatenate([cos_y, -sin_y], axis=0)                 # (2C, h)
    col_a = jnp.concatenate([cos_x, cos_x], axis=0)                  # (2C, w)
    col_b = jnp.concatenate([sin_x, sin_x], axis=0)                  # (2C, w)

    row_tab = jnp.stack([row_a, row_b], axis=0)[..., None]           # (2, 2C, h, 1)
    col_tab = jnp.stack([col_a, col_b], axis=0)[:, :, None, :]       # (2, 2C, 1, w)
    return row_tab, col_tab


@functools.partial(jax.jit, static_argnums=0)
def position_embedding_random_forward(size, gaussian_matrix):
    """JAX/Pallas equivalent of PositionEmbeddingRandom.forward(size).

    Args:
      size: (h, w) static ints.
      gaussian_matrix: (2, num_pos_feats) float32 array.

    Returns:
      (2*num_pos_feats, h, w) float32 array (same layout as the PyTorch output).
    """
    h, w = size
    c = gaussian_matrix.shape[1]
    two_c = 2 * c

    row_tab, col_tab = _build_tables(size, gaussian_matrix)

    budget, vmem_limit = _tpu_vmem_budget_and_limit()
    th, tw = _pick_tiles(h, w, two_c, budget, _num_tensorcores())
    grid = (-(-h // th), -(-w // tw))

    row_spec = pl.BlockSpec((2, two_c, th, 1), lambda i, j: (0, 0, i, 0))
    col_spec = pl.BlockSpec((2, two_c, 1, tw), lambda i, j: (0, 0, 0, j))
    out_spec = pl.BlockSpec((two_c, th, tw), lambda i, j: (0, i, j))

    cost = pl.CostEstimate(
        flops=3 * two_c * h * w,                               # 2 mul + 1 add / elem
        transcendentals=0,
        bytes_accessed=4 * (two_c * h * w + 2 * two_c * h + 2 * two_c * w),
    )

    return pl.pallas_call(
        _pe_combine_kernel,
        out_shape=jax.ShapeDtypeStruct((two_c, h, w), jnp.float32),
        grid_spec=pltpu.PrefetchScalarGridSpec(
            num_scalar_prefetch=0,
            grid=grid,
            in_specs=[row_spec, col_spec],
            out_specs=out_spec,
        ),
        compiler_params=pltpu.CompilerParams(
            dimension_semantics=("parallel", "parallel"),
            vmem_limit_bytes=vmem_limit,
        ),
        cost_estimate=cost,
    )(row_tab, col_tab)


def _reference_forward(size, gaussian_matrix):
    """Pure-JAX reference mirroring the PyTorch module exactly."""
    h, w = size
    ones = jnp.ones((h, w), dtype=jnp.float32)
    y_embed = (jnp.cumsum(ones, axis=0) - 0.5) / h
    x_embed = (jnp.cumsum(ones, axis=1) - 0.5) / w
    coords = jnp.stack([x_embed, y_embed], axis=-1)          # (h, w, 2)
    coords = 2.0 * coords - 1.0
    coords = coords @ gaussian_matrix.astype(jnp.float32)    # (h, w, C)
    coords = 2.0 * np.pi * coords
    pe = jnp.concatenate([jnp.sin(coords), jnp.cos(coords)], axis=-1)
    return jnp.transpose(pe, (2, 0, 1))


if __name__ == "__main__":
    # Default SAM config: num_pos_feats=64 -> 2C = 128; small 16x16 grid.
    g64 = jax.random.normal(jax.random.PRNGKey(0), (2, 64), dtype=jnp.float32)
    pe = jax.block_until_ready(position_embedding_random_forward((16, 16), g64))
    ref = jax.block_until_ready(_reference_forward((16, 16), g64))
    assert pe.shape == (128, 16, 16), pe.shape
    assert pe.dtype == jnp.float32, pe.dtype
    # Slightly looser atol: angle-addition identity differs from direct sin/cos
    # of the summed angle by a few f32 ulps of the (O(10)) angle.
    np.testing.assert_allclose(np.asarray(pe), np.asarray(ref),
                               rtol=1e-5, atol=3e-5)

    # Non-default feature count: no channel padding / post-kernel concat anymore.
    g32 = jax.random.normal(jax.random.PRNGKey(1), (2, 32), dtype=jnp.float32)
    pe32 = jax.block_until_ready(position_embedding_random_forward((8, 8), g32))
    ref32 = jax.block_until_ready(_reference_forward((8, 8), g32))
    assert pe32.shape == (64, 8, 8), pe32.shape
    np.testing.assert_allclose(np.asarray(pe32), np.asarray(ref32),
                               rtol=1e-5, atol=3e-5)

    # Awkward (non-8/128-aligned) spatial size exercises full-dim blocks.
    g16 = jax.random.normal(jax.random.PRNGKey(2), (2, 16), dtype=jnp.float32)
    pe12 = jax.block_until_ready(position_embedding_random_forward((12, 20), g16))
    ref12 = jax.block_until_ready(_reference_forward((12, 20), g16))
    assert pe12.shape == (32, 12, 20), pe12.shape
    np.testing.assert_allclose(np.asarray(pe12), np.asarray(ref12),
                               rtol=1e-5, atol=3e-5)

    print("KERNEL_OK")
</pallas_src>

<mosaic_0001>
module attributes {stable_mosaic.version = 11 : i64} {
  func.func @_pe_combine_kernel(%arg0: i32, %arg1: i32, %arg2: memref<2x128x16x1xf32, #tpu.memory_space<vmem>>, %arg3: memref<2x128x1x16xf32, #tpu.memory_space<vmem>>, %arg4: memref<128x16x16xf32, #tpu.memory_space<vmem>>) attributes {dimension_semantics = [#tpu.dimension_semantics<parallel>, #tpu.dimension_semantics<parallel>], iteration_bounds = array<i64: 1, 1>, scalar_prefetch = 0 : i64, scratch_operands = 0 : i64, tpu.core_type = #tpu.core_type<tc>, window_params = [{transform_indices = @transform_0, window_bounds = array<i64: 2, 128, 16, 1>}, {transform_indices = @transform_1, window_bounds = array<i64: 2, 128, 1, 16>}, {transform_indices = @transform_2, window_bounds = array<i64: 128, 16, 16>}]} {
    %c0 = arith.constant 0 : index
    %c0_0 = arith.constant 0 : index
    %c0_1 = arith.constant 0 : index
    %c0_2 = arith.constant 0 : index
    %0 = vector.load %arg2[%c0, %c0_0, %c0_1, %c0_2] : memref<2x128x16x1xf32, #tpu.memory_space<vmem>>, vector<1x128x16x1xf32>
    %1 = vector.shape_cast %0 : vector<1x128x16x1xf32> to vector<128x16x1xf32>
    %c0_3 = arith.constant 0 : index
    %c0_4 = arith.constant 0 : index
    %c0_5 = arith.constant 0 : index
    %c0_6 = arith.constant 0 : index
    %2 = vector.load %arg3[%c0_3, %c0_4, %c0_5, %c0_6] : memref<2x128x1x16xf32, #tpu.memory_space<vmem>>, vector<1x128x1x16xf32>
    %3 = vector.shape_cast %2 : vector<1x128x1x16xf32> to vector<128x1x16xf32>
    %4 = vector.broadcast %1 : vector<128x16x1xf32> to vector<128x16x16xf32>
    %5 = vector.broadcast %3 : vector<128x1x16xf32> to vector<128x16x16xf32>
    %6 = arith.mulf %4, %5 : vector<128x16x16xf32>
    %c1 = arith.constant 1 : index
    %c0_7 = arith.constant 0 : index
    %c0_8 = arith.constant 0 : index
    %c0_9 = arith.constant 0 : index
    %7 = vector.load %arg2[%c1, %c0_7, %c0_8, %c0_9] : memref<2x128x16x1xf32, #tpu.memory_space<vmem>>, vector<1x128x16x1xf32>
    %8 = vector.shape_cast %7 : vector<1x128x16x1xf32> to vector<128x16x1xf32>
    %c1_10 = arith.constant 1 : index
    %c0_11 = arith.constant 0 : index
    %c0_12 = arith.constant 0 : index
    %c0_13 = arith.constant 0 : index
    %9 = vector.load %arg3[%c1_10, %c0_11, %c0_12, %c0_13] : memref<2x128x1x16xf32, #tpu.memory_space<vmem>>, vector<1x128x1x16xf32>
    %10 = vector.shape_cast %9 : vector<1x128x1x16xf32> to vector<128x1x16xf32>
    %11 = vector.broadcast %8 : vector<128x16x1xf32> to vector<128x16x16xf32>
    %12 = vector.broadcast %10 : vector<128x1x16xf32> to vector<128x16x16xf32>
    %13 = arith.mulf %11, %12 : vector<128x16x16xf32>
    %14 = arith.addf %6, %13 : vector<128x16x16xf32>
    %c0_14 = arith.constant 0 : index
    %c0_15 = arith.constant 0 : index
    %c0_16 = arith.constant 0 : index
    %15 = vector.load %arg4[%c0_14, %c0_15, %c0_16] : memref<128x16x16xf32, #tpu.memory_space<vmem>>, vector<128x16x16xf32>
    tpu.vector_store %arg4[%c0_14, %c0_15, %c0_16], %14 {strides = array<i32>} : memref<128x16x16xf32, #tpu.memory_space<vmem>>, vector<128x16x16xf32>,
    return
  }
  func.func @transform_0(%arg0: i32, %arg1: i32) -> (i32, i32, i32, i32) {
    %c0_i32 = arith.constant 0 : i32
    %c0_i32_0 = arith.constant 0 : i32
    %c0_i32_1 = arith.constant 0 : i32
    %c0_i32_2 = arith.constant 0 : i32
    return %c0_i32, %c0_i32_0, %arg0, %c0_i32_1 : i32, i32, i32, i32
  }
  func.func @transform_1(%arg0: i32, %arg1: i32) -> (i32, i32, i32, i32) {
    %c0_i32 = arith.constant 0 : i32
    %c0_i32_0 = arith.constant 0 : i32
    %c0_i32_1 = arith.constant 0 : i32
    %c0_i32_2 = arith.constant 0 : i32
    return %c0_i32, %c0_i32_0, %c0_i32_1, %arg1 : i32, i32, i32, i32
  }
  func.func @transform_2(%arg0: i32, %arg1: i32) -> (i32, i32, i32) {
    %c0_i32 = arith.constant 0 : i32
    %c0_i32_0 = arith.constant 0 : i32
    return %c0_i32, %arg0, %arg1 : i32, i32, i32
  }
}

</mosaic_0001>

<llo_original>
// kernel: position_embedding_random_forward.1
$region0: #{position_embedding_random_forward.1}
  #allocation0 [shape = 'u32[]', space=smem, size = 0x4, offset = 0x4, fixed_abs, tag = 'smem constant byte address 0x4 - core index']
  #allocation1 [shape = 'u32[72,128]{1,0:T(1,128)}', space=vmem, size = 0x9000, scoped, tag = 'internal scratch']
  %s0 = inlined_call_operand.vmem [shape: f32[2,128,16,1], index: 0, kind: input, shape index: {}]
  %s1 = inlined_call_operand.vmem [shape: f32[2,128,1,16], index: 1, kind: input, shape index: {}]
  %s2 = inlined_call_operand.vmem [shape: f32[128,16,16], index: 2, kind: output, shape index: {}]
  %s3 = sld [smem:[#allocation0]]
  $region18: #{position_embedding_random_forward.1} parent=0
    _
  %s5 = ssub.s32 1, %s3
  %s6 = scalar_select 0, %s5, %s3
  // Predicated region
  $region2: #{position_embedding_random_forward.1} parent=0 // pred_check
    _
  $region3: #{position_embedding_random_forward.1} parent=0 // pred_check_branch
    %8 = sbr.rel (0) target = $region5
  $region4: #{position_embedding_random_forward.1} parent=0 // pred_region
    _
  $region5: #{position_embedding_random_forward.1} parent=0 // pred_fallthru
    _
  // Predicated region
  $region6: #{position_embedding_random_forward.1} parent=0 // pred_check
    _
  $region7: #{position_embedding_random_forward.1} parent=0 // pred_check_branch
    %10 = sbr.rel (0) target = $region9
  $region8: #{position_embedding_random_forward.1} parent=0 // pred_region
    _
  $region9: #{position_embedding_random_forward.1} parent=0 // pred_fallthru
    _
  %v11 = vld [vmem:[%s0] sm:$0xff]
  %v12 = vld [vmem:[%s0 + $0x8] sm:$0xff]
  %v13 = vld [vmem:[%s0 + $0x10] sm:$0xff]
  %v14 = vld [vmem:[%s0 + $0x18] sm:$0xff]
  %v15 = vld [vmem:[%s0 + $0x20] sm:$0xff]
  %v16 = vld [vmem:[%s0 + $0x28] sm:$0xff]
  %v17 = vld [vmem:[%s0 + $0x30] sm:$0xff]
  %v18 = vld [vmem:[%s0 + $0x38] sm:$0xff]
  %v19 = vld [vmem:[%s0 + $0x40] sm:$0xff]
  %v20 = vld [vmem:[%s0 + $0x48] sm:$0xff]
  %v21 = vld [vmem:[%s0 + $0x50] sm:$0xff]
  %v22 = vld [vmem:[%s0 + $0x58] sm:$0xff]
  %v23 = vld [vmem:[%s0 + $0x60] sm:$0xff]
  %v24 = vld [vmem:[%s0 + $0x68] sm:$0xff]
  %v25 = vld [vmem:[%s0 + $0x70] sm:$0xff]
  %v26 = vld [vmem:[%s0 + $0x78] sm:$0xff]
  %v27 = vld [vmem:[%s0 + $0x80] sm:$0xff]
  %v28 = vld [vmem:[%s0 + $0x88] sm:$0xff]
  %v29 = vld [vmem:[%s0 + $0x90] sm:$0xff]
  %v30 = vld [vmem:[%s0 + $0x98] sm:$0xff]
  %v31 = vld [vmem:[%s0 + $0xa0] sm:$0xff]
  %v32 = vld [vmem:[%s0 + $0xa8] sm:$0xff]
  %v33 = vld [vmem:[%s0 + $0xb0] sm:$0xff]
  %v34 = vld [vmem:[%s0 + $0xb8] sm:$0xff]
  %v35 = vld [vmem:[%s0 + $0xc0] sm:$0xff]
  %v36 = vld [vmem:[%s0 + $0xc8] sm:$0xff]
  %v37 = vld [vmem:[%s0 + $0xd0] sm:$0xff]
  %v38 = vld [vmem:[%s0 + $0xd8] sm:$0xff]
  %v39 = vld [vmem:[%s0 + $0xe0] sm:$0xff]
  %v40 = vld [vmem:[%s0 + $0xe8] sm:$0xff]
  %v41 = vld [vmem:[%s0 + $0xf0] sm:$0xff]
  %v42 = vld [vmem:[%s0 + $0xf8] sm:$0xff]
  %v43 = vld [vmem:[%s0 + $0x100] sm:$0xff]
  %v44 = vld [vmem:[%s0 + $0x108] sm:$0xff]
  %v45 = vld [vmem:[%s0 + $0x110] sm:$0xff]
  %v46 = vld [vmem:[%s0 + $0x118] sm:$0xff]
  %v47 = vld [vmem:[%s0 + $0x120] sm:$0xff]
  %v48 = vld [vmem:[%s0 + $0x128] sm:$0xff]
  %v49 = vld [vmem:[%s0 + $0x130] sm:$0xff]
  %v50 = vld [vmem:[%s0 + $0x138] sm:$0xff]
  %v51 = vld [vmem:[%s0 + $0x140] sm:$0xff]
  %v52 = vld [vmem:[%s0 + $0x148] sm:$0xff]
  %v53 = vld [vmem:[%s0 + $0x150] sm:$0xff]
  %v54 = vld [vmem:[%s0 + $0x158] sm:$0xff]
  %v55 = vld [vmem:[%s0 + $0x160] sm:$0xff]
  %v56 = vld [vmem:[%s0 + $0x168] sm:$0xff]
  %v57 = vld [vmem:[%s0 + $0x170] sm:$0xff]
  %v58 = vld [vmem:[%s0 + $0x178] sm:$0xff]
  %v59 = vld [vmem:[%s0 + $0x180] sm:$0xff]
  %v60 = vld [vmem:[%s0 + $0x188] sm:$0xff]
  %v61 = vld [vmem:[%s0 + $0x190] sm:$0xff]
  %v62 = vld [vmem:[%s0 + $0x198] sm:$0xff]
  %v63 = vld [vmem:[%s0 + $0x1a0] sm:$0xff]
  %v64 = vld [vmem:[%s0 + $0x1a8] sm:$0xff]
  %v65 = vld [vmem:[%s0 + $0x1b0] sm:$0xff]
  %v66 = vld [vmem:[%s0 + $0x1b8] sm:$0xff]
  %v67 = vld [vmem:[%s0 + $0x1c0] sm:$0xff]
  %v68 = vld [vmem:[%s0 + $0x1c8] sm:$0xff]
  %v69 = vld [vmem:[%s0 + $0x1d0] sm:$0xff]
  %v70 = vld [vmem:[%s0 + $0x1d8] sm:$0xff]
  %v71 = vld [vmem:[%s0 + $0x1e0] sm:$0xff]
  %v72 = vld [vmem:[%s0 + $0x1e8] sm:$0xff]
  %v73 = vld [vmem:[%s0 + $0x1f0] sm:$0xff]
  %v74 = vld [vmem:[%s0 + $0x1f8] sm:$0xff]
  %v75 = vld [vmem:[%s0 + $0x200] sm:$0xff]
  %v76 = vld [vmem:[%s0 + $0x208] sm:$0xff]
  %v77 = vld [vmem:[%s0 + $0x210] sm:$0xff]
  %v78 = vld [vmem:[%s0 + $0x218] sm:$0xff]
  %v79 = vld [vmem:[%s0 + $0x220] sm:$0xff]
  %v80 = vld [vmem:[%s0 + $0x228] sm:$0xff]
  %v81 = vld [vmem:[%s0 + $0x230] sm:$0xff]
  %v82 = vld [vmem:[%s0 + $0x238] sm:$0xff]
  %v83 = vld [vmem:[%s0 + $0x240] sm:$0xff]
  %v84 = vld [vmem:[%s0 + $0x248] sm:$0xff]
  %v85 = vld [vmem:[%s0 + $0x250] sm:$0xff]
  %v86 = vld [vmem:[%s0 + $0x258] sm:$0xff]
  %v87 = vld [vmem:[%s0 + $0x260] sm:$0xff]
  %v88 = vld [vmem:[%s0 + $0x268] sm:$0xff]
  %v89 = vld [vmem:[%s0 + $0x270] sm:$0xff]
  %v90 = vld [vmem:[%s0 + $0x278] sm:$0xff]
  %v91 = vld [vmem:[%s0 + $0x280] sm:$0xff]
  %v92 = vld [vmem:[%s0 + $0x288] sm:$0xff]
  %v93 = vld [vmem:[%s0 + $0x290] sm:$0xff]
  %v94 = vld [vmem:[%s0 + $0x298] sm:$0xff]
  %v95 = vld [vmem:[%s0 + $0x2a0] sm:$0xff]
  %v96 = vld [vmem:[%s0 + $0x2a8] sm:$0xff]
  %v97 = vld [vmem:[%s0 + $0x2b0] sm:$0xff]
  %v98 = vld [vmem:[%s0 + $0x2b8] sm:$0xff]
  %v99 = vld [vmem:[%s0 + $0x2c0] sm:$0xff]
  %v100 = vld [vmem:[%s0 + $0x2c8] sm:$0xff]
  %v101 = vld [vmem:[%s0 + $0x2d0] sm:$0xff]
  %v102 = vld [vmem:[%s0 + $0x2d8] sm:$0xff]
  %v103 = vld [vmem:[%s0 + $0x2e0] sm:$0xff]
  %v104 = vld [vmem:[%s0 + $0x2e8] sm:$0xff]
  %v105 = vld [vmem:[%s0 + $0x2f0] sm:$0xff]
  %v106 = vld [vmem:[%s0 + $0x2f8] sm:$0xff]
  %v107 = vld [vmem:[%s0 + $0x300] sm:$0xff]
  %v108 = vld [vmem:[%s0 + $0x308] sm:$0xff]
  %v109 = vld [vmem:[%s0 + $0x310] sm:$0xff]
  %v110 = vld [vmem:[%s0 + $0x318] sm:$0xff]
  %v111 = vld [vmem:[%s0 + $0x320] sm:$0xff]
  %v112 = vld [vmem:[%s0 + $0x328] sm:$0xff]
  %v113 = vld [vmem:[%s0 + $0x330] sm:$0xff]
  %v114 = vld [vmem:[%s0 + $0x338] sm:$0xff]
  %v115 = vld [vmem:[%s0 + $0x340] sm:$0xff]
  %v116 = vld [vmem:[%s0 + $0x348] sm:$0xff]
  %v117 = vld [vmem:[%s0 + $0x350] sm:$0xff]
  %v118 = vld [vmem:[%s0 + $0x358] sm:$0xff]
  %v119 = vld [vmem:[%s0 + $0x360] sm:$0xff]
  %v120 = vld [vmem:[%s0 + $0x368] sm:$0xff]
  %v121 = vld [vmem:[%s0 + $0x370] sm:$0xff]
  %v122 = vld [vmem:[%s0 + $0x378] sm:$0xff]
  %v123 = vld [vmem:[%s0 + $0x380] sm:$0xff]
  %v124 = vld [vmem:[%s0 + $0x388] sm:$0xff]
  %v125 = vld [vmem:[%s0 + $0x390] sm:$0xff]
  %v126 = vld [vmem:[%s0 + $0x398] sm:$0xff]
  %v127 = vld [vmem:[%s0 + $0x3a0] sm:$0xff]
  %v128 = vld [vmem:[%s0 + $0x3a8] sm:$0xff]
  %v129 = vld [vmem:[%s0 + $0x3b0] sm:$0xff]
  %v130 = vld [vmem:[%s0 + $0x3b8] sm:$0xff]
  %v131 = vld [vmem:[%s0 + $0x3c0] sm:$0xff]
  %v132 = vld [vmem:[%s0 + $0x3c8] sm:$0xff]
  %v133 = vld [vmem:[%s0 + $0x3d0] sm:$0xff]
  %v134 = vld [vmem:[%s0 + $0x3d8] sm:$0xff]
  %v135 = vld [vmem:[%s0 + $0x3e0] sm:$0xff]
  %v136 = vld [vmem:[%s0 + $0x3e8] sm:$0xff]
  %v137 = vld [vmem:[%s0 + $0x3f0] sm:$0xff]
  %v138 = vld [vmem:[%s0 + $0x3f8] sm:$0xff]
  %v139 = vld [vmem:[%s0 + $0x400] sm:$0xff]
  %v140 = vld [vmem:[%s0 + $0x408] sm:$0xff]
  %v141 = vld [vmem:[%s0 + $0x410] sm:$0xff]
  %v142 = vld [vmem:[%s0 + $0x418] sm:$0xff]
  %v143 = vld [vmem:[%s0 + $0x420] sm:$0xff]
  %v144 = vld [vmem:[%s0 + $0x428] sm:$0xff]
  %v145 = vld [vmem:[%s0 + $0x430] sm:$0xff]
  %v146 = vld [vmem:[%s0 + $0x438] sm:$0xff]
  %v147 = vld [vmem:[%s0 + $0x440] sm:$0xff]
  %v148 = vld [vmem:[%s0 + $0x448] sm:$0xff]
  %v149 = vld [vmem:[%s0 + $0x450] sm:$0xff]
  %v150 = vld [vmem:[%s0 + $0x458] sm:$0xff]
  %v151 = vld [vmem:[%s0 + $0x460] sm:$0xff]
  %v152 = vld [vmem:[%s0 + $0x468] sm:$0xff]
  %v153 = vld [vmem:[%s0 + $0x470] sm:$0xff]
  %v154 = vld [vmem:[%s0 + $0x478] sm:$0xff]
  %v155 = vld [vmem:[%s0 + $0x480] sm:$0xff]
  %v156 = vld [vmem:[%s0 + $0x488] sm:$0xff]
  %v157 = vld [vmem:[%s0 + $0x490] sm:$0xff]
  %v158 = vld [vmem:[%s0 + $0x498] sm:$0xff]
  %v159 = vld [vmem:[%s0 + $0x4a0] sm:$0xff]
  %v160 = vld [vmem:[%s0 + $0x4a8] sm:$0xff]
  %v161 = vld [vmem:[%s0 + $0x4b0] sm:$0xff]
  %v162 = vld [vmem:[%s0 + $0x4b8] sm:$0xff]
  %v163 = vld [vmem:[%s0 + $0x4c0] sm:$0xff]
  %v164 = vld [vmem:[%s0 + $0x4c8] sm:$0xff]
  %v165 = vld [vmem:[%s0 + $0x4d0] sm:$0xff]
  %v166 = vld [vmem:[%s0 + $0x4d8] sm:$0xff]
  %v167 = vld [vmem:[%s0 + $0x4e0] sm:$0xff]
  %v168 = vld [vmem:[%s0 + $0x4e8] sm:$0xff]
  %v169 = vld [vmem:[%s0 + $0x4f0] sm:$0xff]
  %v170 = vld [vmem:[%s0 + $0x4f8] sm:$0xff]
  %v171 = vld [vmem:[%s0 + $0x500] sm:$0xff]
  %v172 = vld [vmem:[%s0 + $0x508] sm:$0xff]
  %v173 = vld [vmem:[%s0 + $0x510] sm:$0xff]
  %v174 = vld [vmem:[%s0 + $0x518] sm:$0xff]
  %v175 = vld [vmem:[%s0 + $0x520] sm:$0xff]
  %v176 = vld [vmem:[%s0 + $0x528] sm:$0xff]
  %v177 = vld [vmem:[%s0 + $0x530] sm:$0xff]
  %v178 = vld [vmem:[%s0 + $0x538] sm:$0xff]
  %v179 = vld [vmem:[%s0 + $0x540] sm:$0xff]
  %v180 = vld [vmem:[%s0 + $0x548] sm:$0xff]
  %v181 = vld [vmem:[%s0 + $0x550] sm:$0xff]
  %v182 = vld [vmem:[%s0 + $0x558] sm:$0xff]
  %v183 = vld [vmem:[%s0 + $0x560] sm:$0xff]
  %v184 = vld [vmem:[%s0 + $0x568] sm:$0xff]
  %v185 = vld [vmem:[%s0 + $0x570] sm:$0xff]
  %v186 = vld [vmem:[%s0 + $0x578] sm:$0xff]
  %v187 = vld [vmem:[%s0 + $0x580] sm:$0xff]
  %v188 = vld [vmem:[%s0 + $0x588] sm:$0xff]
  %v189 = vld [vmem:[%s0 + $0x590] sm:$0xff]
  %v190 = vld [vmem:[%s0 + $0x598] sm:$0xff]
  %v191 = vld [vmem:[%s0 + $0x5a0] sm:$0xff]
  %v192 = vld [vmem:[%s0 + $0x5a8] sm:$0xff]
  %v193 = vld [vmem:[%s0 + $0x5b0] sm:$0xff]
  %v194 = vld [vmem:[%s0 + $0x5b8] sm:$0xff]
  %v195 = vld [vmem:[%s0 + $0x5c0] sm:$0xff]
  %v196 = vld [vmem:[%s0 + $0x5c8] sm:$0xff]
  %v197 = vld [vmem:[%s0 + $0x5d0] sm:$0xff]
  %v198 = vld [vmem:[%s0 + $0x5d8] sm:$0xff]
  %v199 = vld [vmem:[%s0 + $0x5e0] sm:$0xff]
  %v200 = vld [vmem:[%s0 + $0x5e8] sm:$0xff]
  %v201 = vld [vmem:[%s0 + $0x5f0] sm:$0xff]
  %v202 = vld [vmem:[%s0 + $0x5f8] sm:$0xff]
  %v203 = vld [vmem:[%s0 + $0x600] sm:$0xff]
  %v204 = vld [vmem:[%s0 + $0x608] sm:$0xff]
  %v205 = vld [vmem:[%s0 + $0x610] sm:$0xff]
  %v206 = vld [vmem:[%s0 + $0x618] sm:$0xff]
  %v207 = vld [vmem:[%s0 + $0x620] sm:$0xff]
  %v208 = vld [vmem:[%s0 + $0x628] sm:$0xff]
  %v209 = vld [vmem:[%s0 + $0x630] sm:$0xff]
  %v210 = vld [vmem:[%s0 + $0x638] sm:$0xff]
  %v211 = vld [vmem:[%s0 + $0x640] sm:$0xff]
  %v212 = vld [vmem:[%s0 + $0x648] sm:$0xff]
  %v213 = vld [vmem:[%s0 + $0x650] sm:$0xff]
  %v214 = vld [vmem:[%s0 + $0x658] sm:$0xff]
  %v215 = vld [vmem:[%s0 + $0x660] sm:$0xff]
  %v216 = vld [vmem:[%s0 + $0x668] sm:$0xff]
  %v217 = vld [vmem:[%s0 + $0x670] sm:$0xff]
  %v218 = vld [vmem:[%s0 + $0x678] sm:$0xff]
  %v219 = vld [vmem:[%s0 + $0x680] sm:$0xff]
  %v220 = vld [vmem:[%s0 + $0x688] sm:$0xff]
  %v221 = vld [vmem:[%s0 + $0x690] sm:$0xff]
  %v222 = vld [vmem:[%s0 + $0x698] sm:$0xff]
  %v223 = vld [vmem:[%s0 + $0x6a0] sm:$0xff]
  %v224 = vld [vmem:[%s0 + $0x6a8] sm:$0xff]
  %v225 = vld [vmem:[%s0 + $0x6b0] sm:$0xff]
  %v226 = vld [vmem:[%s0 + $0x6b8] sm:$0xff]
  %v227 = vld [vmem:[%s0 + $0x6c0] sm:$0xff]
  %v228 = vld [vmem:[%s0 + $0x6c8] sm:$0xff]
  %v229 = vld [vmem:[%s0 + $0x6d0] sm:$0xff]
  %v230 = vld [vmem:[%s0 + $0x6d8] sm:$0xff]
  %v231 = vld [vmem:[%s0 + $0x6e0] sm:$0xff]
  %v232 = vld [vmem:[%s0 + $0x6e8] sm:$0xff]
  %v233 = vld [vmem:[%s0 + $0x6f0] sm:$0xff]
  %v234 = vld [vmem:[%s0 + $0x6f8] sm:$0xff]
  %v235 = vld [vmem:[%s0 + $0x700] sm:$0xff]
  %v236 = vld [vmem:[%s0 + $0x708] sm:$0xff]
  %v237 = vld [vmem:[%s0 + $0x710] sm:$0xff]
  %v238 = vld [vmem:[%s0 + $0x718] sm:$0xff]
  %v239 = vld [vmem:[%s0 + $0x720] sm:$0xff]
  %v240 = vld [vmem:[%s0 + $0x728] sm:$0xff]
  %v241 = vld [vmem:[%s0 + $0x730] sm:$0xff]
  %v242 = vld [vmem:[%s0 + $0x738] sm:$0xff]
  %v243 = vld [vmem:[%s0 + $0x740] sm:$0xff]
  %v244 = vld [vmem:[%s0 + $0x748] sm:$0xff]
  %v245 = vld [vmem:[%s0 + $0x750] sm:$0xff]
  %v246 = vld [vmem:[%s0 + $0x758] sm:$0xff]
  %v247 = vld [vmem:[%s0 + $0x760] sm:$0xff]
  %v248 = vld [vmem:[%s0 + $0x768] sm:$0xff]
  %v249 = vld [vmem:[%s0 + $0x770] sm:$0xff]
  %v250 = vld [vmem:[%s0 + $0x778] sm:$0xff]
  %v251 = vld [vmem:[%s0 + $0x780] sm:$0xff]
  %v252 = vld [vmem:[%s0 + $0x788] sm:$0xff]
  %v253 = vld [vmem:[%s0 + $0x790] sm:$0xff]
  %v254 = vld [vmem:[%s0 + $0x798] sm:$0xff]
  %v255 = vld [vmem:[%s0 + $0x7a0] sm:$0xff]
  %v256 = vld [vmem:[%s0 + $0x7a8] sm:$0xff]
  %v257 = vld [vmem:[%s0 + $0x7b0] sm:$0xff]
  %v258 = vld [vmem:[%s0 + $0x7b8] sm:$0xff]
  %v259 = vld [vmem:[%s0 + $0x7c0] sm:$0xff]
  %v260 = vld [vmem:[%s0 + $0x7c8] sm:$0xff]
  %v261 = vld [vmem:[%s0 + $0x7d0] sm:$0xff]
  %v262 = vld [vmem:[%s0 + $0x7d8] sm:$0xff]
  %v263 = vld [vmem:[%s0 + $0x7e0] sm:$0xff]
  %v264 = vld [vmem:[%s0 + $0x7e8] sm:$0xff]
  %v265 = vld [vmem:[%s0 + $0x7f0] sm:$0xff]
  %v266 = vld [vmem:[%s0 + $0x7f8] sm:$0xff]
  %v267 = vld [vmem:[%s1] sm:$0x1]
  %v268 = vld [vmem:[%s1 + $0x1] sm:$0x1]
  %v269 = vld [vmem:[%s1 + $0x2] sm:$0x1]
  %v270 = vld [vmem:[%s1 + $0x3] sm:$0x1]
  %v271 = vld [vmem:[%s1 + $0x4] sm:$0x1]
  %v272 = vld [vmem:[%s1 + $0x5] sm:$0x1]
  %v273 = vld [vmem:[%s1 + $0x6] sm:$0x1]
  %v274 = vld [vmem:[%s1 + $0x7] sm:$0x1]
  %v275 = vld [vmem:[%s1 + $0x8] sm:$0x1]
  %v276 = vld [vmem:[%s1 + $0x9] sm:$0x1]
  %v277 = vld [vmem:[%s1 + $0xa] sm:$0x1]
  %v278 = vld [vmem:[%s1 + $0xb] sm:$0x1]
  %v279 = vld [vmem:[%s1 + $0xc] sm:$0x1]
  %v280 = vld [vmem:[%s1 + $0xd] sm:$0x1]
  %v281 = vld [vmem:[%s1 + $0xe] sm:$0x1]
  %v282 = vld [vmem:[%s1 + $0xf] sm:$0x1]
  %v283 = vld [vmem:[%s1 + $0x10] sm:$0x1]
  %v284 = vld [vmem:[%s1 + $0x11] sm:$0x1]
  %v285 = vld [vmem:[%s1 + $0x12] sm:$0x1]
  %v286 = vld [vmem:[%s1 + $0x13] sm:$0x1]
  %v287 = vld [vmem:[%s1 + $0x14] sm:$0x1]
  %v288 = vld [vmem:[%s1 + $0x15] sm:$0x1]
  %v289 = vld [vmem:[%s1 + $0x16] sm:$0x1]
  %v290 = vld [vmem:[%s1 + $0x17] sm:$0x1]
  %v291 = vld [vmem:[%s1 + $0x18] sm:$0x1]
  %v292 = vld [vmem:[%s1 + $0x19] sm:$0x1]
  %v293 = vld [vmem:[%s1 + $0x1a] sm:$0x1]
  %v294 = vld [vmem:[%s1 + $0x1b] sm:$0x1]
  %v295 = vld [vmem:[%s1 + $0x1c] sm:$0x1]
  %v296 = vld [vmem:[%s1 + $0x1d] sm:$0x1]
  %v297 = vld [vmem:[%s1 + $0x1e] sm:$0x1]
  %v298 = vld [vmem:[%s1 + $0x1f] sm:$0x1]
  %v299 = vld [vmem:[%s1 + $0x20] sm:$0x1]
  %v300 = vld [vmem:[%s1 + $0x21] sm:$0x1]
  %v301 = vld [vmem:[%s1 + $0x22] sm:$0x1]
  %v302 = vld [vmem:[%s1 + $0x23] sm:$0x1]
  %v303 = vld [vmem:[%s1 + $0x24] sm:$0x1]
  %v304 = vld [vmem:[%s1 + $0x25] sm:$0x1]
  %v305 = vld [vmem:[%s1 + $0x26] sm:$0x1]
  %v306 = vld [vmem:[%s1 + $0x27] sm:$0x1]
  %v307 = vld [vmem:[%s1 + $0x28] sm:$0x1]
  %v308 = vld [vmem:[%s1 + $0x29] sm:$0x1]
  %v309 = vld [vmem:[%s1 + $0x2a] sm:$0x1]
  %v310 = vld [vmem:[%s1 + $0x2b] sm:$0x1]
  %v311 = vld [vmem:[%s1 + $0x2c] sm:$0x1]
  %v312 = vld [vmem:[%s1 + $0x2d] sm:$0x1]
  %v313 = vld [vmem:[%s1 + $0x2e] sm:$0x1]
  %v314 = vld [vmem:[%s1 + $0x2f] sm:$0x1]
  %v315 = vld [vmem:[%s1 + $0x30] sm:$0x1]
  %v316 = vld [vmem:[%s1 + $0x31] sm:$0x1]
  %v317 = vld [vmem:[%s1 + $0x32] sm:$0x1]
  %v318 = vld [vmem:[%s1 + $0x33] sm:$0x1]
  %v319 = vld [vmem:[%s1 + $0x34] sm:$0x1]
  %v320 = vld [vmem:[%s1 + $0x35] sm:$0x1]
  %v321 = vld [vmem:[%s1 + $0x36] sm:$0x1]
  %v322 = vld [vmem:[%s1 + $0x37] sm:$0x1]
  %v323 = vld [vmem:[%s1 + $0x38] sm:$0x1]
  %v324 = vld [vmem:[%s1 + $0x39] sm:$0x1]
  %v325 = vld [vmem:[%s1 + $0x3a] sm:$0x1]
  %v326 = vld [vmem:[%s1 + $0x3b] sm:$0x1]
  %v327 = vld [vmem:[%s1 + $0x3c] sm:$0x1]
  %v328 = vld [vmem:[%s1 + $0x3d] sm:$0x1]
  %v329 = vld [vmem:[%s1 + $0x3e] sm:$0x1]
  %v330 = vld [vmem:[%s1 + $0x3f] sm:$0x1]
  %v331 = vld [vmem:[%s1 + $0x40] sm:$0x1]
  %v332 = vld [vmem:[%s1 + $0x41] sm:$0x1]
  %v333 = vld [vmem:[%s1 + $0x42] sm:$0x1]
  %v334 = vld [vmem:[%s1 + $0x43] sm:$0x1]
  %v335 = vld [vmem:[%s1 + $0x44] sm:$0x1]
  %v336 = vld [vmem:[%s1 + $0x45] sm:$0x1]
  %v337 = vld [vmem:[%s1 + $0x46] sm:$0x1]
  %v338 = vld [vmem:[%s1 + $0x47] sm:$0x1]
  %v339 = vld [vmem:[%s1 + $0x48] sm:$0x1]
  %v340 = vld [vmem:[%s1 + $0x49] sm:$0x1]
  %v341 = vld [vmem:[%s1 + $0x4a] sm:$0x1]
  %v342 = vld [vmem:[%s1 + $0x4b] sm:$0x1]
  %v343 = vld [vmem:[%s1 + $0x4c] sm:$0x1]
  %v344 = vld [vmem:[%s1 + $0x4d] sm:$0x1]
  %v345 = vld [vmem:[%s1 + $0x4e] sm:$0x1]
  %v346 = vld [vmem:[%s1 + $0x4f] sm:$0x1]
  %v347 = vld [vmem:[%s1 + $0x50] sm:$0x1]
  %v348 = vld [vmem:[%s1 + $0x51] sm:$0x1]
  %v349 = vld [vmem:[%s1 + $0x52] sm:$0x1]
  %v350 = vld [vmem:[%s1 + $0x53] sm:$0x1]
  %v351 = vld [vmem:[%s1 + $0x54] sm:$0x1]
  %v352 = vld [vmem:[%s1 + $0x55] sm:$0x1]
  %v353 = vld [vmem:[%s1 + $0x56] sm:$0x1]
  %v354 = vld [vmem:[%s1 + $0x57] sm:$0x1]
  %v355 = vld [vmem:[%s1 + $0x58] sm:$0x1]
  %v356 = vld [vmem:[%s1 + $0x59] sm:$0x1]
  %v357 = vld [vmem:[%s1 + $0x5a] sm:$0x1]
  %v358 = vld [vmem:[%s1 + $0x5b] sm:$0x1]
  %v359 = vld [vmem:[%s1 + $0x5c] sm:$0x1]
  %v360 = vld [vmem:[%s1 + $0x5d] sm:$0x1]
  %v361 = vld [vmem:[%s1 + $0x5e] sm:$0x1]
  %v362 = vld [vmem:[%s1 + $0x5f] sm:$0x1]
  %v363 = vld [vmem:[%s1 + $0x60] sm:$0x1]
  %v364 = vld [vmem:[%s1 + $0x61] sm:$0x1]
  %v365 = vld [vmem:[%s1 + $0x62] sm:$0x1]
  %v366 = vld [vmem:[%s1 + $0x63] sm:$0x1]
  %v367 = vld [vmem:[%s1 + $0x64] sm:$0x1]
  %v368 = vld [vmem:[%s1 + $0x65] sm:$0x1]
  %v369 = vld [vmem:[%s1 + $0x66] sm:$0x1]
  %v370 = vld [vmem:[%s1 + $0x67] sm:$0x1]
  %v371 = vld [vmem:[%s1 + $0x68] sm:$0x1]
  %v372 = vld [vmem:[%s1 + $0x69] sm:$0x1]
  %v373 = vld [vmem:[%s1 + $0x6a] sm:$0x1]
  %v374 = vld [vmem:[%s1 + $0x6b] sm:$0x1]
  %v375 = vld [vmem:[%s1 + $0x6c] sm:$0x1]
  %v376 = vld [vmem:[%s1 + $0x6d] sm:$0x1]
  %v377 = vld [vmem:[%s1 + $0x6e] sm:$0x1]
  %v378 = vld [vmem:[%s1 + $0x6f] sm:$0x1]
  %v379 = vld [vmem:[%s1 + $0x70] sm:$0x1]
  %v380 = vld [vmem:[%s1 + $0x71] sm:$0x1]
  %v381 = vld [vmem:[%s1 + $0x72] sm:$0x1]
  %v382 = vld [vmem:[%s1 + $0x73] sm:$0x1]
  %v383 = vld [vmem:[%s1 + $0x74] sm:$0x1]
  %v384 = vld [vmem:[%s1 + $0x75] sm:$0x1]
  %v385 = vld [vmem:[%s1 + $0x76] sm:$0x1]
  %v386 = vld [vmem:[%s1 + $0x77] sm:$0x1]
  %v387 = vld [vmem:[%s1 + $0x78] sm:$0x1]
  %v388 = vld [vmem:[%s1 + $0x79] sm:$0x1]
  %v389 = vld [vmem:[%s1 + $0x7a] sm:$0x1]
  %v390 = vld [vmem:[%s1 + $0x7b] sm:$0x1]
  %v391 = vld [vmem:[%s1 + $0x7c] sm:$0x1]
  %v392 = vld [vmem:[%s1 + $0x7d] sm:$0x1]
  %v393 = vld [vmem:[%s1 + $0x7e] sm:$0x1]
  %v394 = vld [vmem:[%s1 + $0x7f] sm:$0x1]
  %396 = vset.pattern.permute.xlu0 0
  %397 = vperm.xlu0 %396, %v11
  %v398 = vpop.permute.xlu0 %397
  %401 = vset.pattern.permute.xlu0 0
  %402 = vperm.xlu0 %401, %v12
  %v403 = vpop.permute.xlu0 %402
  %406 = vset.pattern.permute.xlu0 0
  %407 = vperm.xlu0 %406, %v13
  %v408 = vpop.permute.xlu0 %407
  %411 = vset.pattern.permute.xlu0 0
  %412 = vperm.xlu0 %411, %v14
  %v413 = vpop.permute.xlu0 %412
  %416 = vset.pattern.permute.xlu0 0
  %417 = vperm.xlu0 %416, %v15
  %v418 = vpop.permute.xlu0 %417
  %421 = vset.pattern.permute.xlu0 0
  %422 = vperm.xlu0 %421, %v16
  %v423 = vpop.permute.xlu0 %422
  %426 = vset.pattern.permute.xlu0 0
  %427 = vperm.xlu0 %426, %v17
  %v428 = vpop.permute.xlu0 %427
  %431 = vset.pattern.permute.xlu0 0
  %432 = vperm.xlu0 %431, %v18
  %v433 = vpop.permute.xlu0 %432
  %436 = vset.pattern.permute.xlu0 0
  %437 = vperm.xlu0 %436, %v19
  %v438 = vpop.permute.xlu0 %437
  %441 = vset.pattern.permute.xlu0 0
  %442 = vperm.xlu0 %441, %v20
  %v443 = vpop.permute.xlu0 %442
  %446 = vset.pattern.permute.xlu0 0
  %447 = vperm.xlu0 %446, %v21
  %v448 = vpop.permute.xlu0 %447
  %451 = vset.pattern.permute.xlu0 0
  %452 = vperm.xlu0 %451, %v22
  %v453 = vpop.permute.xlu0 %452
  %456 = vset.pattern.permute.xlu0 0
  %457 = vperm.xlu0 %456, %v23
  %v458 = vpop.permute.xlu0 %457
  %461 = vset.pattern.permute.xlu0 0
  %462 = vperm.xlu0 %461, %v24
  %v463 = vpop.permute.xlu0 %462
  %466 = vset.pattern.permute.xlu0 0
  %467 = vperm.xlu0 %466, %v25
  %v468 = vpop.permute.xlu0 %467
  %471 = vset.pattern.permute.xlu0 0
  %472 = vperm.xlu0 %471, %v26
  %v473 = vpop.permute.xlu0 %472
  %476 = vset.pattern.permute.xlu0 0
  %477 = vperm.xlu0 %476, %v27
  %v478 = vpop.permute.xlu0 %477
  %481 = vset.pattern.permute.xlu0 0
  %482 = vperm.xlu0 %481, %v28
  %v483 = vpop.permute.xlu0 %482
  %486 = vset.pattern.permute.xlu0 0
  %487 = vperm.xlu0 %486, %v29
  %v488 = vpop.permute.xlu0 %487
  %491 = vset.pattern.permute.xlu0 0
  %492 = vperm.xlu0 %491, %v30
  %v493 = vpop.permute.xlu0 %492
  %496 = vset.pattern.permute.xlu0 0
  %497 = vperm.xlu0 %496, %v31
  %v498 = vpop.permute.xlu0 %497
  %501 = vset.pattern.permute.xlu0 0
  %502 = vperm.xlu0 %501, %v32
  %v503 = vpop.permute.xlu0 %502
  %506 = vset.pattern.permute.xlu0 0
  %507 = vperm.xlu0 %506, %v33
  %v508 = vpop.permute.xlu0 %507
  %511 = vset.pattern.permute.xlu0 0
  %512 = vperm.xlu0 %511, %v34
  %v513 = vpop.permute.xlu0 %512
  %516 = vset.pattern.permute.xlu0 0
  %517 = vperm.xlu0 %516, %v35
  %v518 = vpop.permute.xlu0 %517
  %521 = vset.pattern.permute.xlu0 0
  %522 = vperm.xlu0 %521, %v36
  %v523 = vpop.permute.xlu0 %522
  %526 = vset.pattern.permute.xlu0 0
  %527 = vperm.xlu0 %526, %v37
  %v528 = vpop.permute.xlu0 %527
  %531 = vset.pattern.permute.xlu0 0
  %532 = vperm.xlu0 %531, %v38
  %v533 = vpop.permute.xlu0 %532
  %536 = vset.pattern.permute.xlu0 0
  %537 = vperm.xlu0 %536, %v39
  %v538 = vpop.permute.xlu0 %537
  %541 = vset.pattern.permute.xlu0 0
  %542 = vperm.xlu0 %541, %v40
  %v543 = vpop.permute.xlu0 %542
  %546 = vset.pattern.permute.xlu0 0
  %547 = vperm.xlu0 %546, %v41
  %v548 = vpop.permute.xlu0 %547
  %551 = vset.pattern.permute.xlu0 0
  %552 = vperm.xlu0 %551, %v42
  %v553 = vpop.permute.xlu0 %552
  %556 = vset.pattern.permute.xlu0 0
  %557 = vperm.xlu0 %556, %v43
  %v558 = vpop.permute.xlu0 %557
  %561 = vset.pattern.permute.xlu0 0
  %562 = vperm.xlu0 %561, %v44
  %v563 = vpop.permute.xlu0 %562
  %566 = vset.pattern.permute.xlu0 0
  %567 = vperm.xlu0 %566, %v45
  %v568 = vpop.permute.xlu0 %567
  %571 = vset.pattern.permute.xlu0 0
  %572 = vperm.xlu0 %571, %v46
  %v573 = vpop.permute.xlu0 %572
  %576 = vset.pattern.permute.xlu0 0
  %577 = vperm.xlu0 %576, %v47
  %v578 = vpop.permute.xlu0 %577
  %581 = vset.pattern.permute.xlu0 0
  %582 = vperm.xlu0 %581, %v48
  %v583 = vpop.permute.xlu0 %582
  %586 = vset.pattern.permute.xlu0 0
  %587 = vperm.xlu0 %586, %v49
  %v588 = vpop.permute.xlu0 %587
  %591 = vset.pattern.permute.xlu0 0
  %592 = vperm.xlu0 %591, %v50
  %v593 = vpop.permute.xlu0 %592
  %596 = vset.pattern.permute.xlu0 0
  %597 = vperm.xlu0 %596, %v51
  %v598 = vpop.permute.xlu0 %597
  %601 = vset.pattern.permute.xlu0 0
  %602 = vperm.xlu0 %601, %v52
  %v603 = vpop.permute.xlu0 %602
  %606 = vset.pattern.permute.xlu0 0
  %607 = vperm.xlu0 %606, %v53
  %v608 = vpop.permute.xlu0 %607
  %611 = vset.pattern.permute.xlu0 0
  %612 = vperm.xlu0 %611, %v54
  %v613 = vpop.permute.xlu0 %612
  %616 = vset.pattern.permute.xlu0 0
  %617 = vperm.xlu0 %616, %v55
  %v618 = vpop.permute.xlu0 %617
  %621 = vset.pattern.permute.xlu0 0
  %622 = vperm.xlu0 %621, %v56
  %v623 = vpop.permute.xlu0 %622
  %626 = vset.pattern.permute.xlu0 0
  %627 = vperm.xlu0 %626, %v57
  %v628 = vpop.permute.xlu0 %627
  %631 = vset.pattern.permute.xlu0 0
  %632 = vperm.xlu0 %631, %v58
  %v633 = vpop.permute.xlu0 %632
  %636 = vset.pattern.permute.xlu0 0
  %637 = vperm.xlu0 %636, %v59
  %v638 = vpop.permute.xlu0 %637
  %641 = vset.pattern.permute.xlu0 0
  %642 = vperm.xlu0 %641, %v60
  %v643 = vpop.permute.xlu0 %642
  %646 = vset.pattern.permute.xlu0 0
  %647 = vperm.xlu0 %646, %v61
  %v648 = vpop.permute.xlu0 %647
  %651 = vset.pattern.permute.xlu0 0
  %652 = vperm.xlu0 %651, %v62
  %v653 = vpop.permute.xlu0 %652
  %656 = vset.pattern.permute.xlu0 0
  %657 = vperm.xlu0 %656, %v63
  %v658 = vpop.permute.xlu0 %657
  %661 = vset.pattern.permute.xlu0 0
  %662 = vperm.xlu0 %661, %v64
  %v663 = vpop.permute.xlu0 %662
  %666 = vset.pattern.permute.xlu0 0
  %667 = vperm.xlu0 %666, %v65
  %v668 = vpop.permute.xlu0 %667
  %671 = vset.pattern.permute.xlu0 0
  %672 = vperm.xlu0 %671, %v66
  %v673 = vpop.permute.xlu0 %672
  %676 = vset.pattern.permute.xlu0 0
  %677 = vperm.xlu0 %676, %v67
  %v678 = vpop.permute.xlu0 %677
  %681 = vset.pattern.permute.xlu0 0
  %682 = vperm.xlu0 %681, %v68
  %v683 = vpop.permute.xlu0 %682
  %686 = vset.pattern.permute.xlu0 0
  %687 = vperm.xlu0 %686, %v69
  %v688 = vpop.permute.xlu0 %687
  %691 = vset.pattern.permute.xlu0 0
  %692 = vperm.xlu0 %691, %v70
  %v693 = vpop.permute.xlu0 %692
  %696 = vset.pattern.permute.xlu0 0
  %697 = vperm.xlu0 %696, %v71
  %v698 = vpop.permute.xlu0 %697
  %701 = vset.pattern.permute.xlu0 0
  %702 = vperm.xlu0 %701, %v72
  %v703 = vpop.permute.xlu0 %702
  %706 = vset.pattern.permute.xlu0 0
  %707 = vperm.xlu0 %706, %v73
  %v708 = vpop.permute.xlu0 %707
  %711 = vset.pattern.permute.xlu0 0
  %712 = vperm.xlu0 %711, %v74
  %v713 = vpop.permute.xlu0 %712
  %716 = vset.pattern.permute.xlu0 0
  %717 = vperm.xlu0 %716, %v75
  %v718 = vpop.permute.xlu0 %717
  %721 = vset.pattern.permute.xlu0 0
  %722 = vperm.xlu0 %721, %v76
  %v723 = vpop.permute.xlu0 %722
  %726 = vset.pattern.permute.xlu0 0
  %727 = vperm.xlu0 %726, %v77
  %v728 = vpop.permute.xlu0 %727
  %731 = vset.pattern.permute.xlu0 0
  %732 = vperm.xlu0 %731, %v78
  %v733 = vpop.permute.xlu0 %732
  %736 = vset.pattern.permute.xlu0 0
  %737 = vperm.xlu0 %736, %v79
  %v738 = vpop.permute.xlu0 %737
  %741 = vset.pattern.permute.xlu0 0
  %742 = vperm.xlu0 %741, %v80
  %v743 = vpop.permute.xlu0 %742
  %746 = vset.pattern.permute.xlu0 0
  %747 = vperm.xlu0 %746, %v81
  %v748 = vpop.permute.xlu0 %747
  %751 = vset.pattern.permute.xlu0 0
  %752 = vperm.xlu0 %751, %v82
  %v753 = vpop.permute.xlu0 %752
  %756 = vset.pattern.permute.xlu0 0
  %757 = vperm.xlu0 %756, %v83
  %v758 = vpop.permute.xlu0 %757
  %761 = vset.pattern.permute.xlu0 0
  %762 = vperm.xlu0 %761, %v84
  %v763 = vpop.permute.xlu0 %762
  %766 = vset.pattern.permute.xlu0 0
  %767 = vperm.xlu0 %766, %v85
  %v768 = vpop.permute.xlu0 %767
  %771 = vset.pattern.permute.xlu0 0
  %772 = vperm.xlu0 %771, %v86
  %v773 = vpop.permute.xlu0 %772
  %776 = vset.pattern.permute.xlu0 0
  %777 = vperm.xlu0 %776, %v87
  %v778 = vpop.permute.xlu0 %777
  %781 = vset.pattern.permute.xlu0 0
  %782 = vperm.xlu0 %781, %v88
  %v783 = vpop.permute.xlu0 %782
  %786 = vset.pattern.permute.xlu0 0
  %787 = vperm.xlu0 %786, %v89
  %v788 = vpop.permute.xlu0 %787
  %791 = vset.pattern.permute.xlu0 0
  %792 = vperm.xlu0 %791, %v90
  %v793 = vpop.permute.xlu0 %792
  %796 = vset.pattern.permute.xlu0 0
  %797 = vperm.xlu0 %796, %v91
  %v798 = vpop.permute.xlu0 %797
  %801 = vset.pattern.permute.xlu0 0
  %802 = vperm.xlu0 %801, %v92
  %v803 = vpop.permute.xlu0 %802
  %806 = vset.pattern.permute.xlu0 0
  %807 = vperm.xlu0 %806, %v93
  %v808 = vpop.permute.xlu0 %807
  %811 = vset.pattern.permute.xlu0 0
  %812 = vperm.xlu0 %811, %v94
  %v813 = vpop.permute.xlu0 %812
  %816 = vset.pattern.permute.xlu0 0
  %817 = vperm.xlu0 %816, %v95
  %v818 = vpop.permute.xlu0 %817
  %821 = vset.pattern.permute.xlu0 0
  %822 = vperm.xlu0 %821, %v96
  %v823 = vpop.permute.xlu0 %822
  %826 = vset.pattern.permute.xlu0 0
  %827 = vperm.xlu0 %826, %v97
  %v828 = vpop.permute.xlu0 %827
  %831 = vset.pattern.permute.xlu0 0
  %832 = vperm.xlu0 %831, %v98
  %v833 = vpop.permute.xlu0 %832
  %836 = vset.pattern.permute.xlu0 0
  %837 = vperm.xlu0 %836, %v99
  %v838 = vpop.permute.xlu0 %837
  %841 = vset.pattern.permute.xlu0 0
  %842 = vperm.xlu0 %841, %v100
  %v843 = vpop.permute.xlu0 %842
  %846 = vset.pattern.permute.xlu0 0
  %847 = vperm.xlu0 %846, %v101
  %v848 = vpop.permute.xlu0 %847
  %851 = vset.pattern.permute.xlu0 0
  %852 = vperm.xlu0 %851, %v102
  %v853 = vpop.permute.xlu0 %852
  %856 = vset.pattern.permute.xlu0 0
  %857 = vperm.xlu0 %856, %v103
  %v858 = vpop.permute.xlu0 %857
  %861 = vset.pattern.permute.xlu0 0
  %862 = vperm.xlu0 %861, %v104
  %v863 = vpop.permute.xlu0 %862
  %866 = vset.pattern.permute.xlu0 0
  %867 = vperm.xlu0 %866, %v105
  %v868 = vpop.permute.xlu0 %867
  %871 = vset.pattern.permute.xlu0 0
  %872 = vperm.xlu0 %871, %v106
  %v873 = vpop.permute.xlu0 %872
  %876 = vset.pattern.permute.xlu0 0
  %877 = vperm.xlu0 %876, %v107
  %v878 = vpop.permute.xlu0 %877
  %881 = vset.pattern.permute.xlu0 0
  %882 = vperm.xlu0 %881, %v108
  %v883 = vpop.permute.xlu0 %882
  %886 = vset.pattern.permute.xlu0 0
  %887 = vperm.xlu0 %886, %v109
  %v888 = vpop.permute.xlu0 %887
  %891 = vset.pattern.permute.xlu0 0
  %892 = vperm.xlu0 %891, %v110
  %v893 = vpop.permute.xlu0 %892
  %896 = vset.pattern.permute.xlu0 0
  %897 = vperm.xlu0 %896, %v111
  %v898 = vpop.permute.xlu0 %897
  %901 = vset.pattern.permute.xlu0 0
  %902 = vperm.xlu0 %901, %v112
  %v903 = vpop.permute.xlu0 %902
  %906 = vset.pattern.permute.xlu0 0
  %907 = vperm.xlu0 %906, %v113
  %v908 = vpop.permute.xlu0 %907
  %911 = vset.pattern.permute.xlu0 0
  %912 = vperm.xlu0 %911, %v114
  %v913 = vpop.permute.xlu0 %912
  %916 = vset.pattern.permute.xlu0 0
  %917 = vperm.xlu0 %916, %v115
  %v918 = vpop.permute.xlu0 %917
  %921 = vset.pattern.permute.xlu0 0
  %922 = vperm.xlu0 %921, %v116
  %v923 = vpop.permute.xlu0 %922
  %926 = vset.pattern.permute.xlu0 0
  %927 = vperm.xlu0 %926, %v117
  %v928 = vpop.permute.xlu0 %927
  %931 = vset.pattern.permute.xlu0 0
  %932 = vperm.xlu0 %931, %v118
  %v933 = vpop.permute.xlu0 %932
  %936 = vset.pattern.permute.xlu0 0
  %937 = vperm.xlu0 %936, %v119
  %v938 = vpop.permute.xlu0 %937
  %941 = vset.pattern.permute.xlu0 0
  %942 = vperm.xlu0 %941, %v120
  %v943 = vpop.permute.xlu0 %942
  %946 = vset.pattern.permute.xlu0 0
  %947 = vperm.xlu0 %946, %v121
  %v948 = vpop.permute.xlu0 %947
  %951 = vset.pattern.permute.xlu0 0
  %952 = vperm.xlu0 %951, %v122
  %v953 = vpop.permute.xlu0 %952
  %956 = vset.pattern.permute.xlu0 0
  %957 = vperm.xlu0 %956, %v123
  %v958 = vpop.permute.xlu0 %957
  %961 = vset.pattern.permute.xlu0 0
  %962 = vperm.xlu0 %961, %v124
  %v963 = vpop.permute.xlu0 %962
  %966 = vset.pattern.permute.xlu0 0
  %967 = vperm.xlu0 %966, %v125
  %v968 = vpop.permute.xlu0 %967
  %971 = vset.pattern.permute.xlu0 0
  %972 = vperm.xlu0 %971, %v126
  %v973 = vpop.permute.xlu0 %972
  %976 = vset.pattern.permute.xlu0 0
  %977 = vperm.xlu0 %976, %v127
  %v978 = vpop.permute.xlu0 %977
  %981 = vset.pattern.permute.xlu0 0
  %982 = vperm.xlu0 %981, %v128
  %v983 = vpop.permute.xlu0 %982
  %986 = vset.pattern.permute.xlu0 0
  %987 = vperm.xlu0 %986, %v129
  %v988 = vpop.permute.xlu0 %987
  %991 = vset.pattern.permute.xlu0 0
  %992 = vperm.xlu0 %991, %v130
  %v993 = vpop.permute.xlu0 %992
  %996 = vset.pattern.permute.xlu0 0
  %997 = vperm.xlu0 %996, %v131
  %v998 = vpop.permute.xlu0 %997
  %1001 = vset.pattern.permute.xlu0 0
  %1002 = vperm.xlu0 %1001, %v132
  %v1003 = vpop.permute.xlu0 %1002
  %1006 = vset.pattern.permute.xlu0 0
  %1007 = vperm.xlu0 %1006, %v133
  %v1008 = vpop.permute.xlu0 %1007
  %1011 = vset.pattern.permute.xlu0 0
  %1012 = vperm.xlu0 %1011, %v134
  %v1013 = vpop.permute.xlu0 %1012
  %1016 = vset.pattern.permute.xlu0 0
  %1017 = vperm.xlu0 %1016, %v135
  %v1018 = vpop.permute.xlu0 %1017
  %1021 = vset.pattern.permute.xlu0 0
  %1022 = vperm.xlu0 %1021, %v136
  %v1023 = vpop.permute.xlu0 %1022
  %1026 = vset.pattern.permute.xlu0 0
  %1027 = vperm.xlu0 %1026, %v137
  %v1028 = vpop.permute.xlu0 %1027
  %1031 = vset.pattern.permute.xlu0 0
  %1032 = vperm.xlu0 %1031, %v138
  %v1033 = vpop.permute.xlu0 %1032
  %1036 = vset.pattern.permute.xlu0 0
  %1037 = vperm.xlu0 %1036, %v139
  %v1038 = vpop.permute.xlu0 %1037
  %1041 = vset.pattern.permute.xlu0 0
  %1042 = vperm.xlu0 %1041, %v140
  %v1043 = vpop.permute.xlu0 %1042
  %1046 = vset.pattern.permute.xlu0 0
  %1047 = vperm.xlu0 %1046, %v141
  %v1048 = vpop.permute.xlu0 %1047
  %1051 = vset.pattern.permute.xlu0 0
  %1052 = vperm.xlu0 %1051, %v142
  %v1053 = vpop.permute.xlu0 %1052
  %1056 = vset.pattern.permute.xlu0 0
  %1057 = vperm.xlu0 %1056, %v143
  %v1058 = vpop.permute.xlu0 %1057
  %1061 = vset.pattern.permute.xlu0 0
  %1062 = vperm.xlu0 %1061, %v144
  %v1063 = vpop.permute.xlu0 %1062
  %1066 = vset.pattern.permute.xlu0 0
  %1067 = vperm.xlu0 %1066, %v145
  %v1068 = vpop.permute.xlu0 %1067
  %1071 = vset.pattern.permute.xlu0 0
  %1072 = vperm.xlu0 %1071, %v146
  %v1073 = vpop.permute.xlu0 %1072
  %1076 = vset.pattern.permute.xlu0 0
  %1077 = vperm.xlu0 %1076, %v147
  %v1078 = vpop.permute.xlu0 %1077
  %1081 = vset.pattern.permute.xlu0 0
  %1082 = vperm.xlu0 %1081, %v148
  %v1083 = vpop.permute.xlu0 %1082
  %1086 = vset.pattern.permute.xlu0 0
  %1087 = vperm.xlu0 %1086, %v149
  %v1088 = vpop.permute.xlu0 %1087
  %1091 = vset.pattern.permute.xlu0 0
  %1092 = vperm.xlu0 %1091, %v150
  %v1093 = vpop.permute.xlu0 %1092
  %1096 = vset.pattern.permute.xlu0 0
  %1097 = vperm.xlu0 %1096, %v151
  %v1098 = vpop.permute.xlu0 %1097
  %1101 = vset.pattern.permute.xlu0 0
  %1102 = vperm.xlu0 %1101, %v152
  %v1103 = vpop.permute.xlu0 %1102
  %1106 = vset.pattern.permute.xlu0 0
  %1107 = vperm.xlu0 %1106, %v153
  %v1108 = vpop.permute.xlu0 %1107
  %1111 = vset.pattern.permute.xlu0 0
  %1112 = vperm.xlu0 %1111, %v154
  %v1113 = vpop.permute.xlu0 %1112
  %1116 = vset.pattern.permute.xlu0 0
  %1117 = vperm.xlu0 %1116, %v155
  %v1118 = vpop.permute.xlu0 %1117
  %1121 = vset.pattern.permute.xlu0 0
  %1122 = vperm.xlu0 %1121, %v156
  %v1123 = vpop.permute.xlu0 %1122
  %1126 = vset.pattern.permute.xlu0 0
  %1127 = vperm.xlu0 %1126, %v157
  %v1128 = vpop.permute.xlu0 %1127
  %1131 = vset.pattern.permute.xlu0 0
  %1132 = vperm.xlu0 %1131, %v158
  %v1133 = vpop.permute.xlu0 %1132
  %1136 = vset.pattern.permute.xlu0 0
  %1137 = vperm.xlu0 %1136, %v159
  %v1138 = vpop.permute.xlu0 %1137
  %1141 = vset.pattern.permute.xlu0 0
  %1142 = vperm.xlu0 %1141, %v160
  %v1143 = vpop.permute.xlu0 %1142
  %1146 = vset.pattern.permute.xlu0 0
  %1147 = vperm.xlu0 %1146, %v161
  %v1148 = vpop.permute.xlu0 %1147
  %1151 = vset.pattern.permute.xlu0 0
  %1152 = vperm.xlu0 %1151, %v162
  %v1153 = vpop.permute.xlu0 %1152
  %1156 = vset.pattern.permute.xlu0 0
  %1157 = vperm.xlu0 %1156, %v163
  %v1158 = vpop.permute.xlu0 %1157
  %1161 = vset.pattern.permute.xlu0 0
  %1162 = vperm.xlu0 %1161, %v164
  %v1163 = vpop.permute.xlu0 %1162
  %1166 = vset.pattern.permute.xlu0 0
  %1167 = vperm.xlu0 %1166, %v165
  %v1168 = vpop.permute.xlu0 %1167
  %1171 = vset.pattern.permute.xlu0 0
  %1172 = vperm.xlu0 %1171, %v166
  %v1173 = vpop.permute.xlu0 %1172
  %1176 = vset.pattern.permute.xlu0 0
  %1177 = vperm.xlu0 %1176, %v167
  %v1178 = vpop.permute.xlu0 %1177
  %1181 = vset.pattern.permute.xlu0 0
  %1182 = vperm.xlu0 %1181, %v168
  %v1183 = vpop.permute.xlu0 %1182
  %1186 = vset.pattern.permute.xlu0 0
  %1187 = vperm.xlu0 %1186, %v169
  %v1188 = vpop.permute.xlu0 %1187
  %1191 = vset.pattern.permute.xlu0 0
  %1192 = vperm.xlu0 %1191, %v170
  %v1193 = vpop.permute.xlu0 %1192
  %1196 = vset.pattern.permute.xlu0 0
  %1197 = vperm.xlu0 %1196, %v171
  %v1198 = vpop.permute.xlu0 %1197
  %1201 = vset.pattern.permute.xlu0 0
  %1202 = vperm.xlu0 %1201, %v172
  %v1203 = vpop.permute.xlu0 %1202
  %1206 = vset.pattern.permute.xlu0 0
  %1207 = vperm.xlu0 %1206, %v173
  %v1208 = vpop.permute.xlu0 %1207
  %1211 = vset.pattern.permute.xlu0 0
  %1212 = vperm.xlu0 %1211, %v174
  %v1213 = vpop.permute.xlu0 %1212
  %1216 = vset.pattern.permute.xlu0 0
  %1217 = vperm.xlu0 %1216, %v175
  %v1218 = vpop.permute.xlu0 %1217
  %1221 = vset.pattern.permute.xlu0 0
  %1222 = vperm.xlu0 %1221, %v176
  %v1223 = vpop.permute.xlu0 %1222
  %1226 = vset.pattern.permute.xlu0 0
  %1227 = vperm.xlu0 %1226, %v177
  %v1228 = vpop.permute.xlu0 %1227
  %1231 = vset.pattern.permute.xlu0 0
  %1232 = vperm.xlu0 %1231, %v178
  %v1233 = vpop.permute.xlu0 %1232
  %1236 = vset.pattern.permute.xlu0 0
  %1237 = vperm.xlu0 %1236, %v179
  %v1238 = vpop.permute.xlu0 %1237
  %1241 = vset.pattern.permute.xlu0 0
  %1242 = vperm.xlu0 %1241, %v180
  %v1243 = vpop.permute.xlu0 %1242
  %1246 = vset.pattern.permute.xlu0 0
  %1247 = vperm.xlu0 %1246, %v181
  %v1248 = vpop.permute.xlu0 %1247
  %1251 = vset.pattern.permute.xlu0 0
  %1252 = vperm.xlu0 %1251, %v182
  %v1253 = vpop.permute.xlu0 %1252
  %1256 = vset.pattern.permute.xlu0 0
  %1257 = vperm.xlu0 %1256, %v183
  %v1258 = vpop.permute.xlu0 %1257
  %1261 = vset.pattern.permute.xlu0 0
  %1262 = vperm.xlu0 %1261, %v184
  %v1263 = vpop.permute.xlu0 %1262
  %1266 = vset.pattern.permute.xlu0 0
  %1267 = vperm.xlu0 %1266, %v185
  %v1268 = vpop.permute.xlu0 %1267
  %1271 = vset.pattern.permute.xlu0 0
  %1272 = vperm.xlu0 %1271, %v186
  %v1273 = vpop.permute.xlu0 %1272
  %1276 = vset.pattern.permute.xlu0 0
  %1277 = vperm.xlu0 %1276, %v187
  %v1278 = vpop.permute.xlu0 %1277
  %1281 = vset.pattern.permute.xlu0 0
  %1282 = vperm.xlu0 %1281, %v188
  %v1283 = vpop.permute.xlu0 %1282
  %1286 = vset.pattern.permute.xlu0 0
  %1287 = vperm.xlu0 %1286, %v189
  %v1288 = vpop.permute.xlu0 %1287
  %1291 = vset.pattern.permute.xlu0 0
  %1292 = vperm.xlu0 %1291, %v190
  %v1293 = vpop.permute.xlu0 %1292
  %1296 = vset.pattern.permute.xlu0 0
  %1297 = vperm.xlu0 %1296, %v191
  %v1298 = vpop.permute.xlu0 %1297
  %1301 = vset.pattern.permute.xlu0 0
  %1302 = vperm.xlu0 %1301, %v192
  %v1303 = vpop.permute.xlu0 %1302
  %1306 = vset.pattern.permute.xlu0 0
  %1307 = vperm.xlu0 %1306, %v193
  %v1308 = vpop.permute.xlu0 %1307
  %1311 = vset.pattern.permute.xlu0 0
  %1312 = vperm.xlu0 %1311, %v194
  %v1313 = vpop.permute.xlu0 %1312
  %1316 = vset.pattern.permute.xlu0 0
  %1317 = vperm.xlu0 %1316, %v195
  %v1318 = vpop.permute.xlu0 %1317
  %1321 = vset.pattern.permute.xlu0 0
  %1322 = vperm.xlu0 %1321, %v196
  %v1323 = vpop.permute.xlu0 %1322
  %1326 = vset.pattern.permute.xlu0 0
  %1327 = vperm.xlu0 %1326, %v197
  %v1328 = vpop.permute.xlu0 %1327
  %1331 = vset.pattern.permute.xlu0 0
  %1332 = vperm.xlu0 %1331, %v198
  %v1333 = vpop.permute.xlu0 %1332
  %1336 = vset.pattern.permute.xlu0 0
  %1337 = vperm.xlu0 %1336, %v199
  %v1338 = vpop.permute.xlu0 %1337
  %1341 = vset.pattern.permute.xlu0 0
  %1342 = vperm.xlu0 %1341, %v200
  %v1343 = vpop.permute.xlu0 %1342
  %1346 = vset.pattern.permute.xlu0 0
  %1347 = vperm.xlu0 %1346, %v201
  %v1348 = vpop.permute.xlu0 %1347
  %1351 = vset.pattern.permute.xlu0 0
  %1352 = vperm.xlu0 %1351, %v202
  %v1353 = vpop.permute.xlu0 %1352
  %1356 = vset.pattern.permute.xlu0 0
  %1357 = vperm.xlu0 %1356, %v203
  %v1358 = vpop.permute.xlu0 %1357
  %1361 = vset.pattern.permute.xlu0 0
  %1362 = vperm.xlu0 %1361, %v204
  %v1363 = vpop.permute.xlu0 %1362
  %1366 = vset.pattern.permute.xlu0 0
  %1367 = vperm.xlu0 %1366, %v205
  %v1368 = vpop.permute.xlu0 %1367
  %1371 = vset.pattern.permute.xlu0 0
  %1372 = vperm.xlu0 %1371, %v206
  %v1373 = vpop.permute.xlu0 %1372
  %1376 = vset.pattern.permute.xlu0 0
  %1377 = vperm.xlu0 %1376, %v207
  %v1378 = vpop.permute.xlu0 %1377
  %1381 = vset.pattern.permute.xlu0 0
  %1382 = vperm.xlu0 %1381, %v208
  %v1383 = vpop.permute.xlu0 %1382
  %1386 = vset.pattern.permute.xlu0 0
  %1387 = vperm.xlu0 %1386, %v209
  %v1388 = vpop.permute.xlu0 %1387
  %1391 = vset.pattern.permute.xlu0 0
  %1392 = vperm.xlu0 %1391, %v210
  %v1393 = vpop.permute.xlu0 %1392
  %1396 = vset.pattern.permute.xlu0 0
  %1397 = vperm.xlu0 %1396, %v211
  %v1398 = vpop.permute.xlu0 %1397
  %1401 = vset.pattern.permute.xlu0 0
  %1402 = vperm.xlu0 %1401, %v212
  %v1403 = vpop.permute.xlu0 %1402
  %1406 = vset.pattern.permute.xlu0 0
  %1407 = vperm.xlu0 %1406, %v213
  %v1408 = vpop.permute.xlu0 %1407
  %1411 = vset.pattern.permute.xlu0 0
  %1412 = vperm.xlu0 %1411, %v214
  %v1413 = vpop.permute.xlu0 %1412
  %1416 = vset.pattern.permute.xlu0 0
  %1417 = vperm.xlu0 %1416, %v215
  %v1418 = vpop.permute.xlu0 %1417
  %1421 = vset.pattern.permute.xlu0 0
  %1422 = vperm.xlu0 %1421, %v216
  %v1423 = vpop.permute.xlu0 %1422
  %1426 = vset.pattern.permute.xlu0 0
  %1427 = vperm.xlu0 %1426, %v217
  %v1428 = vpop.permute.xlu0 %1427
  %1431 = vset.pattern.permute.xlu0 0
  %1432 = vperm.xlu0 %1431, %v218
  %v1433 = vpop.permute.xlu0 %1432
  %1436 = vset.pattern.permute.xlu0 0
  %1437 = vperm.xlu0 %1436, %v219
  %v1438 = vpop.permute.xlu0 %1437
  %1441 = vset.pattern.permute.xlu0 0
  %1442 = vperm.xlu0 %1441, %v220
  %v1443 = vpop.permute.xlu0 %1442
  %1446 = vset.pattern.permute.xlu0 0
  %1447 = vperm.xlu0 %1446, %v221
  %v1448 = vpop.permute.xlu0 %1447
  %1451 = vset.pattern.permute.xlu0 0
  %1452 = vperm.xlu0 %1451, %v222
  %v1453 = vpop.permute.xlu0 %1452
  %1456 = vset.pattern.permute.xlu0 0
  %1457 = vperm.xlu0 %1456, %v223
  %v1458 = vpop.permute.xlu0 %1457
  %1461 = vset.pattern.permute.xlu0 0
  %1462 = vperm.xlu0 %1461, %v224
  %v1463 = vpop.permute.xlu0 %1462
  %1466 = vset.pattern.permute.xlu0 0
  %1467 = vperm.xlu0 %1466, %v225
  %v1468 = vpop.permute.xlu0 %1467
  %1471 = vset.pattern.permute.xlu0 0
  %1472 = vperm.xlu0 %1471, %v226
  %v1473 = vpop.permute.xlu0 %1472
  %1476 = vset.pattern.permute.xlu0 0
  %1477 = vperm.xlu0 %1476, %v227
  %v1478 = vpop.permute.xlu0 %1477
  %1481 = vset.pattern.permute.xlu0 0
  %1482 = vperm.xlu0 %1481, %v228
  %v1483 = vpop.permute.xlu0 %1482
  %1486 = vset.pattern.permute.xlu0 0
  %1487 = vperm.xlu0 %1486, %v229
  %v1488 = vpop.permute.xlu0 %1487
  %1491 = vset.pattern.permute.xlu0 0
  %1492 = vperm.xlu0 %1491, %v230
  %v1493 = vpop.permute.xlu0 %1492
  %1496 = vset.pattern.permute.xlu0 0
  %1497 = vperm.xlu0 %1496, %v231
  %v1498 = vpop.permute.xlu0 %1497
  %1501 = vset.pattern.permute.xlu0 0
  %1502 = vperm.xlu0 %1501, %v232
  %v1503 = vpop.permute.xlu0 %1502
  %1506 = vset.pattern.permute.xlu0 0
  %1507 = vperm.xlu0 %1506, %v233
  %v1508 = vpop.permute.xlu0 %1507
  %1511 = vset.pattern.permute.xlu0 0
  %1512 = vperm.xlu0 %1511, %v234
  %v1513 = vpop.permute.xlu0 %1512
  %1516 = vset.pattern.permute.xlu0 0
  %1517 = vperm.xlu0 %1516, %v235
  %v1518 = vpop.permute.xlu0 %1517
  %1521 = vset.pattern.permute.xlu0 0
  %1522 = vperm.xlu0 %1521, %v236
  %v1523 = vpop.permute.xlu0 %1522
  %1526 = vset.pattern.permute.xlu0 0
  %1527 = vperm.xlu0 %1526, %v237
  %v1528 = vpop.permute.xlu0 %1527
  %1531 = vset.pattern.permute.xlu0 0
  %1532 = vperm.xlu0 %1531, %v238
  %v1533 = vpop.permute.xlu0 %1532
  %1536 = vset.pattern.permute.xlu0 0
  %1537 = vperm.xlu0 %1536, %v239
  %v1538 = vpop.permute.xlu0 %1537
  %1541 = vset.pattern.permute.xlu0 0
  %1542 = vperm.xlu0 %1541, %v240
  %v1543 = vpop.permute.xlu0 %1542
  %1546 = vset.pattern.permute.xlu0 0
  %1547 = vperm.xlu0 %1546, %v241
  %v1548 = vpop.permute.xlu0 %1547
  %1551 = vset.pattern.permute.xlu0 0
  %1552 = vperm.xlu0 %1551, %v242
  %v1553 = vpop.permute.xlu0 %1552
  %1556 = vset.pattern.permute.xlu0 0
  %1557 = vperm.xlu0 %1556, %v243
  %v1558 = vpop.permute.xlu0 %1557
  %1561 = vset.pattern.permute.xlu0 0
  %1562 = vperm.xlu0 %1561, %v244
  %v1563 = vpop.permute.xlu0 %1562
  %1566 = vset.pattern.permute.xlu0 0
  %1567 = vperm.xlu0 %1566, %v245
  %v1568 = vpop.permute.xlu0 %1567
  %1571 = vset.pattern.permute.xlu0 0
  %1572 = vperm.xlu0 %1571, %v246
  %v1573 = vpop.permute.xlu0 %1572
  %1576 = vset.pattern.permute.xlu0 0
  %1577 = vperm.xlu0 %1576, %v247
  %v1578 = vpop.permute.xlu0 %1577
  %1581 = vset.pattern.permute.xlu0 0
  %1582 = vperm.xlu0 %1581, %v248
  %v1583 = vpop.permute.xlu0 %1582
  %1586 = vset.pattern.permute.xlu0 0
  %1587 = vperm.xlu0 %1586, %v249
  %v1588 = vpop.permute.xlu0 %1587
  %1591 = vset.pattern.permute.xlu0 0
  %1592 = vperm.xlu0 %1591, %v250
  %v1593 = vpop.permute.xlu0 %1592
  %1596 = vset.pattern.permute.xlu0 0
  %1597 = vperm.xlu0 %1596, %v251
  %v1598 = vpop.permute.xlu0 %1597
  %1601 = vset.pattern.permute.xlu0 0
  %1602 = vperm.xlu0 %1601, %v252
  %v1603 = vpop.permute.xlu0 %1602
  %1606 = vset.pattern.permute.xlu0 0
  %1607 = vperm.xlu0 %1606, %v253
  %v1608 = vpop.permute.xlu0 %1607
  %1611 = vset.pattern.permute.xlu0 0
  %1612 = vperm.xlu0 %1611, %v254
  %v1613 = vpop.permute.xlu0 %1612
  %1616 = vset.pattern.permute.xlu0 0
  %1617 = vperm.xlu0 %1616, %v255
  %v1618 = vpop.permute.xlu0 %1617
  %1621 = vset.pattern.permute.xlu0 0
  %1622 = vperm.xlu0 %1621, %v256
  %v1623 = vpop.permute.xlu0 %1622
  %1626 = vset.pattern.permute.xlu0 0
  %1627 = vperm.xlu0 %1626, %v257
  %v1628 = vpop.permute.xlu0 %1627
  %1631 = vset.pattern.permute.xlu0 0
  %1632 = vperm.xlu0 %1631, %v258
  %v1633 = vpop.permute.xlu0 %1632
  %1636 = vset.pattern.permute.xlu0 0
  %1637 = vperm.xlu0 %1636, %v259
  %v1638 = vpop.permute.xlu0 %1637
  %1641 = vset.pattern.permute.xlu0 0
  %1642 = vperm.xlu0 %1641, %v260
  %v1643 = vpop.permute.xlu0 %1642
  %1646 = vset.pattern.permute.xlu0 0
  %1647 = vperm.xlu0 %1646, %v261
  %v1648 = vpop.permute.xlu0 %1647
  %1651 = vset.pattern.permute.xlu0 0
  %1652 = vperm.xlu0 %1651, %v262
  %v1653 = vpop.permute.xlu0 %1652
  %1656 = vset.pattern.permute.xlu0 0
  %1657 = vperm.xlu0 %1656, %v263
  %v1658 = vpop.permute.xlu0 %1657
  %1661 = vset.pattern.permute.xlu0 0
  %1662 = vperm.xlu0 %1661, %v264
  %v1663 = vpop.permute.xlu0 %1662
  %1666 = vset.pattern.permute.xlu0 0
  %1667 = vperm.xlu0 %1666, %v265
  %v1668 = vpop.permute.xlu0 %1667
  %1671 = vset.pattern.permute.xlu0 0
  %1672 = vperm.xlu0 %1671, %v266
  %v1673 = vpop.permute.xlu0 %1672
  %v1803 = vperm.slane %v267, 0
  %v1804 = vperm.slane %v268, 0
  %v1805 = vperm.slane %v269, 0
  %v1806 = vperm.slane %v270, 0
  %v1807 = vperm.slane %v271, 0
  %v1808 = vperm.slane %v272, 0
  %v1809 = vperm.slane %v273, 0
  %v1810 = vperm.slane %v274, 0
  %v1811 = vperm.slane %v275, 0
  %v1812 = vperm.slane %v276, 0
  %v1813 = vperm.slane %v277, 0
  %v1814 = vperm.slane %v278, 0
  %v1815 = vperm.slane %v279, 0
  %v1816 = vperm.slane %v280, 0
  %v1817 = vperm.slane %v281, 0
  %v1818 = vperm.slane %v282, 0
  %v1819 = vperm.slane %v283, 0
  %v1820 = vperm.slane %v284, 0
  %v1821 = vperm.slane %v285, 0
  %v1822 = vperm.slane %v286, 0
  %v1823 = vperm.slane %v287, 0
  %v1824 = vperm.slane %v288, 0
  %v1825 = vperm.slane %v289, 0
  %v1826 = vperm.slane %v290, 0
  %v1827 = vperm.slane %v291, 0
  %v1828 = vperm.slane %v292, 0
  %v1829 = vperm.slane %v293, 0
  %v1830 = vperm.slane %v294, 0
  %v1831 = vperm.slane %v295, 0
  %v1832 = vperm.slane %v296, 0
  %v1833 = vperm.slane %v297, 0
  %v1834 = vperm.slane %v298, 0
  %v1835 = vperm.slane %v299, 0
  %v1836 = vperm.slane %v300, 0
  %v1837 = vperm.slane %v301, 0
  %v1838 = vperm.slane %v302, 0
  %v1839 = vperm.slane %v303, 0
  %v1840 = vperm.slane %v304, 0
  %v1841 = vperm.slane %v305, 0
  %v1842 = vperm.slane %v306, 0
  %v1843 = vperm.slane %v307, 0
  %v1844 = vperm.slane %v308, 0
  %v1845 = vperm.slane %v309, 0
  %v1846 = vperm.slane %v310, 0
  %v1847 = vperm.slane %v311, 0
  %v1848 = vperm.slane %v312, 0
  %v1849 = vperm.slane %v313, 0
  %v1850 = vperm.slane %v314, 0
  %v1851 = vperm.slane %v315, 0
  %v1852 = vperm.slane %v316, 0
  %v1853 = vperm.slane %v317, 0
  %v1854 = vperm.slane %v318, 0
  %v1855 = vperm.slane %v319, 0
  %v1856 = vperm.slane %v320, 0
  %v1857 = vperm.slane %v321, 0
  %v1858 = vperm.slane %v322, 0
  %v1859 = vperm.slane %v323, 0
  %v1860 = vperm.slane %v324, 0
  %v1861 = vperm.slane %v325, 0
  %v1862 = vperm.slane %v326, 0
  %v1863 = vperm.slane %v327, 0
  %v1864 = vperm.slane %v328, 0
  %v1865 = vperm.slane %v329, 0
  %v1866 = vperm.slane %v330, 0
  %v1867 = vperm.slane %v331, 0
  %v1868 = vperm.slane %v332, 0
  %v1869 = vperm.slane %v333, 0
  %v1870 = vperm.slane %v334, 0
  %v1871 = vperm.slane %v335, 0
  %v1872 = vperm.slane %v336, 0
  %v1873 = vperm.slane %v337, 0
  %v1874 = vperm.slane %v338, 0
  %v1875 = vperm.slane %v339, 0
  %v1876 = vperm.slane %v340, 0
  %v1877 = vperm.slane %v341, 0
  %v1878 = vperm.slane %v342, 0
  %v1879 = vperm.slane %v343, 0
  %v1880 = vperm.slane %v344, 0
  %v1881 = vperm.slane %v345, 0
  %v1882 = vperm.slane %v346, 0
  %v1883 = vperm.slane %v347, 0
  %v1884 = vperm.slane %v348, 0
  %v1885 = vperm.slane %v349, 0
  %v1886 = vperm.slane %v350, 0
  %v1887 = vperm.slane %v351, 0
  %v1888 = vperm.slane %v352, 0
  %v1889 = vperm.slane %v353, 0
  %v1890 = vperm.slane %v354, 0
  %v1891 = vperm.slane %v355, 0
  %v1892 = vperm.slane %v356, 0
  %v1893 = vperm.slane %v357, 0
  %v1894 = vperm.slane %v358, 0
  %v1895 = vperm.slane %v359, 0
  %v1896 = vperm.slane %v360, 0
  %v1897 = vperm.slane %v361, 0
  %v1898 = vperm.slane %v362, 0
  %v1899 = vperm.slane %v363, 0
  %v1900 = vperm.slane %v364, 0
  %v1901 = vperm.slane %v365, 0
  %v1902 = vperm.slane %v366, 0
  %v1903 = vperm.slane %v367, 0
  %v1904 = vperm.slane %v368, 0
  %v1905 = vperm.slane %v369, 0
  %v1906 = vperm.slane %v370, 0
  %v1907 = vperm.slane %v371, 0
  %v1908 = vperm.slane %v372, 0
  %v1909 = vperm.slane %v373, 0
  %v1910 = vperm.slane %v374, 0
  %v1911 = vperm.slane %v375, 0
  %v1912 = vperm.slane %v376, 0
  %v1913 = vperm.slane %v377, 0
  %v1914 = vperm.slane %v378, 0
  %v1915 = vperm.slane %v379, 0
  %v1916 = vperm.slane %v380, 0
  %v1917 = vperm.slane %v381, 0
  %v1918 = vperm.slane %v382, 0
  %v1919 = vperm.slane %v383, 0
  %v1920 = vperm.slane %v384, 0
  %v1921 = vperm.slane %v385, 0
  %v1922 = vperm.slane %v386, 0
  %v1923 = vperm.slane %v387, 0
  %v1924 = vperm.slane %v388, 0
  %v1925 = vperm.slane %v389, 0
  %v1926 = vperm.slane %v390, 0
  %v1927 = vperm.slane %v391, 0
  %v1928 = vperm.slane %v392, 0
  %v1929 = vperm.slane %v393, 0
  %v1930 = vperm.slane %v394, 0
  %v2059 = vmul.f32 %v398, %v1803
  %v2060 = vmul.f32 %v403, %v1803
  %v2061 = vmul.f32 %v408, %v1804
  %v2062 = vmul.f32 %v413, %v1804
  %v2063 = vmul.f32 %v418, %v1805
  %v2064 = vmul.f32 %v423, %v1805
  %v2065 = vmul.f32 %v428, %v1806
  %v2066 = vmul.f32 %v433, %v1806
  %v2067 = vmul.f32 %v438, %v1807
  %v2068 = vmul.f32 %v443, %v1807
  %v2069 = vmul.f32 %v448, %v1808
  %v2070 = vmul.f32 %v453, %v1808
  %v2071 = vmul.f32 %v458, %v1809
  %v2072 = vmul.f32 %v463, %v1809
  %v2073 = vmul.f32 %v468, %v1810
  %v2074 = vmul.f32 %v473, %v1810
  %v2075 = vmul.f32 %v478, %v1811
  %v2076 = vmul.f32 %v483, %v1811
  %v2077 = vmul.f32 %v488, %v1812
  %v2078 = vmul.f32 %v493, %v1812
  %v2079 = vmul.f32 %v498, %v1813
  %v2080 = vmul.f32 %v503, %v1813
  %v2081 = vmul.f32 %v508, %v1814
  %v2082 = vmul.f32 %v513, %v1814
  %v2083 = vmul.f32 %v518, %v1815
  %v2084 = vmul.f32 %v523, %v1815
  %v2085 = vmul.f32 %v528, %v1816
  %v2086 = vmul.f32 %v533, %v1816
  %v2087 = vmul.f32 %v538, %v1817
  %v2088 = vmul.f32 %v543, %v1817
  %v2089 = vmul.f32 %v548, %v1818
  %v2090 = vmul.f32 %v553, %v1818
  %v2091 = vmul.f32 %v558, %v1819
  %v2092 = vmul.f32 %v563, %v1819
  %v2093 = vmul.f32 %v568, %v1820
  %v2094 = vmul.f32 %v573, %v1820
  %v2095 = vmul.f32 %v578, %v1821
  %v2096 = vmul.f32 %v583, %v1821
  %v2097 = vmul.f32 %v588, %v1822
  %v2098 = vmul.f32 %v593, %v1822
  %v2099 = vmul.f32 %v598, %v1823
  %v2100 = vmul.f32 %v603, %v1823
  %v2101 = vmul.f32 %v608, %v1824
  %v2102 = vmul.f32 %v613, %v1824
  %v2103 = vmul.f32 %v618, %v1825
  %v2104 = vmul.f32 %v623, %v1825
  %v2105 = vmul.f32 %v628, %v1826
  %v2106 = vmul.f32 %v633, %v1826
  %v2107 = vmul.f32 %v638, %v1827
  %v2108 = vmul.f32 %v643, %v1827
  %v2109 = vmul.f32 %v648, %v1828
  %v2110 = vmul.f32 %v653, %v1828
  %v2111 = vmul.f32 %v658, %v1829
  %v2112 = vmul.f32 %v663, %v1829
  %v2113 = vmul.f32 %v668, %v1830
  %v2114 = vmul.f32 %v673, %v1830
  %v2115 = vmul.f32 %v678, %v1831
  %v2116 = vmul.f32 %v683, %v1831
  %v2117 = vmul.f32 %v688, %v1832
  %v2118 = vmul.f32 %v693, %v1832
  %v2119 = vmul.f32 %v698, %v1833
  %v2120 = vmul.f32 %v703, %v1833
  %v2121 = vmul.f32 %v708, %v1834
  %v2122 = vmul.f32 %v713, %v1834
  %v2123 = vmul.f32 %v718, %v1835
  %v2124 = vmul.f32 %v723, %v1835
  %v2125 = vmul.f32 %v728, %v1836
  %v2126 = vmul.f32 %v733, %v1836
  %v2127 = vmul.f32 %v738, %v1837
  %v2128 = vmul.f32 %v743, %v1837
  %v2129 = vmul.f32 %v748, %v1838
  %v2130 = vmul.f32 %v753, %v1838
  %v2131 = vmul.f32 %v758, %v1839
  %v2132 = vmul.f32 %v763, %v1839
  %v2133 = vmul.f32 %v768, %v1840
  %v2134 = vmul.f32 %v773, %v1840
  %v2135 = vmul.f32 %v778, %v1841
  %v2136 = vmul.f32 %v783, %v1841
  %v2137 = vmul.f32 %v788, %v1842
  %v2138 = vmul.f32 %v793, %v1842
  %v2139 = vmul.f32 %v798, %v1843
  %v2140 = vmul.f32 %v803, %v1843
  %v2141 = vmul.f32 %v808, %v1844
  %v2142 = vmul.f32 %v813, %v1844
  %v2143 = vmul.f32 %v818, %v1845
  %v2144 = vmul.f32 %v823, %v1845
  %v2145 = vmul.f32 %v828, %v1846
  %v2146 = vmul.f32 %v833, %v1846
  %v2147 = vmul.f32 %v838, %v1847
  %v2148 = vmul.f32 %v843, %v1847
  %v2149 = vmul.f32 %v848, %v1848
  %v2150 = vmul.f32 %v853, %v1848
  %v2151 = vmul.f32 %v858, %v1849
  %v2152 = vmul.f32 %v863, %v1849
  %v2153 = vmul.f32 %v868, %v1850
  %v2154 = vmul.f32 %v873, %v1850
  %v2155 = vmul.f32 %v878, %v1851
  %v2156 = vmul.f32 %v883, %v1851
  %v2157 = vmul.f32 %v888, %v1852
  %v2158 = vmul.f32 %v893, %v1852
  %v2159 = vmul.f32 %v898, %v1853
  %v2160 = vmul.f32 %v903, %v1853
  %v2161 = vmul.f32 %v908, %v1854
  %v2162 = vmul.f32 %v913, %v1854
  %v2163 = vmul.f32 %v918, %v1855
  %v2164 = vmul.f32 %v923, %v1855
  %v2165 = vmul.f32 %v928, %v1856
  %v2166 = vmul.f32 %v933, %v1856
  %v2167 = vmul.f32 %v938, %v1857
  %v2168 = vmul.f32 %v943, %v1857
  %v2169 = vmul.f32 %v948, %v1858
  %v2170 = vmul.f32 %v953, %v1858
  %v2171 = vmul.f32 %v958, %v1859
  %v2172 = vmul.f32 %v963, %v1859
  %v2173 = vmul.f32 %v968, %v1860
  %v2174 = vmul.f32 %v973, %v1860
  %v2175 = vmul.f32 %v978, %v1861
  %v2176 = vmul.f32 %v983, %v1861
  %v2177 = vmul.f32 %v988, %v1862
  %v2178 = vmul.f32 %v993, %v1862
  %v2179 = vmul.f32 %v998, %v1863
  %v2180 = vmul.f32 %v1003, %v1863
  %v2181 = vmul.f32 %v1008, %v1864
  %v2182 = vmul.f32 %v1013, %v1864
  %v2183 = vmul.f32 %v1018, %v1865
  %v2184 = vmul.f32 %v1023, %v1865
  %v2185 = vmul.f32 %v1028, %v1866
  %v2186 = vmul.f32 %v1033, %v1866
  %v2187 = vmul.f32 %v1038, %v1867
  %v2188 = vmul.f32 %v1043, %v1867
  %v2189 = vmul.f32 %v1048, %v1868
  %v2190 = vmul.f32 %v1053, %v1868
  %v2191 = vmul.f32 %v1058, %v1869
  %v2192 = vmul.f32 %v1063, %v1869
  %v2193 = vmul.f32 %v1068, %v1870
  %v2194 = vmul.f32 %v1073, %v1870
  %v2195 = vmul.f32 %v1078, %v1871
  %v2196 = vmul.f32 %v1083, %v1871
  %v2197 = vmul.f32 %v1088, %v1872
  %v2198 = vmul.f32 %v1093, %v1872
  %v2199 = vmul.f32 %v1098, %v1873
  %v2200 = vmul.f32 %v1103, %v1873
  %v2201 = vmul.f32 %v1108, %v1874
  %v2202 = vmul.f32 %v1113, %v1874
  %v2203 = vmul.f32 %v1118, %v1875
  %v2204 = vmul.f32 %v1123, %v1875
  %v2205 = vmul.f32 %v1128, %v1876
  %v2206 = vmul.f32 %v1133, %v1876
  %v2207 = vmul.f32 %v1138, %v1877
  %v2208 = vmul.f32 %v1143, %v1877
  %v2209 = vmul.f32 %v1148, %v1878
  %v2210 = vmul.f32 %v1153, %v1878
  %v2211 = vmul.f32 %v1158, %v1879
  %v2212 = vmul.f32 %v1163, %v1879
  %v2213 = vmul.f32 %v1168, %v1880
  %v2214 = vmul.f32 %v1173, %v1880
  %v2215 = vmul.f32 %v1178, %v1881
  %v2216 = vmul.f32 %v1183, %v1881
  %v2217 = vmul.f32 %v1188, %v1882
  %v2218 = vmul.f32 %v1193, %v1882
  %v2219 = vmul.f32 %v1198, %v1883
  %v2220 = vmul.f32 %v1203, %v1883
  %v2221 = vmul.f32 %v1208, %v1884
  %v2222 = vmul.f32 %v1213, %v1884
  %v2223 = vmul.f32 %v1218, %v1885
  %v2224 = vmul.f32 %v1223, %v1885
  %v2225 = vmul.f32 %v1228, %v1886
  %v2226 = vmul.f32 %v1233, %v1886
  %v2227 = vmul.f32 %v1238, %v1887
  %v2228 = vmul.f32 %v1243, %v1887
  %v2229 = vmul.f32 %v1248, %v1888
  %v2230 = vmul.f32 %v1253, %v1888
  %v2231 = vmul.f32 %v1258, %v1889
  %v2232 = vmul.f32 %v1263, %v1889
  %v2233 = vmul.f32 %v1268, %v1890
  %v2234 = vmul.f32 %v1273, %v1890
  %v2235 = vmul.f32 %v1278, %v1891
  %v2236 = vmul.f32 %v1283, %v1891
  %v2237 = vmul.f32 %v1288, %v1892
  %v2238 = vmul.f32 %v1293, %v1892
  %v2239 = vmul.f32 %v1298, %v1893
  %v2240 = vmul.f32 %v1303, %v1893
  %v2241 = vmul.f32 %v1308, %v1894
  %v2242 = vmul.f32 %v1313, %v1894
  %v2243 = vmul.f32 %v1318, %v1895
  %v2244 = vmul.f32 %v1323, %v1895
  %v2245 = vmul.f32 %v1328, %v1896
  %v2246 = vmul.f32 %v1333, %v1896
  %v2247 = vmul.f32 %v1338, %v1897
  %v2248 = vmul.f32 %v1343, %v1897
  %v2249 = vmul.f32 %v1348, %v1898
  %v2250 = vmul.f32 %v1353, %v1898
  %v2251 = vmul.f32 %v1358, %v1899
  %v2252 = vmul.f32 %v1363, %v1899
  %v2253 = vmul.f32 %v1368, %v1900
  %v2254 = vmul.f32 %v1373, %v1900
  %v2255 = vmul.f32 %v1378, %v1901
  %v2256 = vmul.f32 %v1383, %v1901
  %v2257 = vmul.f32 %v1388, %v1902
  %v2258 = vmul.f32 %v1393, %v1902
  %v2259 = vmul.f32 %v1398, %v1903
  %v2260 = vmul.f32 %v1403, %v1903
  %v2261 = vmul.f32 %v1408, %v1904
  %v2262 = vmul.f32 %v1413, %v1904
  %v2263 = vmul.f32 %v1418, %v1905
  %v2264 = vmul.f32 %v1423, %v1905
  %v2265 = vmul.f32 %v1428, %v1906
  %v2266 = vmul.f32 %v1433, %v1906
  %v2267 = vmul.f32 %v1438, %v1907
  %v2268 = vmul.f32 %v1443, %v1907
  %v2269 = vmul.f32 %v1448, %v1908
  %v2270 = vmul.f32 %v1453, %v1908
  %v2271 = vmul.f32 %v1458, %v1909
  %v2272 = vmul.f32 %v1463, %v1909
  %v2273 = vmul.f32 %v1468, %v1910
  %v2274 = vmul.f32 %v1473, %v1910
  %v2275 = vmul.f32 %v1478, %v1911
  %v2276 = vmul.f32 %v1483, %v1911
  %v2277 = vmul.f32 %v1488, %v1912
  %v2278 = vmul.f32 %v1493, %v1912
  %v2279 = vmul.f32 %v1498, %v1913
  %v2280 = vmul.f32 %v1503, %v1913
  %v2281 = vmul.f32 %v1508, %v1914
  %v2282 = vmul.f32 %v1513, %v1914
  %v2283 = vmul.f32 %v1518, %v1915
  %v2284 = vmul.f32 %v1523, %v1915
  %v2285 = vmul.f32 %v1528, %v1916
  %v2286 = vmul.f32 %v1533, %v1916
  %v2287 = vmul.f32 %v1538, %v1917
  %v2288 = vmul.f32 %v1543, %v1917
  %v2289 = vmul.f32 %v1548, %v1918
  %v2290 = vmul.f32 %v1553, %v1918
  %v2291 = vmul.f32 %v1558, %v1919
  %v2292 = vmul.f32 %v1563, %v1919
  %v2293 = vmul.f32 %v1568, %v1920
  %v2294 = vmul.f32 %v1573, %v1920
  %v2295 = vmul.f32 %v1578, %v1921
  %v2296 = vmul.f32 %v1583, %v1921
  %v2297 = vmul.f32 %v1588, %v1922
  %v2298 = vmul.f32 %v1593, %v1922
  %v2299 = vmul.f32 %v1598, %v1923
  %v2300 = vmul.f32 %v1603, %v1923
  %v2301 = vmul.f32 %v1608, %v1924
  %v2302 = vmul.f32 %v1613, %v1924
  %v2303 = vmul.f32 %v1618, %v1925
  %v2304 = vmul.f32 %v1623, %v1925
  %v2305 = vmul.f32 %v1628, %v1926
  %v2306 = vmul.f32 %v1633, %v1926
  %v2307 = vmul.f32 %v1638, %v1927
  %v2308 = vmul.f32 %v1643, %v1927
  %v2309 = vmul.f32 %v1648, %v1928
  %v2310 = vmul.f32 %v1653, %v1928
  %v2311 = vmul.f32 %v1658, %v1929
  %v2312 = vmul.f32 %v1663, %v1929
  %v2313 = vmul.f32 %v1668, %v1930
  %v2314 = vmul.f32 %v1673, %v1930
  %s2315 = scalar_lea.vmem %s0, 2048
  %v2316 = vld [vmem:[%s2315] sm:$0xff]
  %v2317 = vld [vmem:[%s2315 + $0x8] sm:$0xff]
  %v2318 = vld [vmem:[%s2315 + $0x10] sm:$0xff]
  %v2319 = vld [vmem:[%s2315 + $0x18] sm:$0xff]
  %v2320 = vld [vmem:[%s2315 + $0x20] sm:$0xff]
  %v2321 = vld [vmem:[%s2315 + $0x28] sm:$0xff]
  %v2322 = vld [vmem:[%s2315 + $0x30] sm:$0xff]
  %v2323 = vld [vmem:[%s2315 + $0x38] sm:$0xff]
  %v2324 = vld [vmem:[%s2315 + $0x40] sm:$0xff]
  %v2325 = vld [vmem:[%s2315 + $0x48] sm:$0xff]
  %v2326 = vld [vmem:[%s2315 + $0x50] sm:$0xff]
  %v2327 = vld [vmem:[%s2315 + $0x58] sm:$0xff]
  %v2328 = vld [vmem:[%s2315 + $0x60] sm:$0xff]
  %v2329 = vld [vmem:[%s2315 + $0x68] sm:$0xff]
  %v2330 = vld [vmem:[%s2315 + $0x70] sm:$0xff]
  %v2331 = vld [vmem:[%s2315 + $0x78] sm:$0xff]
  %v2332 = vld [vmem:[%s2315 + $0x80] sm:$0xff]
  %v2333 = vld [vmem:[%s2315 + $0x88] sm:$0xff]
  %v2334 = vld [vmem:[%s2315 + $0x90] sm:$0xff]
  %v2335 = vld [vmem:[%s2315 + $0x98] sm:$0xff]
  %v2336 = vld [vmem:[%s2315 + $0xa0] sm:$0xff]
  %v2337 = vld [vmem:[%s2315 + $0xa8] sm:$0xff]
  %v2338 = vld [vmem:[%s2315 + $0xb0] sm:$0xff]
  %v2339 = vld [vmem:[%s2315 + $0xb8] sm:$0xff]
  %v2340 = vld [vmem:[%s2315 + $0xc0] sm:$0xff]
  %v2341 = vld [vmem:[%s2315 + $0xc8] sm:$0xff]
  %v2342 = vld [vmem:[%s2315 + $0xd0] sm:$0xff]
  %v2343 = vld [vmem:[%s2315 + $0xd8] sm:$0xff]
  %v2344 = vld [vmem:[%s2315 + $0xe0] sm:$0xff]
  %v2345 = vld [vmem:[%s2315 + $0xe8] sm:$0xff]
  %v2346 = vld [vmem:[%s2315 + $0xf0] sm:$0xff]
  %v2347 = vld [vmem:[%s2315 + $0xf8] sm:$0xff]
  %v2348 = vld [vmem:[%s2315 + $0x100] sm:$0xff]
  %v2349 = vld [vmem:[%s2315 + $0x108] sm:$0xff]
  %v2350 = vld [vmem:[%s2315 + $0x110] sm:$0xff]
  %v2351 = vld [vmem:[%s2315 + $0x118] sm:$0xff]
  %v2352 = vld [vmem:[%s2315 + $0x120] sm:$0xff]
  %v2353 = vld [vmem:[%s2315 + $0x128] sm:$0xff]
  %v2354 = vld [vmem:[%s2315 + $0x130] sm:$0xff]
  %v2355 = vld [vmem:[%s2315 + $0x138] sm:$0xff]
  %v2356 = vld [vmem:[%s2315 + $0x140] sm:$0xff]
  %v2357 = vld [vmem:[%s2315 + $0x148] sm:$0xff]
  %v2358 = vld [vmem:[%s2315 + $0x150] sm:$0xff]
  %v2359 = vld [vmem:[%s2315 + $0x158] sm:$0xff]
  %v2360 = vld [vmem:[%s2315 + $0x160] sm:$0xff]
  %v2361 = vld [vmem:[%s2315 + $0x168] sm:$0xff]
  %v2362 = vld [vmem:[%s2315 + $0x170] sm:$0xff]
  %v2363 = vld [vmem:[%s2315 + $0x178] sm:$0xff]
  %v2364 = vld [vmem:[%s2315 + $0x180] sm:$0xff]
  %v2365 = vld [vmem:[%s2315 + $0x188] sm:$0xff]
  %v2366 = vld [vmem:[%s2315 + $0x190] sm:$0xff]
  %v2367 = vld [vmem:[%s2315 + $0x198] sm:$0xff]
  %v2368 = vld [vmem:[%s2315 + $0x1a0] sm:$0xff]
  %v2369 = vld [vmem:[%s2315 + $0x1a8] sm:$0xff]
  %v2370 = vld [vmem:[%s2315 + $0x1b0] sm:$0xff]
  %v2371 = vld [vmem:[%s2315 + $0x1b8] sm:$0xff]
  %v2372 = vld [vmem:[%s2315 + $0x1c0] sm:$0xff]
  %v2373 = vld [vmem:[%s2315 + $0x1c8] sm:$0xff]
  %v2374 = vld [vmem:[%s2315 + $0x1d0] sm:$0xff]
  %v2375 = vld [vmem:[%s2315 + $0x1d8] sm:$0xff]
  %v2376 = vld [vmem:[%s2315 + $0x1e0] sm:$0xff]
  %v2377 = vld [vmem:[%s2315 + $0x1e8] sm:$0xff]
  %v2378 = vld [vmem:[%s2315 + $0x1f0] sm:$0xff]
  %v2379 = vld [vmem:[%s2315 + $0x1f8] sm:$0xff]
  %v2380 = vld [vmem:[%s2315 + $0x200] sm:$0xff]
  %v2381 = vld [vmem:[%s2315 + $0x208] sm:$0xff]
  %v2382 = vld [vmem:[%s2315 + $0x210] sm:$0xff]
  %v2383 = vld [vmem:[%s2315 + $0x218] sm:$0xff]
  %v2384 = vld [vmem:[%s2315 + $0x220] sm:$0xff]
  %v2385 = vld [vmem:[%s2315 + $0x228] sm:$0xff]
  %v2386 = vld [vmem:[%s2315 + $0x230] sm:$0xff]
  %v2387 = vld [vmem:[%s2315 + $0x238] sm:$0xff]
  %v2388 = vld [vmem:[%s2315 + $0x240] sm:$0xff]
  %v2389 = vld [vmem:[%s2315 + $0x248] sm:$0xff]
  %v2390 = vld [vmem:[%s2315 + $0x250] sm:$0xff]
  %v2391 = vld [vmem:[%s2315 + $0x258] sm:$0xff]
  %v2392 = vld [vmem:[%s2315 + $0x260] sm:$0xff]
  %v2393 = vld [vmem:[%s2315 + $0x268] sm:$0xff]
  %v2394 = vld [vmem:[%s2315 + $0x270] sm:$0xff]
  %v2395 = vld [vmem:[%s2315 + $0x278] sm:$0xff]
  %v2396 = vld [vmem:[%s2315 + $0x280] sm:$0xff]
  %v2397 = vld [vmem:[%s2315 + $0x288] sm:$0xff]
  %v2398 = vld [vmem:[%s2315 + $0x290] sm:$0xff]
  %v2399 = vld [vmem:[%s2315 + $0x298] sm:$0xff]
  %v2400 = vld [vmem:[%s2315 + $0x2a0] sm:$0xff]
  %v2401 = vld [vmem:[%s2315 + $0x2a8] sm:$0xff]
  %v2402 = vld [vmem:[%s2315 + $0x2b0] sm:$0xff]
  %v2403 = vld [vmem:[%s2315 + $0x2b8] sm:$0xff]
  %v2404 = vld [vmem:[%s2315 + $0x2c0] sm:$0xff]
  %v2405 = vld [vmem:[%s2315 + $0x2c8] sm:$0xff]
  %v2406 = vld [vmem:[%s2315 + $0x2d0] sm:$0xff]
  %v2407 = vld [vmem:[%s2315 + $0x2d8] sm:$0xff]
  %v2408 = vld [vmem:[%s2315 + $0x2e0] sm:$0xff]
  %v2409 = vld [vmem:[%s2315 + $0x2e8] sm:$0xff]
  %v2410 = vld [vmem:[%s2315 + $0x2f0] sm:$0xff]
  %v2411 = vld [vmem:[%s2315 + $0x2f8] sm:$0xff]
  %v2412 = vld [vmem:[%s2315 + $0x300] sm:$0xff]
  %v2413 = vld [vmem:[%s2315 + $0x308] sm:$0xff]
  %v2414 = vld [vmem:[%s2315 + $0x310] sm:$0xff]
  %v2415 = vld [vmem:[%s2315 + $0x318] sm:$0xff]
  %v2416 = vld [vmem:[%s2315 + $0x320] sm:$0xff]
  %v2417 = vld [vmem:[%s2315 + $0x328] sm:$0xff]
  %v2418 = vld [vmem:[%s2315 + $0x330] sm:$0xff]
  %v2419 = vld [vmem:[%s2315 + $0x338] sm:$0xff]
  %v2420 = vld [vmem:[%s2315 + $0x340] sm:$0xff]
  %v2421 = vld [vmem:[%s2315 + $0x348] sm:$0xff]
  %v2422 = vld [vmem:[%s2315 + $0x350] sm:$0xff]
  %v2423 = vld [vmem:[%s2315 + $0x358] sm:$0xff]
  %v2424 = vld [vmem:[%s2315 + $0x360] sm:$0xff]
  %v2425 = vld [vmem:[%s2315 + $0x368] sm:$0xff]
  %v2426 = vld [vmem:[%s2315 + $0x370] sm:$0xff]
  %v2427 = vld [vmem:[%s2315 + $0x378] sm:$0xff]
  %v2428 = vld [vmem:[%s2315 + $0x380] sm:$0xff]
  %v2429 = vld [vmem:[%s2315 + $0x388] sm:$0xff]
  %v2430 = vld [vmem:[%s2315 + $0x390] sm:$0xff]
  %v2431 = vld [vmem:[%s2315 + $0x398] sm:$0xff]
  %v2432 = vld [vmem:[%s2315 + $0x3a0] sm:$0xff]
  %v2433 = vld [vmem:[%s2315 + $0x3a8] sm:$0xff]
  %v2434 = vld [vmem:[%s2315 + $0x3b0] sm:$0xff]
  %v2435 = vld [vmem:[%s2315 + $0x3b8] sm:$0xff]
  %v2436 = vld [vmem:[%s2315 + $0x3c0] sm:$0xff]
  %v2437 = vld [vmem:[%s2315 + $0x3c8] sm:$0xff]
  %v2438 = vld [vmem:[%s2315 + $0x3d0] sm:$0xff]
  %v2439 = vld [vmem:[%s2315 + $0x3d8] sm:$0xff]
  %v2440 = vld [vmem:[%s2315 + $0x3e0] sm:$0xff]
  %v2441 = vld [vmem:[%s2315 + $0x3e8] sm:$0xff]
  %v2442 = vld [vmem:[%s2315 + $0x3f0] sm:$0xff]
  %v2443 = vld [vmem:[%s2315 + $0x3f8] sm:$0xff]
  %v2444 = vld [vmem:[%s2315 + $0x400] sm:$0xff]
  %v2445 = vld [vmem:[%s2315 + $0x408] sm:$0xff]
  %v2446 = vld [vmem:[%s2315 + $0x410] sm:$0xff]
  %v2447 = vld [vmem:[%s2315 + $0x418] sm:$0xff]
  %v2448 = vld [vmem:[%s2315 + $0x420] sm:$0xff]
  %v2449 = vld [vmem:[%s2315 + $0x428] sm:$0xff]
  %v2450 = vld [vmem:[%s2315 + $0x430] sm:$0xff]
  %v2451 = vld [vmem:[%s2315 + $0x438] sm:$0xff]
  %v2452 = vld [vmem:[%s2315 + $0x440] sm:$0xff]
  %v2453 = vld [vmem:[%s2315 + $0x448] sm:$0xff]
  %v2454 = vld [vmem:[%s2315 + $0x450] sm:$0xff]
  %v2455 = vld [vmem:[%s2315 + $0x458] sm:$0xff]
  %v2456 = vld [vmem:[%s2315 + $0x460] sm:$0xff]
  %v2457 = vld [vmem:[%s2315 + $0x468] sm:$0xff]
  %v2458 = vld [vmem:[%s2315 + $0x470] sm:$0xff]
  %v2459 = vld [vmem:[%s2315 + $0x478] sm:$0xff]
  %v2460 = vld [vmem:[%s2315 + $0x480] sm:$0xff]
  %v2461 = vld [vmem:[%s2315 + $0x488] sm:$0xff]
  %v2462 = vld [vmem:[%s2315 + $0x490] sm:$0xff]
  %v2463 = vld [vmem:[%s2315 + $0x498] sm:$0xff]
  %v2464 = vld [vmem:[%s2315 + $0x4a0] sm:$0xff]
  %v2465 = vld [vmem:[%s2315 + $0x4a8] sm:$0xff]
  %v2466 = vld [vmem:[%s2315 + $0x4b0] sm:$0xff]
  %v2467 = vld [vmem:[%s2315 + $0x4b8] sm:$0xff]
  %v2468 = vld [vmem:[%s2315 + $0x4c0] sm:$0xff]
  %v2469 = vld [vmem:[%s2315 + $0x4c8] sm:$0xff]
  %v2470 = vld [vmem:[%s2315 + $0x4d0] sm:$0xff]
  %v2471 = vld [vmem:[%s2315 + $0x4d8] sm:$0xff]
  %v2472 = vld [vmem:[%s2315 + $0x4e0] sm:$0xff]
  %v2473 = vld [vmem:[%s2315 + $0x4e8] sm:$0xff]
  %v2474 = vld [vmem:[%s2315 + $0x4f0] sm:$0xff]
  %v2475 = vld [vmem:[%s2315 + $0x4f8] sm:$0xff]
  %v2476 = vld [vmem:[%s2315 + $0x500] sm:$0xff]
  %v2477 = vld [vmem:[%s2315 + $0x508] sm:$0xff]
  %v2478 = vld [vmem:[%s2315 + $0x510] sm:$0xff]
  %v2479 = vld [vmem:[%s2315 + $0x518] sm:$0xff]
  %v2480 = vld [vmem:[%s2315 + $0x520] sm:$0xff]
  %v2481 = vld [vmem:[%s2315 + $0x528] sm:$0xff]
  %v2482 = vld [vmem:[%s2315 + $0x530] sm:$0xff]
  %v2483 = vld [vmem:[%s2315 + $0x538] sm:$0xff]
  %v2484 = vld [vmem:[%s2315 + $0x540] sm:$0xff]
  %v2485 = vld [vmem:[%s2315 + $0x548] sm:$0xff]
  %v2486 = vld [vmem:[%s2315 + $0x550] sm:$0xff]
  %v2487 = vld [vmem:[%s2315 + $0x558] sm:$0xff]
  %v2488 = vld [vmem:[%s2315 + $0x560] sm:$0xff]
  %v2489 = vld [vmem:[%s2315 + $0x568] sm:$0xff]
  %v2490 = vld [vmem:[%s2315 + $0x570] sm:$0xff]
  %v2491 = vld [vmem:[%s2315 + $0x578] sm:$0xff]
  %v2492 = vld [vmem:[%s2315 + $0x580] sm:$0xff]
  %v2493 = vld [vmem:[%s2315 + $0x588] sm:$0xff]
  %v2494 = vld [vmem:[%s2315 + $0x590] sm:$0xff]
  %v2495 = vld [vmem:[%s2315 + $0x598] sm:$0xff]
  %v2496 = vld [vmem:[%s2315 + $0x5a0] sm:$0xff]
  %v2497 = vld [vmem:[%s2315 + $0x5a8] sm:$0xff]
  %v2498 = vld [vmem:[%s2315 + $0x5b0] sm:$0xff]
  %v2499 = vld [vmem:[%s2315 + $0x5b8] sm:$0xff]
  %v2500 = vld [vmem:[%s2315 + $0x5c0] sm:$0xff]
  %v2501 = vld [vmem:[%s2315 + $0x5c8] sm:$0xff]
  %v2502 = vld [vmem:[%s2315 + $0x5d0] sm:$0xff]
  %v2503 = vld [vmem:[%s2315 + $0x5d8] sm:$0xff]
  %v2504 = vld [vmem:[%s2315 + $0x5e0] sm:$0xff]
  %v2505 = vld [vmem:[%s2315 + $0x5e8] sm:$0xff]
  %v2506 = vld [vmem:[%s2315 + $0x5f0] sm:$0xff]
  %v2507 = vld [vmem:[%s2315 + $0x5f8] sm:$0xff]
  %v2508 = vld [vmem:[%s2315 + $0x600] sm:$0xff]
  %v2509 = vld [vmem:[%s2315 + $0x608] sm:$0xff]
  %v2510 = vld [vmem:[%s2315 + $0x610] sm:$0xff]
  %v2511 = vld [vmem:[%s2315 + $0x618] sm:$0xff]
  %v2512 = vld [vmem:[%s2315 + $0x620] sm:$0xff]
  %v2513 = vld [vmem:[%s2315 + $0x628] sm:$0xff]
  %v2514 = vld [vmem:[%s2315 + $0x630] sm:$0xff]
  %v2515 = vld [vmem:[%s2315 + $0x638] sm:$0xff]
  %v2516 = vld [vmem:[%s2315 + $0x640] sm:$0xff]
  %v2517 = vld [vmem:[%s2315 + $0x648] sm:$0xff]
  %v2518 = vld [vmem:[%s2315 + $0x650] sm:$0xff]
  %v2519 = vld [vmem:[%s2315 + $0x658] sm:$0xff]
  %v2520 = vld [vmem:[%s2315 + $0x660] sm:$0xff]
  %v2521 = vld [vmem:[%s2315 + $0x668] sm:$0xff]
  %v2522 = vld [vmem:[%s2315 + $0x670] sm:$0xff]
  %v2523 = vld [vmem:[%s2315 + $0x678] sm:$0xff]
  %v2524 = vld [vmem:[%s2315 + $0x680] sm:$0xff]
  %v2525 = vld [vmem:[%s2315 + $0x688] sm:$0xff]
  %v2526 = vld [vmem:[%s2315 + $0x690] sm:$0xff]
  %v2527 = vld [vmem:[%s2315 + $0x698] sm:$0xff]
  %v2528 = vld [vmem:[%s2315 + $0x6a0] sm:$0xff]
  %v2529 = vld [vmem:[%s2315 + $0x6a8] sm:$0xff]
  %v2530 = vld [vmem:[%s2315 + $0x6b0] sm:$0xff]
  %v2531 = vld [vmem:[%s2315 + $0x6b8] sm:$0xff]
  %v2532 = vld [vmem:[%s2315 + $0x6c0] sm:$0xff]
  %v2533 = vld [vmem:[%s2315 + $0x6c8] sm:$0xff]
  %v2534 = vld [vmem:[%s2315 + $0x6d0] sm:$0xff]
  %v2535 = vld [vmem:[%s2315 + $0x6d8] sm:$0xff]
  %v2536 = vld [vmem:[%s2315 + $0x6e0] sm:$0xff]
  %v2537 = vld [vmem:[%s2315 + $0x6e8] sm:$0xff]
  %v2538 = vld [vmem:[%s2315 + $0x6f0] sm:$0xff]
  %v2539 = vld [vmem:[%s2315 + $0x6f8] sm:$0xff]
  %v2540 = vld [vmem:[%s2315 + $0x700] sm:$0xff]
  %v2541 = vld [vmem:[%s2315 + $0x708] sm:$0xff]
  %v2542 = vld [vmem:[%s2315 + $0x710] sm:$0xff]
  %v2543 = vld [vmem:[%s2315 + $0x718] sm:$0xff]
  %v2544 = vld [vmem:[%s2315 + $0x720] sm:$0xff]
  %v2545 = vld [vmem:[%s2315 + $0x728] sm:$0xff]
  %v2546 = vld [vmem:[%s2315 + $0x730] sm:$0xff]
  %v2547 = vld [vmem:[%s2315 + $0x738] sm:$0xff]
  %v2548 = vld [vmem:[%s2315 + $0x740] sm:$0xff]
  %v2549 = vld [vmem:[%s2315 + $0x748] sm:$0xff]
  %v2550 = vld [vmem:[%s2315 + $0x750] sm:$0xff]
  %v2551 = vld [vmem:[%s2315 + $0x758] sm:$0xff]
  %v2552 = vld [vmem:[%s2315 + $0x760] sm:$0xff]
  %v2553 = vld [vmem:[%s2315 + $0x768] sm:$0xff]
  %v2554 = vld [vmem:[%s2315 + $0x770] sm:$0xff]
  %v2555 = vld [vmem:[%s2315 + $0x778] sm:$0xff]
  %v2556 = vld [vmem:[%s2315 + $0x780] sm:$0xff]
  %v2557 = vld [vmem:[%s2315 + $0x788] sm:$0xff]
  %v2558 = vld [vmem:[%s2315 + $0x790] sm:$0xff]
  %v2559 = vld [vmem:[%s2315 + $0x798] sm:$0xff]
  %v2560 = vld [vmem:[%s2315 + $0x7a0] sm:$0xff]
  %v2561 = vld [vmem:[%s2315 + $0x7a8] sm:$0xff]
  %v2562 = vld [vmem:[%s2315 + $0x7b0] sm:$0xff]
  %v2563 = vld [vmem:[%s2315 + $0x7b8] sm:$0xff]
  %v2564 = vld [vmem:[%s2315 + $0x7c0] sm:$0xff]
  %v2565 = vld [vmem:[%s2315 + $0x7c8] sm:$0xff]
  %v2566 = vld [vmem:[%s2315 + $0x7d0] sm:$0xff]
  %v2567 = vld [vmem:[%s2315 + $0x7d8] sm:$0xff]
  %v2568 = vld [vmem:[%s2315 + $0x7e0] sm:$0xff]
  %v2569 = vld [vmem:[%s2315 + $0x7e8] sm:$0xff]
  %v2570 = vld [vmem:[%s2315 + $0x7f0] sm:$0xff]
  %v2571 = vld [vmem:[%s2315 + $0x7f8] sm:$0xff]
  %s2572 = scalar_lea.vmem %s1, 128
  %v2573 = vld [vmem:[%s2572] sm:$0x1]
  %v2574 = vld [vmem:[%s2572 + $0x1] sm:$0x1]
  %v2575 = vld [vmem:[%s2572 + $0x2] sm:$0x1]
  %v2576 = vld [vmem:[%s2572 + $0x3] sm:$0x1]
  %v2577 = vld [vmem:[%s2572 + $0x4] sm:$0x1]
  %v2578 = vld [vmem:[%s2572 + $0x5] sm:$0x1]
  %v2579 = vld [vmem:[%s2572 + $0x6] sm:$0x1]
  %v2580 = vld [vmem:[%s2572 + $0x7] sm:$0x1]
  %v2581 = vld [vmem:[%s2572 + $0x8] sm:$0x1]
  %v2582 = vld [vmem:[%s2572 + $0x9] sm:$0x1]
  %v2583 = vld [vmem:[%s2572 + $0xa] sm:$0x1]
  %v2584 = vld [vmem:[%s2572 + $0xb] sm:$0x1]
  %v2585 = vld [vmem:[%s2572 + $0xc] sm:$0x1]
  %v2586 = vld [vmem:[%s2572 + $0xd] sm:$0x1]
  %v2587 = vld [vmem:[%s2572 + $0xe] sm:$0x1]
  %v2588 = vld [vmem:[%s2572 + $0xf] sm:$0x1]
  %v2589 = vld [vmem:[%s2572 + $0x10] sm:$0x1]
  %v2590 = vld [vmem:[%s2572 + $0x11] sm:$0x1]
  %v2591 = vld [vmem:[%s2572 + $0x12] sm:$0x1]
  %v2592 = vld [vmem:[%s2572 + $0x13] sm:$0x1]
  %v2593 = vld [vmem:[%s2572 + $0x14] sm:$0x1]
  %v2594 = vld [vmem:[%s2572 + $0x15] sm:$0x1]
  %v2595 = vld [vmem:[%s2572 + $0x16] sm:$0x1]
  %v2596 = vld [vmem:[%s2572 + $0x17] sm:$0x1]
  %v2597 = vld [vmem:[%s2572 + $0x18] sm:$0x1]
  %v2598 = vld [vmem:[%s2572 + $0x19] sm:$0x1]
  %v2599 = vld [vmem:[%s2572 + $0x1a] sm:$0x1]
  %v2600 = vld [vmem:[%s2572 + $0x1b] sm:$0x1]
  %v2601 = vld [vmem:[%s2572 + $0x1c] sm:$0x1]
  %v2602 = vld [vmem:[%s2572 + $0x1d] sm:$0x1]
  %v2603 = vld [vmem:[%s2572 + $0x1e] sm:$0x1]
  %v2604 = vld [vmem:[%s2572 + $0x1f] sm:$0x1]
  %v2605 = vld [vmem:[%s2572 + $0x20] sm:$0x1]
  %v2606 = vld [vmem:[%s2572 + $0x21] sm:$0x1]
  %v2607 = vld [vmem:[%s2572 + $0x22] sm:$0x1]
  %v2608 = vld [vmem:[%s2572 + $0x23] sm:$0x1]
  %v2609 = vld [vmem:[%s2572 + $0x24] sm:$0x1]
  %v2610 = vld [vmem:[%s2572 + $0x25] sm:$0x1]
  %v2611 = vld [vmem:[%s2572 + $0x26] sm:$0x1]
  %v2612 = vld [vmem:[%s2572 + $0x27] sm:$0x1]
  %v2613 = vld [vmem:[%s2572 + $0x28] sm:$0x1]
  %v2614 = vld [vmem:[%s2572 + $0x29] sm:$0x1]
  %v2615 = vld [vmem:[%s2572 + $0x2a] sm:$0x1]
  %v2616 = vld [vmem:[%s2572 + $0x2b] sm:$0x1]
  %v2617 = vld [vmem:[%s2572 + $0x2c] sm:$0x1]
  %v2618 = vld [vmem:[%s2572 + $0x2d] sm:$0x1]
  %v2619 = vld [vmem:[%s2572 + $0x2e] sm:$0x1]
  %v2620 = vld [vmem:[%s2572 + $0x2f] sm:$0x1]
  %v2621 = vld [vmem:[%s2572 + $0x30] sm:$0x1]
  %v2622 = vld [vmem:[%s2572 + $0x31] sm:$0x1]
  %v2623 = vld [vmem:[%s2572 + $0x32] sm:$0x1]
  %v2624 = vld [vmem:[%s2572 + $0x33] sm:$0x1]
  %v2625 = vld [vmem:[%s2572 + $0x34] sm:$0x1]
  %v2626 = vld [vmem:[%s2572 + $0x35] sm:$0x1]
  %v2627 = vld [vmem:[%s2572 + $0x36] sm:$0x1]
  %v2628 = vld [vmem:[%s2572 + $0x37] sm:$0x1]
  %v2629 = vld [vmem:[%s2572 + $0x38] sm:$0x1]
  %v2630 = vld [vmem:[%s2572 + $0x39] sm:$0x1]
  %v2631 = vld [vmem:[%s2572 + $0x3a] sm:$0x1]
  %v2632 = vld [vmem:[%s2572 + $0x3b] sm:$0x1]
  %v2633 = vld [vmem:[%s2572 + $0x3c] sm:$0x1]
  %v2634 = vld [vmem:[%s2572 + $0x3d] sm:$0x1]
  %v2635 = vld [vmem:[%s2572 + $0x3e] sm:$0x1]
  %v2636 = vld [vmem:[%s2572 + $0x3f] sm:$0x1]
  %v2637 = vld [vmem:[%s2572 + $0x40] sm:$0x1]
  %v2638 = vld [vmem:[%s2572 + $0x41] sm:$0x1]
  %v2639 = vld [vmem:[%s2572 + $0x42] sm:$0x1]
  %v2640 = vld [vmem:[%s2572 + $0x43] sm:$0x1]
  %v2641 = vld [vmem:[%s2572 + $0x44] sm:$0x1]
  %v2642 = vld [vmem:[%s2572 + $0x45] sm:$0x1]
  %v2643 = vld [vmem:[%s2572 + $0x46] sm:$0x1]
  %v2644 = vld [vmem:[%s2572 + $0x47] sm:$0x1]
  %v2645 = vld [vmem:[%s2572 + $0x48] sm:$0x1]
  %v2646 = vld [vmem:[%s2572 + $0x49] sm:$0x1]
  %v2647 = vld [vmem:[%s2572 + $0x4a] sm:$0x1]
  %v2648 = vld [vmem:[%s2572 + $0x4b] sm:$0x1]
  %v2649 = vld [vmem:[%s2572 + $0x4c] sm:$0x1]
  %v2650 = vld [vmem:[%s2572 + $0x4d] sm:$0x1]
  %v2651 = vld [vmem:[%s2572 + $0x4e] sm:$0x1]
  %v2652 = vld [vmem:[%s2572 + $0x4f] sm:$0x1]
  %v2653 = vld [vmem:[%s2572 + $0x50] sm:$0x1]
  %v2654 = vld [vmem:[%s2572 + $0x51] sm:$0x1]
  %v2655 = vld [vmem:[%s2572 + $0x52] sm:$0x1]
  %v2656 = vld [vmem:[%s2572 + $0x53] sm:$0x1]
  %v2657 = vld [vmem:[%s2572 + $0x54] sm:$0x1]
  %v2658 = vld [vmem:[%s2572 + $0x55] sm:$0x1]
  %v2659 = vld [vmem:[%s2572 + $0x56] sm:$0x1]
  %v2660 = vld [vmem:[%s2572 + $0x57] sm:$0x1]
  %v2661 = vld [vmem:[%s2572 + $0x58] sm:$0x1]
  %v2662 = vld [vmem:[%s2572 + $0x59] sm:$0x1]
  %v2663 = vld [vmem:[%s2572 + $0x5a] sm:$0x1]
  %v2664 = vld [vmem:[%s2572 + $0x5b] sm:$0x1]
  %v2665 = vld [vmem:[%s2572 + $0x5c] sm:$0x1]
  %v2666 = vld [vmem:[%s2572 + $0x5d] sm:$0x1]
  %v2667 = vld [vmem:[%s2572 + $0x5e] sm:$0x1]
  %v2668 = vld [vmem:[%s2572 + $0x5f] sm:$0x1]
  %v2669 = vld [vmem:[%s2572 + $0x60] sm:$0x1]
  %v2670 = vld [vmem:[%s2572 + $0x61] sm:$0x1]
  %v2671 = vld [vmem:[%s2572 + $0x62] sm:$0x1]
  %v2672 = vld [vmem:[%s2572 + $0x63] sm:$0x1]
  %v2673 = vld [vmem:[%s2572 + $0x64] sm:$0x1]
  %v2674 = vld [vmem:[%s2572 + $0x65] sm:$0x1]
  %v2675 = vld [vmem:[%s2572 + $0x66] sm:$0x1]
  %v2676 = vld [vmem:[%s2572 + $0x67] sm:$0x1]
  %v2677 = vld [vmem:[%s2572 + $0x68] sm:$0x1]
  %v2678 = vld [vmem:[%s2572 + $0x69] sm:$0x1]
  %v2679 = vld [vmem:[%s2572 + $0x6a] sm:$0x1]
  %v2680 = vld [vmem:[%s2572 + $0x6b] sm:$0x1]
  %v2681 = vld [vmem:[%s2572 + $0x6c] sm:$0x1]
  %v2682 = vld [vmem:[%s2572 + $0x6d] sm:$0x1]
  %v2683 = vld [vmem:[%s2572 + $0x6e] sm:$0x1]
  %v2684 = vld [vmem:[%s2572 + $0x6f] sm:$0x1]
  %v2685 = vld [vmem:[%s2572 + $0x70] sm:$0x1]
  %v2686 = vld [vmem:[%s2572 + $0x71] sm:$0x1]
  %v2687 = vld [vmem:[%s2572 + $0x72] sm:$0x1]
  %v2688 = vld [vmem:[%s2572 + $0x73] sm:$0x1]
  %v2689 = vld [vmem:[%s2572 + $0x74] sm:$0x1]
  %v2690 = vld [vmem:[%s2572 + $0x75] sm:$0x1]
  %v2691 = vld [vmem:[%s2572 + $0x76] sm:$0x1]
  %v2692 = vld [vmem:[%s2572 + $0x77] sm:$0x1]
  %v2693 = vld [vmem:[%s2572 + $0x78] sm:$0x1]
  %v2694 = vld [vmem:[%s2572 + $0x79] sm:$0x1]
  %v2695 = vld [vmem:[%s2572 + $0x7a] sm:$0x1]
  %v2696 = vld [vmem:[%s2572 + $0x7b] sm:$0x1]
  %v2697 = vld [vmem:[%s2572 + $0x7c] sm:$0x1]
  %v2698 = vld [vmem:[%s2572 + $0x7d] sm:$0x1]
  %v2699 = vld [vmem:[%s2572 + $0x7e] sm:$0x1]
  %v2700 = vld [vmem:[%s2572 + $0x7f] sm:$0x1]
  %2702 = vset.pattern.permute.xlu0 0
  %2703 = vperm.xlu0 %2702, %v2316
  %v2704 = vpop.permute.xlu0 %2703
  %2707 = vset.pattern.permute.xlu0 0
  %2708 = vperm.xlu0 %2707, %v2317
  %v2709 = vpop.permute.xlu0 %2708
  %2712 = vset.pattern.permute.xlu0 0
  %2713 = vperm.xlu0 %2712, %v2318
  %v2714 = vpop.permute.xlu0 %2713
  %2717 = vset.pattern.permute.xlu0 0
  %2718 = vperm.xlu0 %2717, %v2319
  %v2719 = vpop.permute.xlu0 %2718
  %2722 = vset.pattern.permute.xlu0 0
  %2723 = vperm.xlu0 %2722, %v2320
  %v2724 = vpop.permute.xlu0 %2723
  %2727 = vset.pattern.permute.xlu0 0
  %2728 = vperm.xlu0 %2727, %v2321
  %v2729 = vpop.permute.xlu0 %2728
  %2732 = vset.pattern.permute.xlu0 0
  %2733 = vperm.xlu0 %2732, %v2322
  %v2734 = vpop.permute.xlu0 %2733
  %2737 = vset.pattern.permute.xlu0 0
  %2738 = vperm.xlu0 %2737, %v2323
  %v2739 = vpop.permute.xlu0 %2738
  %2742 = vset.pattern.permute.xlu0 0
  %2743 = vperm.xlu0 %2742, %v2324
  %v2744 = vpop.permute.xlu0 %2743
  %2747 = vset.pattern.permute.xlu0 0
  %2748 = vperm.xlu0 %2747, %v2325
  %v2749 = vpop.permute.xlu0 %2748
  %2752 = vset.pattern.permute.xlu0 0
  %2753 = vperm.xlu0 %2752, %v2326
  %v2754 = vpop.permute.xlu0 %2753
  %2757 = vset.pattern.permute.xlu0 0
  %2758 = vperm.xlu0 %2757, %v2327
  %v2759 = vpop.permute.xlu0 %2758
  %2762 = vset.pattern.permute.xlu0 0
  %2763 = vperm.xlu0 %2762, %v2328
  %v2764 = vpop.permute.xlu0 %2763
  %2767 = vset.pattern.permute.xlu0 0
  %2768 = vperm.xlu0 %2767, %v2329
  %v2769 = vpop.permute.xlu0 %2768
  %2772 = vset.pattern.permute.xlu0 0
  %2773 = vperm.xlu0 %2772, %v2330
  %v2774 = vpop.permute.xlu0 %2773
  %2777 = vset.pattern.permute.xlu0 0
  %2778 = vperm.xlu0 %2777, %v2331
  %v2779 = vpop.permute.xlu0 %2778
  %2782 = vset.pattern.permute.xlu0 0
  %2783 = vperm.xlu0 %2782, %v2332
  %v2784 = vpop.permute.xlu0 %2783
  %2787 = vset.pattern.permute.xlu0 0
  %2788 = vperm.xlu0 %2787, %v2333
  %v2789 = vpop.permute.xlu0 %2788
  %2792 = vset.pattern.permute.xlu0 0
  %2793 = vperm.xlu0 %2792, %v2334
  %v2794 = vpop.permute.xlu0 %2793
  %2797 = vset.pattern.permute.xlu0 0
  %2798 = vperm.xlu0 %2797, %v2335
  %v2799 = vpop.permute.xlu0 %2798
  %2802 = vset.pattern.permute.xlu0 0
  %2803 = vperm.xlu0 %2802, %v2336
  %v2804 = vpop.permute.xlu0 %2803
  %2807 = vset.pattern.permute.xlu0 0
  %2808 = vperm.xlu0 %2807, %v2337
  %v2809 = vpop.permute.xlu0 %2808
  %2812 = vset.pattern.permute.xlu0 0
  %2813 = vperm.xlu0 %2812, %v2338
  %v2814 = vpop.permute.xlu0 %2813
  %2817 = vset.pattern.permute.xlu0 0
  %2818 = vperm.xlu0 %2817, %v2339
  %v2819 = vpop.permute.xlu0 %2818
  %2822 = vset.pattern.permute.xlu0 0
  %2823 = vperm.xlu0 %2822, %v2340
  %v2824 = vpop.permute.xlu0 %2823
  %2827 = vset.pattern.permute.xlu0 0
  %2828 = vperm.xlu0 %2827, %v2341
  %v2829 = vpop.permute.xlu0 %2828
  %2832 = vset.pattern.permute.xlu0 0
  %2833 = vperm.xlu0 %2832, %v2342
  %v2834 = vpop.permute.xlu0 %2833
  %2837 = vset.pattern.permute.xlu0 0
  %2838 = vperm.xlu0 %2837, %v2343
  %v2839 = vpop.permute.xlu0 %2838
  %2842 = vset.pattern.permute.xlu0 0
  %2843 = vperm.xlu0 %2842, %v2344
  %v2844 = vpop.permute.xlu0 %2843
  %2847 = vset.pattern.permute.xlu0 0
  %2848 = vperm.xlu0 %2847, %v2345
  %v2849 = vpop.permute.xlu0 %2848
  %2852 = vset.pattern.permute.xlu0 0
  %2853 = vperm.xlu0 %2852, %v2346
  %v2854 = vpop.permute.xlu0 %2853
  %2857 = vset.pattern.permute.xlu0 0
  %2858 = vperm.xlu0 %2857, %v2347
  %v2859 = vpop.permute.xlu0 %2858
  %2862 = vset.pattern.permute.xlu0 0
  %2863 = vperm.xlu0 %2862, %v2348
  %v2864 = vpop.permute.xlu0 %2863
  %2867 = vset.pattern.permute.xlu0 0
  %2868 = vperm.xlu0 %2867, %v2349
  %v2869 = vpop.permute.xlu0 %2868
  %2872 = vset.pattern.permute.xlu0 0
  %2873 = vperm.xlu0 %2872, %v2350
  %v2874 = vpop.permute.xlu0 %2873
  %2877 = vset.pattern.permute.xlu0 0
  %2878 = vperm.xlu0 %2877, %v2351
  %v2879 = vpop.permute.xlu0 %2878
  %2882 = vset.pattern.permute.xlu0 0
  %2883 = vperm.xlu0 %2882, %v2352
  %v2884 = vpop.permute.xlu0 %2883
  %2887 = vset.pattern.permute.xlu0 0
  %2888 = vperm.xlu0 %2887, %v2353
  %v2889 = vpop.permute.xlu0 %2888
  %2892 = vset.pattern.permute.xlu0 0
  %2893 = vperm.xlu0 %2892, %v2354
  %v2894 = vpop.permute.xlu0 %2893
  %2897 = vset.pattern.permute.xlu0 0
  %2898 = vperm.xlu0 %2897, %v2355
  %v2899 = vpop.permute.xlu0 %2898
  %2902 = vset.pattern.permute.xlu0 0
  %2903 = vperm.xlu0 %2902, %v2356
  %v2904 = vpop.permute.xlu0 %2903
  %2907 = vset.pattern.permute.xlu0 0
  %2908 = vperm.xlu0 %2907, %v2357
  %v2909 = vpop.permute.xlu0 %2908
  %2912 = vset.pattern.permute.xlu0 0
  %2913 = vperm.xlu0 %2912, %v2358
  %v2914 = vpop.permute.xlu0 %2913
  %2917 = vset.pattern.permute.xlu0 0
  %2918 = vperm.xlu0 %2917, %v2359
  %v2919 = vpop.permute.xlu0 %2918
  %2922 = vset.pattern.permute.xlu0 0
  %2923 = vperm.xlu0 %2922, %v2360
  %v2924 = vpop.permute.xlu0 %2923
  %2927 = vset.pattern.permute.xlu0 0
  %2928 = vperm.xlu0 %2927, %v2361
  %v2929 = vpop.permute.xlu0 %2928
  %2932 = vset.pattern.permute.xlu0 0
  %2933 = vperm.xlu0 %2932, %v2362
  %v2934 = vpop.permute.xlu0 %2933
  %2937 = vset.pattern.permute.xlu0 0
  %2938 = vperm.xlu0 %2937, %v2363
  %v2939 = vpop.permute.xlu0 %2938
  %2942 = vset.pattern.permute.xlu0 0
  %2943 = vperm.xlu0 %2942, %v2364
  %v2944 = vpop.permute.xlu0 %2943
  %2947 = vset.pattern.permute.xlu0 0
  %2948 = vperm.xlu0 %2947, %v2365
  %v2949 = vpop.permute.xlu0 %2948
  %2952 = vset.pattern.permute.xlu0 0
  %2953 = vperm.xlu0 %2952, %v2366
  %v2954 = vpop.permute.xlu0 %2953
  %2957 = vset.pattern.permute.xlu0 0
  %2958 = vperm.xlu0 %2957, %v2367
  %v2959 = vpop.permute.xlu0 %2958
  %2962 = vset.pattern.permute.xlu0 0
  %2963 = vperm.xlu0 %2962, %v2368
  %v2964 = vpop.permute.xlu0 %2963
  %2967 = vset.pattern.permute.xlu0 0
  %2968 = vperm.xlu0 %2967, %v2369
  %v2969 = vpop.permute.xlu0 %2968
  %2972 = vset.pattern.permute.xlu0 0
  %2973 = vperm.xlu0 %2972, %v2370
  %v2974 = vpop.permute.xlu0 %2973
  %2977 = vset.pattern.permute.xlu0 0
  %2978 = vperm.xlu0 %2977, %v2371
  %v2979 = vpop.permute.xlu0 %2978
  %2982 = vset.pattern.permute.xlu0 0
  %2983 = vperm.xlu0 %2982, %v2372
  %v2984 = vpop.permute.xlu0 %2983
  %2987 = vset.pattern.permute.xlu0 0
  %2988 = vperm.xlu0 %2987, %v2373
  %v2989 = vpop.permute.xlu0 %2988
  %2992 = vset.pattern.permute.xlu0 0
  %2993 = vperm.xlu0 %2992, %v2374
  %v2994 = vpop.permute.xlu0 %2993
  %2997 = vset.pattern.permute.xlu0 0
  %2998 = vperm.xlu0 %2997, %v2375
  %v2999 = vpop.permute.xlu0 %2998
  %3002 = vset.pattern.permute.xlu0 0
  %3003 = vperm.xlu0 %3002, %v2376
  %v3004 = vpop.permute.xlu0 %3003
  %3007 = vset.pattern.permute.xlu0 0
  %3008 = vperm.xlu0 %3007, %v2377
  %v3009 = vpop.permute.xlu0 %3008
  %3012 = vset.pattern.permute.xlu0 0
  %3013 = vperm.xlu0 %3012, %v2378
  %v3014 = vpop.permute.xlu0 %3013
  %3017 = vset.pattern.permute.xlu0 0
  %3018 = vperm.xlu0 %3017, %v2379
  %v3019 = vpop.permute.xlu0 %3018
  %3022 = vset.pattern.permute.xlu0 0
  %3023 = vperm.xlu0 %3022, %v2380
  %v3024 = vpop.permute.xlu0 %3023
  %3027 = vset.pattern.permute.xlu0 0
  %3028 = vperm.xlu0 %3027, %v2381
  %v3029 = vpop.permute.xlu0 %3028
  %3032 = vset.pattern.permute.xlu0 0
  %3033 = vperm.xlu0 %3032, %v2382
  %v3034 = vpop.permute.xlu0 %3033
  %3037 = vset.pattern.permute.xlu0 0
  %3038 = vperm.xlu0 %3037, %v2383
  %v3039 = vpop.permute.xlu0 %3038
  %3042 = vset.pattern.permute.xlu0 0
  %3043 = vperm.xlu0 %3042, %v2384
  %v3044 = vpop.permute.xlu0 %3043
  %3047 = vset.pattern.permute.xlu0 0
  %3048 = vperm.xlu0 %3047, %v2385
  %v3049 = vpop.permute.xlu0 %3048
  %3052 = vset.pattern.permute.xlu0 0
  %3053 = vperm.xlu0 %3052, %v2386
  %v3054 = vpop.permute.xlu0 %3053
  %3057 = vset.pattern.permute.xlu0 0
  %3058 = vperm.xlu0 %3057, %v2387
  %v3059 = vpop.permute.xlu0 %3058
  %3062 = vset.pattern.permute.xlu0 0
  %3063 = vperm.xlu0 %3062, %v2388
  %v3064 = vpop.permute.xlu0 %3063
  %3067 = vset.pattern.permute.xlu0 0
  %3068 = vperm.xlu0 %3067, %v2389
  %v3069 = vpop.permute.xlu0 %3068
  %3072 = vset.pattern.permute.xlu0 0
  %3073 = vperm.xlu0 %3072, %v2390
  %v3074 = vpop.permute.xlu0 %3073
  %3077 = vset.pattern.permute.xlu0 0
  %3078 = vperm.xlu0 %3077, %v2391
  %v3079 = vpop.permute.xlu0 %3078
  %3082 = vset.pattern.permute.xlu0 0
  %3083 = vperm.xlu0 %3082, %v2392
  %v3084 = vpop.permute.xlu0 %3083
  %3087 = vset.pattern.permute.xlu0 0
  %3088 = vperm.xlu0 %3087, %v2393
  %v3089 = vpop.permute.xlu0 %3088
  %3092 = vset.pattern.permute.xlu0 0
  %3093 = vperm.xlu0 %3092, %v2394
  %v3094 = vpop.permute.xlu0 %3093
  %3097 = vset.pattern.permute.xlu0 0
  %3098 = vperm.xlu0 %3097, %v2395
  %v3099 = vpop.permute.xlu0 %3098
  %3102 = vset.pattern.permute.xlu0 0
  %3103 = vperm.xlu0 %3102, %v2396
  %v3104 = vpop.permute.xlu0 %3103
  %3107 = vset.pattern.permute.xlu0 0
  %3108 = vperm.xlu0 %3107, %v2397
  %v3109 = vpop.permute.xlu0 %3108
  %3112 = vset.pattern.permute.xlu0 0
  %3113 = vperm.xlu0 %3112, %v2398
  %v3114 = vpop.permute.xlu0 %3113
  %3117 = vset.pattern.permute.xlu0 0
  %3118 = vperm.xlu0 %3117, %v2399
  %v3119 = vpop.permute.xlu0 %3118
  %3122 = vset.pattern.permute.xlu0 0
  %3123 = vperm.xlu0 %3122, %v2400
  %v3124 = vpop.permute.xlu0 %3123
  %3127 = vset.pattern.permute.xlu0 0
  %3128 = vperm.xlu0 %3127, %v2401
  %v3129 = vpop.permute.xlu0 %3128
  %3132 = vset.pattern.permute.xlu0 0
  %3133 = vperm.xlu0 %3132, %v2402
  %v3134 = vpop.permute.xlu0 %3133
  %3137 = vset.pattern.permute.xlu0 0
  %3138 = vperm.xlu0 %3137, %v2403
  %v3139 = vpop.permute.xlu0 %3138
  %3142 = vset.pattern.permute.xlu0 0
  %3143 = vperm.xlu0 %3142, %v2404
  %v3144 = vpop.permute.xlu0 %3143
  %3147 = vset.pattern.permute.xlu0 0
  %3148 = vperm.xlu0 %3147, %v2405
  %v3149 = vpop.permute.xlu0 %3148
  %3152 = vset.pattern.permute.xlu0 0
  %3153 = vperm.xlu0 %3152, %v2406
  %v3154 = vpop.permute.xlu0 %3153
  %3157 = vset.pattern.permute.xlu0 0
  %3158 = vperm.xlu0 %3157, %v2407
  %v3159 = vpop.permute.xlu0 %3158
  %3162 = vset.pattern.permute.xlu0 0
  %3163 = vperm.xlu0 %3162, %v2408
  %v3164 = vpop.permute.xlu0 %3163
  %3167 = vset.pattern.permute.xlu0 0
  %3168 = vperm.xlu0 %3167, %v2409
  %v3169 = vpop.permute.xlu0 %3168
  %3172 = vset.pattern.permute.xlu0 0
  %3173 = vperm.xlu0 %3172, %v2410
  %v3174 = vpop.permute.xlu0 %3173
  %3177 = vset.pattern.permute.xlu0 0
  %3178 = vperm.xlu0 %3177, %v2411
  %v3179 = vpop.permute.xlu0 %3178
  %3182 = vset.pattern.permute.xlu0 0
  %3183 = vperm.xlu0 %3182, %v2412
  %v3184 = vpop.permute.xlu0 %3183
  %3187 = vset.pattern.permute.xlu0 0
  %3188 = vperm.xlu0 %3187, %v2413
  %v3189 = vpop.permute.xlu0 %3188
  %3192 = vset.pattern.permute.xlu0 0
  %3193 = vperm.xlu0 %3192, %v2414
  %v3194 = vpop.permute.xlu0 %3193
  %3197 = vset.pattern.permute.xlu0 0
  %3198 = vperm.xlu0 %3197, %v2415
  %v3199 = vpop.permute.xlu0 %3198
  %3202 = vset.pattern.permute.xlu0 0
  %3203 = vperm.xlu0 %3202, %v2416
  %v3204 = vpop.permute.xlu0 %3203
  %3207 = vset.pattern.permute.xlu0 0
  %3208 = vperm.xlu0 %3207, %v2417
  %v3209 = vpop.permute.xlu0 %3208
  %3212 = vset.pattern.permute.xlu0 0
  %3213 = vperm.xlu0 %3212, %v2418
  %v3214 = vpop.permute.xlu0 %3213
  %3217 = vset.pattern.permute.xlu0 0
  %3218 = vperm.xlu0 %3217, %v2419
  %v3219 = vpop.permute.xlu0 %3218
  %3222 = vset.pattern.permute.xlu0 0
  %3223 = vperm.xlu0 %3222, %v2420
  %v3224 = vpop.permute.xlu0 %3223
  %3227 = vset.pattern.permute.xlu0 0
  %3228 = vperm.xlu0 %3227, %v2421
  %v3229 = vpop.permute.xlu0 %3228
  %3232 = vset.pattern.permute.xlu0 0
  %3233 = vperm.xlu0 %3232, %v2422
  %v3234 = vpop.permute.xlu0 %3233
  %3237 = vset.pattern.permute.xlu0 0
  %3238 = vperm.xlu0 %3237, %v2423
  %v3239 = vpop.permute.xlu0 %3238
  %3242 = vset.pattern.permute.xlu0 0
  %3243 = vperm.xlu0 %3242, %v2424
  %v3244 = vpop.permute.xlu0 %3243
  %3247 = vset.pattern.permute.xlu0 0
  %3248 = vperm.xlu0 %3247, %v2425
  %v3249 = vpop.permute.xlu0 %3248
  %3252 = vset.pattern.permute.xlu0 0
  %3253 = vperm.xlu0 %3252, %v2426
  %v3254 = vpop.permute.xlu0 %3253
  %3257 = vset.pattern.permute.xlu0 0
  %3258 = vperm.xlu0 %3257, %v2427
  %v3259 = vpop.permute.xlu0 %3258
  %3262 = vset.pattern.permute.xlu0 0
  %3263 = vperm.xlu0 %3262, %v2428
  %v3264 = vpop.permute.xlu0 %3263
  %3267 = vset.pattern.permute.xlu0 0
  %3268 = vperm.xlu0 %3267, %v2429
  %v3269 = vpop.permute.xlu0 %3268
  %3272 = vset.pattern.permute.xlu0 0
  %3273 = vperm.xlu0 %3272, %v2430
  %v3274 = vpop.permute.xlu0 %3273
  %3277 = vset.pattern.permute.xlu0 0
  %3278 = vperm.xlu0 %3277, %v2431
  %v3279 = vpop.permute.xlu0 %3278
  %3282 = vset.pattern.permute.xlu0 0
  %3283 = vperm.xlu0 %3282, %v2432
  %v3284 = vpop.permute.xlu0 %3283
  %3287 = vset.pattern.permute.xlu0 0
  %3288 = vperm.xlu0 %3287, %v2433
  %v3289 = vpop.permute.xlu0 %3288
  %3292 = vset.pattern.permute.xlu0 0
  %3293 = vperm.xlu0 %3292, %v2434
  %v3294 = vpop.permute.xlu0 %3293
  %3297 = vset.pattern.permute.xlu0 0
  %3298 = vperm.xlu0 %3297, %v2435
  %v3299 = vpop.permute.xlu0 %3298
  %3302 = vset.pattern.permute.xlu0 0
  %3303 = vperm.xlu0 %3302, %v2436
  %v3304 = vpop.permute.xlu0 %3303
  %3307 = vset.pattern.permute.xlu0 0
  %3308 = vperm.xlu0 %3307, %v2437
  %v3309 = vpop.permute.xlu0 %3308
  %3312 = vset.pattern.permute.xlu0 0
  %3313 = vperm.xlu0 %3312, %v2438
  %v3314 = vpop.permute.xlu0 %3313
  %3317 = vset.pattern.permute.xlu0 0
  %3318 = vperm.xlu0 %3317, %v2439
  %v3319 = vpop.permute.xlu0 %3318
  %3322 = vset.pattern.permute.xlu0 0
  %3323 = vperm.xlu0 %3322, %v2440
  %v3324 = vpop.permute.xlu0 %3323
  %3327 = vset.pattern.permute.xlu0 0
  %3328 = vperm.xlu0 %3327, %v2441
  %v3329 = vpop.permute.xlu0 %3328
  %3332 = vset.pattern.permute.xlu0 0
  %3333 = vperm.xlu0 %3332, %v2442
  %v3334 = vpop.permute.xlu0 %3333
  %3337 = vset.pattern.permute.xlu0 0
  %3338 = vperm.xlu0 %3337, %v2443
  %v3339 = vpop.permute.xlu0 %3338
  %3342 = vset.pattern.permute.xlu0 0
  %3343 = vperm.xlu0 %3342, %v2444
  %v3344 = vpop.permute.xlu0 %3343
  %3347 = vset.pattern.permute.xlu0 0
  %3348 = vperm.xlu0 %3347, %v2445
  %v3349 = vpop.permute.xlu0 %3348
  %3352 = vset.pattern.permute.xlu0 0
  %3353 = vperm.xlu0 %3352, %v2446
  %v3354 = vpop.permute.xlu0 %3353
  %3357 = vset.pattern.permute.xlu0 0
  %3358 = vperm.xlu0 %3357, %v2447
  %v3359 = vpop.permute.xlu0 %3358
  %3362 = vset.pattern.permute.xlu0 0
  %3363 = vperm.xlu0 %3362, %v2448
  %v3364 = vpop.permute.xlu0 %3363
  %3367 = vset.pattern.permute.xlu0 0
  %3368 = vperm.xlu0 %3367, %v2449
  %v3369 = vpop.permute.xlu0 %3368
  %3372 = vset.pattern.permute.xlu0 0
  %3373 = vperm.xlu0 %3372, %v2450
  %v3374 = vpop.permute.xlu0 %3373
  %3377 = vset.pattern.permute.xlu0 0
  %3378 = vperm.xlu0 %3377, %v2451
  %v3379 = vpop.permute.xlu0 %3378
  %3382 = vset.pattern.permute.xlu0 0
  %3383 = vperm.xlu0 %3382, %v2452
  %v3384 = vpop.permute.xlu0 %3383
  %3387 = vset.pattern.permute.xlu0 0
  %3388 = vperm.xlu0 %3387, %v2453
  %v3389 = vpop.permute.xlu0 %3388
  %3392 = vset.pattern.permute.xlu0 0
  %3393 = vperm.xlu0 %3392, %v2454
  %v3394 = vpop.permute.xlu0 %3393
  %3397 = vset.pattern.permute.xlu0 0
  %3398 = vperm.xlu0 %3397, %v2455
  %v3399 = vpop.permute.xlu0 %3398
  %3402 = vset.pattern.permute.xlu0 0
  %3403 = vperm.xlu0 %3402, %v2456
  %v3404 = vpop.permute.xlu0 %3403
  %3407 = vset.pattern.permute.xlu0 0
  %3408 = vperm.xlu0 %3407, %v2457
  %v3409 = vpop.permute.xlu0 %3408
  %3412 = vset.pattern.permute.xlu0 0
  %3413 = vperm.xlu0 %3412, %v2458
  %v3414 = vpop.permute.xlu0 %3413
  %3417 = vset.pattern.permute.xlu0 0
  %3418 = vperm.xlu0 %3417, %v2459
  %v3419 = vpop.permute.xlu0 %3418
  %3422 = vset.pattern.permute.xlu0 0
  %3423 = vperm.xlu0 %3422, %v2460
  %v3424 = vpop.permute.xlu0 %3423
  %3427 = vset.pattern.permute.xlu0 0
  %3428 = vperm.xlu0 %3427, %v2461
  %v3429 = vpop.permute.xlu0 %3428
  %3432 = vset.pattern.permute.xlu0 0
  %3433 = vperm.xlu0 %3432, %v2462
  %v3434 = vpop.permute.xlu0 %3433
  %3437 = vset.pattern.permute.xlu0 0
  %3438 = vperm.xlu0 %3437, %v2463
  %v3439 = vpop.permute.xlu0 %3438
  %3442 = vset.pattern.permute.xlu0 0
  %3443 = vperm.xlu0 %3442, %v2464
  %v3444 = vpop.permute.xlu0 %3443
  %3447 = vset.pattern.permute.xlu0 0
  %3448 = vperm.xlu0 %3447, %v2465
  %v3449 = vpop.permute.xlu0 %3448
  %3452 = vset.pattern.permute.xlu0 0
  %3453 = vperm.xlu0 %3452, %v2466
  %v3454 = vpop.permute.xlu0 %3453
  %3457 = vset.pattern.permute.xlu0 0
  %3458 = vperm.xlu0 %3457, %v2467
  %v3459 = vpop.permute.xlu0 %3458
  %3462 = vset.pattern.permute.xlu0 0
  %3463 = vperm.xlu0 %3462, %v2468
  %v3464 = vpop.permute.xlu0 %3463
  %3467 = vset.pattern.permute.xlu0 0
  %3468 = vperm.xlu0 %3467, %v2469
  %v3469 = vpop.permute.xlu0 %3468
  %3472 = vset.pattern.permute.xlu0 0
  %3473 = vperm.xlu0 %3472, %v2470
  %v3474 = vpop.permute.xlu0 %3473
  %3477 = vset.pattern.permute.xlu0 0
  %3478 = vperm.xlu0 %3477, %v2471
  %v3479 = vpop.permute.xlu0 %3478
  %3482 = vset.pattern.permute.xlu0 0
  %3483 = vperm.xlu0 %3482, %v2472
  %v3484 = vpop.permute.xlu0 %3483
  %3487 = vset.pattern.permute.xlu0 0
  %3488 = vperm.xlu0 %3487, %v2473
  %v3489 = vpop.permute.xlu0 %3488
  %3492 = vset.pattern.permute.xlu0 0
  %3493 = vperm.xlu0 %3492, %v2474
  %v3494 = vpop.permute.xlu0 %3493
  %3497 = vset.pattern.permute.xlu0 0
  %3498 = vperm.xlu0 %3497, %v2475
  %v3499 = vpop.permute.xlu0 %3498
  %3502 = vset.pattern.permute.xlu0 0
  %3503 = vperm.xlu0 %3502, %v2476
  %v3504 = vpop.permute.xlu0 %3503
  %3507 = vset.pattern.permute.xlu0 0
  %3508 = vperm.xlu0 %3507, %v2477
  %v3509 = vpop.permute.xlu0 %3508
  %3512 = vset.pattern.permute.xlu0 0
  %3513 = vperm.xlu0 %3512, %v2478
  %v3514 = vpop.permute.xlu0 %3513
  %3517 = vset.pattern.permute.xlu0 0
  %3518 = vperm.xlu0 %3517, %v2479
  %v3519 = vpop.permute.xlu0 %3518
  %3522 = vset.pattern.permute.xlu0 0
  %3523 = vperm.xlu0 %3522, %v2480
  %v3524 = vpop.permute.xlu0 %3523
  %3527 = vset.pattern.permute.xlu0 0
  %3528 = vperm.xlu0 %3527, %v2481
  %v3529 = vpop.permute.xlu0 %3528
  %3532 = vset.pattern.permute.xlu0 0
  %3533 = vperm.xlu0 %3532, %v2482
  %v3534 = vpop.permute.xlu0 %3533
  %3537 = vset.pattern.permute.xlu0 0
  %3538 = vperm.xlu0 %3537, %v2483
  %v3539 = vpop.permute.xlu0 %3538
  %3542 = vset.pattern.permute.xlu0 0
  %3543 = vperm.xlu0 %3542, %v2484
  %v3544 = vpop.permute.xlu0 %3543
  %3547 = vset.pattern.permute.xlu0 0
  %3548 = vperm.xlu0 %3547, %v2485
  %v3549 = vpop.permute.xlu0 %3548
  %3552 = vset.pattern.permute.xlu0 0
  %3553 = vperm.xlu0 %3552, %v2486
  %v3554 = vpop.permute.xlu0 %3553
  %3557 = vset.pattern.permute.xlu0 0
  %3558 = vperm.xlu0 %3557, %v2487
  %v3559 = vpop.permute.xlu0 %3558
  %3562 = vset.pattern.permute.xlu0 0
  %3563 = vperm.xlu0 %3562, %v2488
  %v3564 = vpop.permute.xlu0 %3563
  %3567 = vset.pattern.permute.xlu0 0
  %3568 = vperm.xlu0 %3567, %v2489
  %v3569 = vpop.permute.xlu0 %3568
  %3572 = vset.pattern.permute.xlu0 0
  %3573 = vperm.xlu0 %3572, %v2490
  %v3574 = vpop.permute.xlu0 %3573
  %3577 = vset.pattern.permute.xlu0 0
  %3578 = vperm.xlu0 %3577, %v2491
  %v3579 = vpop.permute.xlu0 %3578
  %3582 = vset.pattern.permute.xlu0 0
  %3583 = vperm.xlu0 %3582, %v2492
  %v3584 = vpop.permute.xlu0 %3583
  %3587 = vset.pattern.permute.xlu0 0
  %3588 = vperm.xlu0 %3587, %v2493
  %v3589 = vpop.permute.xlu0 %3588
  %3592 = vset.pattern.permute.xlu0 0
  %3593 = vperm.xlu0 %3592, %v2494
  %v3594 = vpop.permute.xlu0 %3593
  %3597 = vset.pattern.permute.xlu0 0
  %3598 = vperm.xlu0 %3597, %v2495
  %v3599 = vpop.permute.xlu0 %3598
  %3602 = vset.pattern.permute.xlu0 0
  %3603 = vperm.xlu0 %3602, %v2496
  %v3604 = vpop.permute.xlu0 %3603
  %3607 = vset.pattern.permute.xlu0 0
  %3608 = vperm.xlu0 %3607, %v2497
  %v3609 = vpop.permute.xlu0 %3608
  %3612 = vset.pattern.permute.xlu0 0
  %3613 = vperm.xlu0 %3612, %v2498
  %v3614 = vpop.permute.xlu0 %3613
  %3617 = vset.pattern.permute.xlu0 0
  %3618 = vperm.xlu0 %3617, %v2499
  %v3619 = vpop.permute.xlu0 %3618
  %3622 = vset.pattern.permute.xlu0 0
  %3623 = vperm.xlu0 %3622, %v2500
  %v3624 = vpop.permute.xlu0 %3623
  %3627 = vset.pattern.permute.xlu0 0
  %3628 = vperm.xlu0 %3627, %v2501
  %v3629 = vpop.permute.xlu0 %3628
  %3632 = vset.pattern.permute.xlu0 0
  %3633 = vperm.xlu0 %3632, %v2502
  %v3634 = vpop.permute.xlu0 %3633
  %3637 = vset.pattern.permute.xlu0 0
  %3638 = vperm.xlu0 %3637, %v2503
  %v3639 = vpop.permute.xlu0 %3638
  %3642 = vset.pattern.permute.xlu0 0
  %3643 = vperm.xlu0 %3642, %v2504
  %v3644 = vpop.permute.xlu0 %3643
  %3647 = vset.pattern.permute.xlu0 0
  %3648 = vperm.xlu0 %3647, %v2505
  %v3649 = vpop.permute.xlu0 %3648
  %3652 = vset.pattern.permute.xlu0 0
  %3653 = vperm.xlu0 %3652, %v2506
  %v3654 = vpop.permute.xlu0 %3653
  %3657 = vset.pattern.permute.xlu0 0
  %3658 = vperm.xlu0 %3657, %v2507
  %v3659 = vpop.permute.xlu0 %3658
  %3662 = vset.pattern.permute.xlu0 0
  %3663 = vperm.xlu0 %3662, %v2508
  %v3664 = vpop.permute.xlu0 %3663
  %3667 = vset.pattern.permute.xlu0 0
  %3668 = vperm.xlu0 %3667, %v2509
  %v3669 = vpop.permute.xlu0 %3668
  %3672 = vset.pattern.permute.xlu0 0
  %3673 = vperm.xlu0 %3672, %v2510
  %v3674 = vpop.permute.xlu0 %3673
  %3677 = vset.pattern.permute.xlu0 0
  %3678 = vperm.xlu0 %3677, %v2511
  %v3679 = vpop.permute.xlu0 %3678
  %3682 = vset.pattern.permute.xlu0 0
  %3683 = vperm.xlu0 %3682, %v2512
  %v3684 = vpop.permute.xlu0 %3683
  %3687 = vset.pattern.permute.xlu0 0
  %3688 = vperm.xlu0 %3687, %v2513
  %v3689 = vpop.permute.xlu0 %3688
  %3692 = vset.pattern.permute.xlu0 0
  %3693 = vperm.xlu0 %3692, %v2514
  %v3694 = vpop.permute.xlu0 %3693
  %3697 = vset.pattern.permute.xlu0 0
  %3698 = vperm.xlu0 %3697, %v2515
  %v3699 = vpop.permute.xlu0 %3698
  %3702 = vset.pattern.permute.xlu0 0
  %3703 = vperm.xlu0 %3702, %v2516
  %v3704 = vpop.permute.xlu0 %3703
  %3707 = vset.pattern.permute.xlu0 0
  %3708 = vperm.xlu0 %3707, %v2517
  %v3709 = vpop.permute.xlu0 %3708
  %3712 = vset.pattern.permute.xlu0 0
  %3713 = vperm.xlu0 %3712, %v2518
  %v3714 = vpop.permute.xlu0 %3713
  %3717 = vset.pattern.permute.xlu0 0
  %3718 = vperm.xlu0 %3717, %v2519
  %v3719 = vpop.permute.xlu0 %3718
  %3722 = vset.pattern.permute.xlu0 0
  %3723 = vperm.xlu0 %3722, %v2520
  %v3724 = vpop.permute.xlu0 %3723
  %3727 = vset.pattern.permute.xlu0 0
  %3728 = vperm.xlu0 %3727, %v2521
  %v3729 = vpop.permute.xlu0 %3728
  %3732 = vset.pattern.permute.xlu0 0
  %3733 = vperm.xlu0 %3732, %v2522
  %v3734 = vpop.permute.xlu0 %3733
  %3737 = vset.pattern.permute.xlu0 0
  %3738 = vperm.xlu0 %3737, %v2523
  %v3739 = vpop.permute.xlu0 %3738
  %3742 = vset.pattern.permute.xlu0 0
  %3743 = vperm.xlu0 %3742, %v2524
  %v3744 = vpop.permute.xlu0 %3743
  %3747 = vset.pattern.permute.xlu0 0
  %3748 = vperm.xlu0 %3747, %v2525
  %v3749 = vpop.permute.xlu0 %3748
  %3752 = vset.pattern.permute.xlu0 0
  %3753 = vperm.xlu0 %3752, %v2526
  %v3754 = vpop.permute.xlu0 %3753
  %3757 = vset.pattern.permute.xlu0 0
  %3758 = vperm.xlu0 %3757, %v2527
  %v3759 = vpop.permute.xlu0 %3758
  %3762 = vset.pattern.permute.xlu0 0
  %3763 = vperm.xlu0 %3762, %v2528
  %v3764 = vpop.permute.xlu0 %3763
  %3767 = vset.pattern.permute.xlu0 0
  %3768 = vperm.xlu0 %3767, %v2529
  %v3769 = vpop.permute.xlu0 %3768
  %3772 = vset.pattern.permute.xlu0 0
  %3773 = vperm.xlu0 %3772, %v2530
  %v3774 = vpop.permute.xlu0 %3773
  %3777 = vset.pattern.permute.xlu0 0
  %3778 = vperm.xlu0 %3777, %v2531
  %v3779 = vpop.permute.xlu0 %3778
  %3782 = vset.pattern.permute.xlu0 0
  %3783 = vperm.xlu0 %3782, %v2532
  %v3784 = vpop.permute.xlu0 %3783
  %3787 = vset.pattern.permute.xlu0 0
  %3788 = vperm.xlu0 %3787, %v2533
  %v3789 = vpop.permute.xlu0 %3788
  %3792 = vset.pattern.permute.xlu0 0
  %3793 = vperm.xlu0 %3792, %v2534
  %v3794 = vpop.permute.xlu0 %3793
  %3797 = vset.pattern.permute.xlu0 0
  %3798 = vperm.xlu0 %3797, %v2535
  %v3799 = vpop.permute.xlu0 %3798
  %3802 = vset.pattern.permute.xlu0 0
  %3803 = vperm.xlu0 %3802, %v2536
  %v3804 = vpop.permute.xlu0 %3803
  %3807 = vset.pattern.permute.xlu0 0
  %3808 = vperm.xlu0 %3807, %v2537
  %v3809 = vpop.permute.xlu0 %3808
  %3812 = vset.pattern.permute.xlu0 0
  %3813 = vperm.xlu0 %3812, %v2538
  %v3814 = vpop.permute.xlu0 %3813
  %3817 = vset.pattern.permute.xlu0 0
  %3818 = vperm.xlu0 %3817, %v2539
  %v3819 = vpop.permute.xlu0 %3818
  %3822 = vset.pattern.permute.xlu0 0
  %3823 = vperm.xlu0 %3822, %v2540
  %v3824 = vpop.permute.xlu0 %3823
  %3827 = vset.pattern.permute.xlu0 0
  %3828 = vperm.xlu0 %3827, %v2541
  %v3829 = vpop.permute.xlu0 %3828
  %3832 = vset.pattern.permute.xlu0 0
  %3833 = vperm.xlu0 %3832, %v2542
  %v3834 = vpop.permute.xlu0 %3833
  %3837 = vset.pattern.permute.xlu0 0
  %3838 = vperm.xlu0 %3837, %v2543
  %v3839 = vpop.permute.xlu0 %3838
  %3842 = vset.pattern.permute.xlu0 0
  %3843 = vperm.xlu0 %3842, %v2544
  %v3844 = vpop.permute.xlu0 %3843
  %3847 = vset.pattern.permute.xlu0 0
  %3848 = vperm.xlu0 %3847, %v2545
  %v3849 = vpop.permute.xlu0 %3848
  %3852 = vset.pattern.permute.xlu0 0
  %3853 = vperm.xlu0 %3852, %v2546
  %v3854 = vpop.permute.xlu0 %3853
  %3857 = vset.pattern.permute.xlu0 0
  %3858 = vperm.xlu0 %3857, %v2547
  %v3859 = vpop.permute.xlu0 %3858
  %3862 = vset.pattern.permute.xlu0 0
  %3863 = vperm.xlu0 %3862, %v2548
  %v3864 = vpop.permute.xlu0 %3863
  %3867 = vset.pattern.permute.xlu0 0
  %3868 = vperm.xlu0 %3867, %v2549
  %v3869 = vpop.permute.xlu0 %3868
  %3872 = vset.pattern.permute.xlu0 0
  %3873 = vperm.xlu0 %3872, %v2550
  %v3874 = vpop.permute.xlu0 %3873
  %3877 = vset.pattern.permute.xlu0 0
  %3878 = vperm.xlu0 %3877, %v2551
  %v3879 = vpop.permute.xlu0 %3878
  %3882 = vset.pattern.permute.xlu0 0
  %3883 = vperm.xlu0 %3882, %v2552
  %v3884 = vpop.permute.xlu0 %3883
  %3887 = vset.pattern.permute.xlu0 0
  %3888 = vperm.xlu0 %3887, %v2553
  %v3889 = vpop.permute.xlu0 %3888
  %3892 = vset.pattern.permute.xlu0 0
  %3893 = vperm.xlu0 %3892, %v2554
  %v3894 = vpop.permute.xlu0 %3893
  %3897 = vset.pattern.permute.xlu0 0
  %3898 = vperm.xlu0 %3897, %v2555
  %v3899 = vpop.permute.xlu0 %3898
  %3902 = vset.pattern.permute.xlu0 0
  %3903 = vperm.xlu0 %3902, %v2556
  %v3904 = vpop.permute.xlu0 %3903
  %3907 = vset.pattern.permute.xlu0 0
  %3908 = vperm.xlu0 %3907, %v2557
  %v3909 = vpop.permute.xlu0 %3908
  %3912 = vset.pattern.permute.xlu0 0
  %3913 = vperm.xlu0 %3912, %v2558
  %v3914 = vpop.permute.xlu0 %3913
  %3917 = vset.pattern.permute.xlu0 0
  %3918 = vperm.xlu0 %3917, %v2559
  %v3919 = vpop.permute.xlu0 %3918
  %3922 = vset.pattern.permute.xlu0 0
  %3923 = vperm.xlu0 %3922, %v2560
  %v3924 = vpop.permute.xlu0 %3923
  %3927 = vset.pattern.permute.xlu0 0
  %3928 = vperm.xlu0 %3927, %v2561
  %v3929 = vpop.permute.xlu0 %3928
  %3932 = vset.pattern.permute.xlu0 0
  %3933 = vperm.xlu0 %3932, %v2562
  %v3934 = vpop.permute.xlu0 %3933
  %3937 = vset.pattern.permute.xlu0 0
  %3938 = vperm.xlu0 %3937, %v2563
  %v3939 = vpop.permute.xlu0 %3938
  %3942 = vset.pattern.permute.xlu0 0
  %3943 = vperm.xlu0 %3942, %v2564
  %v3944 = vpop.permute.xlu0 %3943
  %3947 = vset.pattern.permute.xlu0 0
  %3948 = vperm.xlu0 %3947, %v2565
  %v3949 = vpop.permute.xlu0 %3948
  %3952 = vset.pattern.permute.xlu0 0
  %3953 = vperm.xlu0 %3952, %v2566
  %v3954 = vpop.permute.xlu0 %3953
  %3957 = vset.pattern.permute.xlu0 0
  %3958 = vperm.xlu0 %3957, %v2567
  %v3959 = vpop.permute.xlu0 %3958
  %3962 = vset.pattern.permute.xlu0 0
  %3963 = vperm.xlu0 %3962, %v2568
  %v3964 = vpop.permute.xlu0 %3963
  %3967 = vset.pattern.permute.xlu0 0
  %3968 = vperm.xlu0 %3967, %v2569
  %v3969 = vpop.permute.xlu0 %3968
  %3972 = vset.pattern.permute.xlu0 0
  %3973 = vperm.xlu0 %3972, %v2570
  %v3974 = vpop.permute.xlu0 %3973
  %3977 = vset.pattern.permute.xlu0 0
  %3978 = vperm.xlu0 %3977, %v2571
  %v3979 = vpop.permute.xlu0 %3978
  %v4109 = vperm.slane %v2573, 0
  %v4110 = vperm.slane %v2574, 0
  %v4111 = vperm.slane %v2575, 0
  %v4112 = vperm.slane %v2576, 0
  %v4113 = vperm.slane %v2577, 0
  %v4114 = vperm.slane %v2578, 0
  %v4115 = vperm.slane %v2579, 0
  %v4116 = vperm.slane %v2580, 0
  %v4117 = vperm.slane %v2581, 0
  %v4118 = vperm.slane %v2582, 0
  %v4119 = vperm.slane %v2583, 0
  %v4120 = vperm.slane %v2584, 0
  %v4121 = vperm.slane %v2585, 0
  %v4122 = vperm.slane %v2586, 0
  %v4123 = vperm.slane %v2587, 0
  %v4124 = vperm.slane %v2588, 0
  %v4125 = vperm.slane %v2589, 0
  %v4126 = vperm.slane %v2590, 0
  %v4127 = vperm.slane %v2591, 0
  %v4128 = vperm.slane %v2592, 0
  %v4129 = vperm.slane %v2593, 0
  %v4130 = vperm.slane %v2594, 0
  %v4131 = vperm.slane %v2595, 0
  %v4132 = vperm.slane %v2596, 0
  %v4133 = vperm.slane %v2597, 0
  %v4134 = vperm.slane %v2598, 0
  %v4135 = vperm.slane %v2599, 0
  %v4136 = vperm.slane %v2600, 0
  %v4137 = vperm.slane %v2601, 0
  %v4138 = vperm.slane %v2602, 0
  %v4139 = vperm.slane %v2603, 0
  %v4140 = vperm.slane %v2604, 0
  %v4141 = vperm.slane %v2605, 0
  %v4142 = vperm.slane %v2606, 0
  %v4143 = vperm.slane %v2607, 0
  %v4144 = vperm.slane %v2608, 0
  %v4145 = vperm.slane %v2609, 0
  %v4146 = vperm.slane %v2610, 0
  %v4147 = vperm.slane %v2611, 0
  %v4148 = vperm.slane %v2612, 0
  %v4149 = vperm.slane %v2613, 0
  %v4150 = vperm.slane %v2614, 0
  %v4151 = vperm.slane %v2615, 0
  %v4152 = vperm.slane %v2616, 0
  %v4153 = vperm.slane %v2617, 0
  %v4154 = vperm.slane %v2618, 0
  %v4155 = vperm.slane %v2619, 0
  %v4156 = vperm.slane %v2620, 0
  %v4157 = vperm.slane %v2621, 0
  %v4158 = vperm.slane %v2622, 0
  %v4159 = vperm.slane %v2623, 0
  %v4160 = vperm.slane %v2624, 0
  %v4161 = vperm.slane %v2625, 0
  %v4162 = vperm.slane %v2626, 0
  %v4163 = vperm.slane %v2627, 0
  %v4164 = vperm.slane %v2628, 0
  %v4165 = vperm.slane %v2629, 0
  %v4166 = vperm.slane %v2630, 0
  %v4167 = vperm.slane %v2631, 0
  %v4168 = vperm.slane %v2632, 0
  %v4169 = vperm.slane %v2633, 0
  %v4170 = vperm.slane %v2634, 0
  %v4171 = vperm.slane %v2635, 0
  %v4172 = vperm.slane %v2636, 0
  %v4173 = vperm.slane %v2637, 0
  %v4174 = vperm.slane %v2638, 0
  %v4175 = vperm.slane %v2639, 0
  %v4176 = vperm.slane %v2640, 0
  %v4177 = vperm.slane %v2641, 0
  %v4178 = vperm.slane %v2642, 0
  %v4179 = vperm.slane %v2643, 0
  %v4180 = vperm.slane %v2644, 0
  %v4181 = vperm.slane %v2645, 0
  %v4182 = vperm.slane %v2646, 0
  %v4183 = vperm.slane %v2647, 0
  %v4184 = vperm.slane %v2648, 0
  %v4185 = vperm.slane %v2649, 0
  %v4186 = vperm.slane %v2650, 0
  %v4187 = vperm.slane %v2651, 0
  %v4188 = vperm.slane %v2652, 0
  %v4189 = vperm.slane %v2653, 0
  %v4190 = vperm.slane %v2654, 0
  %v4191 = vperm.slane %v2655, 0
  %v4192 = vperm.slane %v2656, 0
  %v4193 = vperm.slane %v2657, 0
  %v4194 = vperm.slane %v2658, 0
  %v4195 = vperm.slane %v2659, 0
  %v4196 = vperm.slane %v2660, 0
  %v4197 = vperm.slane %v2661, 0
  %v4198 = vperm.slane %v2662, 0
  %v4199 = vperm.slane %v2663, 0
  %v4200 = vperm.slane %v2664, 0
  %v4201 = vperm.slane %v2665, 0
  %v4202 = vperm.slane %v2666, 0
  %v4203 = vperm.slane %v2667, 0
  %v4204 = vperm.slane %v2668, 0
  %v4205 = vperm.slane %v2669, 0
  %v4206 = vperm.slane %v2670, 0
  %v4207 = vperm.slane %v2671, 0
  %v4208 = vperm.slane %v2672, 0
  %v4209 = vperm.slane %v2673, 0
  %v4210 = vperm.slane %v2674, 0
  %v4211 = vperm.slane %v2675, 0
  %v4212 = vperm.slane %v2676, 0
  %v4213 = vperm.slane %v2677, 0
  %v4214 = vperm.slane %v2678, 0
  %v4215 = vperm.slane %v2679, 0
  %v4216 = vperm.slane %v2680, 0
  %v4217 = vperm.slane %v2681, 0
  %v4218 = vperm.slane %v2682, 0
  %v4219 = vperm.slane %v2683, 0
  %v4220 = vperm.slane %v2684, 0
  %v4221 = vperm.slane %v2685, 0
  %v4222 = vperm.slane %v2686, 0
  %v4223 = vperm.slane %v2687, 0
  %v4224 = vperm.slane %v2688, 0
  %v4225 = vperm.slane %v2689, 0
  %v4226 = vperm.slane %v2690, 0
  %v4227 = vperm.slane %v2691, 0
  %v4228 = vperm.slane %v2692, 0
  %v4229 = vperm.slane %v2693, 0
  %v4230 = vperm.slane %v2694, 0
  %v4231 = vperm.slane %v2695, 0
  %v4232 = vperm.slane %v2696, 0
  %v4233 = vperm.slane %v2697, 0
  %v4234 = vperm.slane %v2698, 0
  %v4235 = vperm.slane %v2699, 0
  %v4236 = vperm.slane %v2700, 0
  %v4365 = vmul.f32 %v2704, %v4109
  %v4366 = vmul.f32 %v2709, %v4109
  %v4367 = vmul.f32 %v2714, %v4110
  %v4368 = vmul.f32 %v2719, %v4110
  %v4369 = vmul.f32 %v2724, %v4111
  %v4370 = vmul.f32 %v2729, %v4111
  %v4371 = vmul.f32 %v2734, %v4112
  %v4372 = vmul.f32 %v2739, %v4112
  %v4373 = vmul.f32 %v2744, %v4113
  %v4374 = vmul.f32 %v2749, %v4113
  %v4375 = vmul.f32 %v2754, %v4114
  %v4376 = vmul.f32 %v2759, %v4114
  %v4377 = vmul.f32 %v2764, %v4115
  %v4378 = vmul.f32 %v2769, %v4115
  %v4379 = vmul.f32 %v2774, %v4116
  %v4380 = vmul.f32 %v2779, %v4116
  %v4381 = vmul.f32 %v2784, %v4117
  %v4382 = vmul.f32 %v2789, %v4117
  %v4383 = vmul.f32 %v2794, %v4118
  %v4384 = vmul.f32 %v2799, %v4118
  %v4385 = vmul.f32 %v2804, %v4119
  %v4386 = vmul.f32 %v2809, %v4119
  %v4387 = vmul.f32 %v2814, %v4120
  %v4388 = vmul.f32 %v2819, %v4120
  %v4389 = vmul.f32 %v2824, %v4121
  %v4390 = vmul.f32 %v2829, %v4121
  %v4391 = vmul.f32 %v2834, %v4122
  %v4392 = vmul.f32 %v2839, %v4122
  %v4393 = vmul.f32 %v2844, %v4123
  %v4394 = vmul.f32 %v2849, %v4123
  %v4395 = vmul.f32 %v2854, %v4124
  %v4396 = vmul.f32 %v2859, %v4124
  %v4397 = vmul.f32 %v2864, %v4125
  %v4398 = vmul.f32 %v2869, %v4125
  %v4399 = vmul.f32 %v2874, %v4126
  %v4400 = vmul.f32 %v2879, %v4126
  %v4401 = vmul.f32 %v2884, %v4127
  %v4402 = vmul.f32 %v2889, %v4127
  %v4403 = vmul.f32 %v2894, %v4128
  %v4404 = vmul.f32 %v2899, %v4128
  %v4405 = vmul.f32 %v2904, %v4129
  %v4406 = vmul.f32 %v2909, %v4129
  %v4407 = vmul.f32 %v2914, %v4130
  %v4408 = vmul.f32 %v2919, %v4130
  %v4409 = vmul.f32 %v2924, %v4131
  %v4410 = vmul.f32 %v2929, %v4131
  %v4411 = vmul.f32 %v2934, %v4132
  %v4412 = vmul.f32 %v2939, %v4132
  %v4413 = vmul.f32 %v2944, %v4133
  %v4414 = vmul.f32 %v2949, %v4133
  %v4415 = vmul.f32 %v2954, %v4134
  %v4416 = vmul.f32 %v2959, %v4134
  %v4417 = vmul.f32 %v2964, %v4135
  %v4418 = vmul.f32 %v2969, %v4135
  %v4419 = vmul.f32 %v2974, %v4136
  %v4420 = vmul.f32 %v2979, %v4136
  %v4421 = vmul.f32 %v2984, %v4137
  %v4422 = vmul.f32 %v2989, %v4137
  %v4423 = vmul.f32 %v2994, %v4138
  %v4424 = vmul.f32 %v2999, %v4138
  %v4425 = vmul.f32 %v3004, %v4139
  %v4426 = vmul.f32 %v3009, %v4139
  %v4427 = vmul.f32 %v3014, %v4140
  %v4428 = vmul.f32 %v3019, %v4140
  %v4429 = vmul.f32 %v3024, %v4141
  %v4430 = vmul.f32 %v3029, %v4141
  %v4431 = vmul.f32 %v3034, %v4142
  %v4432 = vmul.f32 %v3039, %v4142
  %v4433 = vmul.f32 %v3044, %v4143
  %v4434 = vmul.f32 %v3049, %v4143
  %v4435 = vmul.f32 %v3054, %v4144
  %v4436 = vmul.f32 %v3059, %v4144
  %v4437 = vmul.f32 %v3064, %v4145
  %v4438 = vmul.f32 %v3069, %v4145
  %v4439 = vmul.f32 %v3074, %v4146
  %v4440 = vmul.f32 %v3079, %v4146
  %v4441 = vmul.f32 %v3084, %v4147
  %v4442 = vmul.f32 %v3089, %v4147
  %v4443 = vmul.f32 %v3094, %v4148
  %v4444 = vmul.f32 %v3099, %v4148
  %v4445 = vmul.f32 %v3104, %v4149
  %v4446 = vmul.f32 %v3109, %v4149
  %v4447 = vmul.f32 %v3114, %v4150
  %v4448 = vmul.f32 %v3119, %v4150
  %v4449 = vmul.f32 %v3124, %v4151
  %v4450 = vmul.f32 %v3129, %v4151
  %v4451 = vmul.f32 %v3134, %v4152
  %v4452 = vmul.f32 %v3139, %v4152
  %v4453 = vmul.f32 %v3144, %v4153
  %v4454 = vmul.f32 %v3149, %v4153
  %v4455 = vmul.f32 %v3154, %v4154
  %v4456 = vmul.f32 %v3159, %v4154
  %v4457 = vmul.f32 %v3164, %v4155
  %v4458 = vmul.f32 %v3169, %v4155
  %v4459 = vmul.f32 %v3174, %v4156
  %v4460 = vmul.f32 %v3179, %v4156
  %v4461 = vmul.f32 %v3184, %v4157
  %v4462 = vmul.f32 %v3189, %v4157
  %v4463 = vmul.f32 %v3194, %v4158
  %v4464 = vmul.f32 %v3199, %v4158
  %v4465 = vmul.f32 %v3204, %v4159
  %v4466 = vmul.f32 %v3209, %v4159
  %v4467 = vmul.f32 %v3214, %v4160
  %v4468 = vmul.f32 %v3219, %v4160
  %v4469 = vmul.f32 %v3224, %v4161
  %v4470 = vmul.f32 %v3229, %v4161
  %v4471 = vmul.f32 %v3234, %v4162
  %v4472 = vmul.f32 %v3239, %v4162
  %v4473 = vmul.f32 %v3244, %v4163
  %v4474 = vmul.f32 %v3249, %v4163
  %v4475 = vmul.f32 %v3254, %v4164
  %v4476 = vmul.f32 %v3259, %v4164
  %v4477 = vmul.f32 %v3264, %v4165
  %v4478 = vmul.f32 %v3269, %v4165
  %v4479 = vmul.f32 %v3274, %v4166
  %v4480 = vmul.f32 %v3279, %v4166
  %v4481 = vmul.f32 %v3284, %v4167
  %v4482 = vmul.f32 %v3289, %v4167
  %v4483 = vmul.f32 %v3294, %v4168
  %v4484 = vmul.f32 %v3299, %v4168
  %v4485 = vmul.f32 %v3304, %v4169
  %v4486 = vmul.f32 %v3309, %v4169
  %v4487 = vmul.f32 %v3314, %v4170
  %v4488 = vmul.f32 %v3319, %v4170
  %v4489 = vmul.f32 %v3324, %v4171
  %v4490 = vmul.f32 %v3329, %v4171
  %v4491 = vmul.f32 %v3334, %v4172
  %v4492 = vmul.f32 %v3339, %v4172
  %v4493 = vmul.f32 %v3344, %v4173
  %v4494 = vmul.f32 %v3349, %v4173
  %v4495 = vmul.f32 %v3354, %v4174
  %v4496 = vmul.f32 %v3359, %v4174
  %v4497 = vmul.f32 %v3364, %v4175
  %v4498 = vmul.f32 %v3369, %v4175
  %v4499 = vmul.f32 %v3374, %v4176
  %v4500 = vmul.f32 %v3379, %v4176
  %v4501 = vmul.f32 %v3384, %v4177
  %v4502 = vmul.f32 %v3389, %v4177
  %v4503 = vmul.f32 %v3394, %v4178
  %v4504 = vmul.f32 %v3399, %v4178
  %v4505 = vmul.f32 %v3404, %v4179
  %v4506 = vmul.f32 %v3409, %v4179
  %v4507 = vmul.f32 %v3414, %v4180
  %v4508 = vmul.f32 %v3419, %v4180
  %v4509 = vmul.f32 %v3424, %v4181
  %v4510 = vmul.f32 %v3429, %v4181
  %v4511 = vmul.f32 %v3434, %v4182
  %v4512 = vmul.f32 %v3439, %v4182
  %v4513 = vmul.f32 %v3444, %v4183
  %v4514 = vmul.f32 %v3449, %v4183
  %v4515 = vmul.f32 %v3454, %v4184
  %v4516 = vmul.f32 %v3459, %v4184
  %v4517 = vmul.f32 %v3464, %v4185
  %v4518 = vmul.f32 %v3469, %v4185
  %v4519 = vmul.f32 %v3474, %v4186
  %v4520 = vmul.f32 %v3479, %v4186
  %v4521 = vmul.f32 %v3484, %v4187
  %v4522 = vmul.f32 %v3489, %v4187
  %v4523 = vmul.f32 %v3494, %v4188
  %v4524 = vmul.f32 %v3499, %v4188
  %v4525 = vmul.f32 %v3504, %v4189
  %v4526 = vmul.f32 %v3509, %v4189
  %v4527 = vmul.f32 %v3514, %v4190
  %v4528 = vmul.f32 %v3519, %v4190
  %v4529 = vmul.f32 %v3524, %v4191
  %v4530 = vmul.f32 %v3529, %v4191
  %v4531 = vmul.f32 %v3534, %v4192
  %v4532 = vmul.f32 %v3539, %v4192
  %v4533 = vmul.f32 %v3544, %v4193
  %v4534 = vmul.f32 %v3549, %v4193
  %v4535 = vmul.f32 %v3554, %v4194
  %v4536 = vmul.f32 %v3559, %v4194
  %v4537 = vmul.f32 %v3564, %v4195
  %v4538 = vmul.f32 %v3569, %v4195
  %v4539 = vmul.f32 %v3574, %v4196
  %v4540 = vmul.f32 %v3579, %v4196
  %v4541 = vmul.f32 %v3584, %v4197
  %v4542 = vmul.f32 %v3589, %v4197
  %v4543 = vmul.f32 %v3594, %v4198
  %v4544 = vmul.f32 %v3599, %v4198
  %v4545 = vmul.f32 %v3604, %v4199
  %v4546 = vmul.f32 %v3609, %v4199
  %v4547 = vmul.f32 %v3614, %v4200
  %v4548 = vmul.f32 %v3619, %v4200
  %v4549 = vmul.f32 %v3624, %v4201
  %v4550 = vmul.f32 %v3629, %v4201
  %v4551 = vmul.f32 %v3634, %v4202
  %v4552 = vmul.f32 %v3639, %v4202
  %v4553 = vmul.f32 %v3644, %v4203
  %v4554 = vmul.f32 %v3649, %v4203
  %v4555 = vmul.f32 %v3654, %v4204
  %v4556 = vmul.f32 %v3659, %v4204
  %v4557 = vmul.f32 %v3664, %v4205
  %v4558 = vmul.f32 %v3669, %v4205
  %v4559 = vmul.f32 %v3674, %v4206
  %v4560 = vmul.f32 %v3679, %v4206
  %v4561 = vmul.f32 %v3684, %v4207
  %v4562 = vmul.f32 %v3689, %v4207
  %v4563 = vmul.f32 %v3694, %v4208
  %v4564 = vmul.f32 %v3699, %v4208
  %v4565 = vmul.f32 %v3704, %v4209
  %v4566 = vmul.f32 %v3709, %v4209
  %v4567 = vmul.f32 %v3714, %v4210
  %v4568 = vmul.f32 %v3719, %v4210
  %v4569 = vmul.f32 %v3724, %v4211
  %v4570 = vmul.f32 %v3729, %v4211
  %v4571 = vmul.f32 %v3734, %v4212
  %v4572 = vmul.f32 %v3739, %v4212
  %v4573 = vmul.f32 %v3744, %v4213
  %v4574 = vmul.f32 %v3749, %v4213
  %v4575 = vmul.f32 %v3754, %v4214
  %v4576 = vmul.f32 %v3759, %v4214
  %v4577 = vmul.f32 %v3764, %v4215
  %v4578 = vmul.f32 %v3769, %v4215
  %v4579 = vmul.f32 %v3774, %v4216
  %v4580 = vmul.f32 %v3779, %v4216
  %v4581 = vmul.f32 %v3784, %v4217
  %v4582 = vmul.f32 %v3789, %v4217
  %v4583 = vmul.f32 %v3794, %v4218
  %v4584 = vmul.f32 %v3799, %v4218
  %v4585 = vmul.f32 %v3804, %v4219
  %v4586 = vmul.f32 %v3809, %v4219
  %v4587 = vmul.f32 %v3814, %v4220
  %v4588 = vmul.f32 %v3819, %v4220
  %v4589 = vmul.f32 %v3824, %v4221
  %v4590 = vmul.f32 %v3829, %v4221
  %v4591 = vmul.f32 %v3834, %v4222
  %v4592 = vmul.f32 %v3839, %v4222
  %v4593 = vmul.f32 %v3844, %v4223
  %v4594 = vmul.f32 %v3849, %v4223
  %v4595 = vmul.f32 %v3854, %v4224
  %v4596 = vmul.f32 %v3859, %v4224
  %v4597 = vmul.f32 %v3864, %v4225
  %v4598 = vmul.f32 %v3869, %v4225
  %v4599 = vmul.f32 %v3874, %v4226
  %v4600 = vmul.f32 %v3879, %v4226
  %v4601 = vmul.f32 %v3884, %v4227
  %v4602 = vmul.f32 %v3889, %v4227
  %v4603 = vmul.f32 %v3894, %v4228
  %v4604 = vmul.f32 %v3899, %v4228
  %v4605 = vmul.f32 %v3904, %v4229
  %v4606 = vmul.f32 %v3909, %v4229
  %v4607 = vmul.f32 %v3914, %v4230
  %v4608 = vmul.f32 %v3919, %v4230
  %v4609 = vmul.f32 %v3924, %v4231
  %v4610 = vmul.f32 %v3929, %v4231
  %v4611 = vmul.f32 %v3934, %v4232
  %v4612 = vmul.f32 %v3939, %v4232
  %v4613 = vmul.f32 %v3944, %v4233
  %v4614 = vmul.f32 %v3949, %v4233
  %v4615 = vmul.f32 %v3954, %v4234
  %v4616 = vmul.f32 %v3959, %v4234
  %v4617 = vmul.f32 %v3964, %v4235
  %v4618 = vmul.f32 %v3969, %v4235
  %v4619 = vmul.f32 %v3974, %v4236
  %v4620 = vmul.f32 %v3979, %v4236
  %v4621 = vadd.f32 %v2059, %v4365
  %v4622 = vadd.f32 %v2060, %v4366
  %v4623 = vadd.f32 %v2061, %v4367
  %v4624 = vadd.f32 %v2062, %v4368
  %v4625 = vadd.f32 %v2063, %v4369
  %v4626 = vadd.f32 %v2064, %v4370
  %v4627 = vadd.f32 %v2065, %v4371
  %v4628 = vadd.f32 %v2066, %v4372
  %v4629 = vadd.f32 %v2067, %v4373
  %v4630 = vadd.f32 %v2068, %v4374
  %v4631 = vadd.f32 %v2069, %v4375
  %v4632 = vadd.f32 %v2070, %v4376
  %v4633 = vadd.f32 %v2071, %v4377
  %v4634 = vadd.f32 %v2072, %v4378
  %v4635 = vadd.f32 %v2073, %v4379
  %v4636 = vadd.f32 %v2074, %v4380
  %v4637 = vadd.f32 %v2075, %v4381
  %v4638 = vadd.f32 %v2076, %v4382
  %v4639 = vadd.f32 %v2077, %v4383
  %v4640 = vadd.f32 %v2078, %v4384
  %v4641 = vadd.f32 %v2079, %v4385
  %v4642 = vadd.f32 %v2080, %v4386
  %v4643 = vadd.f32 %v2081, %v4387
  %v4644 = vadd.f32 %v2082, %v4388
  %v4645 = vadd.f32 %v2083, %v4389
  %v4646 = vadd.f32 %v2084, %v4390
  %v4647 = vadd.f32 %v2085, %v4391
  %v4648 = vadd.f32 %v2086, %v4392
  %v4649 = vadd.f32 %v2087, %v4393
  %v4650 = vadd.f32 %v2088, %v4394
  %v4651 = vadd.f32 %v2089, %v4395
  %v4652 = vadd.f32 %v2090, %v4396
  %v4653 = vadd.f32 %v2091, %v4397
  %v4654 = vadd.f32 %v2092, %v4398
  %v4655 = vadd.f32 %v2093, %v4399
  %v4656 = vadd.f32 %v2094, %v4400
  %v4657 = vadd.f32 %v2095, %v4401
  %v4658 = vadd.f32 %v2096, %v4402
  %v4659 = vadd.f32 %v2097, %v4403
  %v4660 = vadd.f32 %v2098, %v4404
  %v4661 = vadd.f32 %v2099, %v4405
  %v4662 = vadd.f32 %v2100, %v4406
  %v4663 = vadd.f32 %v2101, %v4407
  %v4664 = vadd.f32 %v2102, %v4408
  %v4665 = vadd.f32 %v2103, %v4409
  %v4666 = vadd.f32 %v2104, %v4410
  %v4667 = vadd.f32 %v2105, %v4411
  %v4668 = vadd.f32 %v2106, %v4412
  %v4669 = vadd.f32 %v2107, %v4413
  %v4670 = vadd.f32 %v2108, %v4414
  %v4671 = vadd.f32 %v2109, %v4415
  %v4672 = vadd.f32 %v2110, %v4416
  %v4673 = vadd.f32 %v2111, %v4417
  %v4674 = vadd.f32 %v2112, %v4418
  %v4675 = vadd.f32 %v2113, %v4419
  %v4676 = vadd.f32 %v2114, %v4420
  %v4677 = vadd.f32 %v2115, %v4421
  %v4678 = vadd.f32 %v2116, %v4422
  %v4679 = vadd.f32 %v2117, %v4423
  %v4680 = vadd.f32 %v2118, %v4424
  %v4681 = vadd.f32 %v2119, %v4425
  %v4682 = vadd.f32 %v2120, %v4426
  %v4683 = vadd.f32 %v2121, %v4427
  %v4684 = vadd.f32 %v2122, %v4428
  %v4685 = vadd.f32 %v2123, %v4429
  %v4686 = vadd.f32 %v2124, %v4430
  %v4687 = vadd.f32 %v2125, %v4431
  %v4688 = vadd.f32 %v2126, %v4432
  %v4689 = vadd.f32 %v2127, %v4433
  %v4690 = vadd.f32 %v2128, %v4434
  %v4691 = vadd.f32 %v2129, %v4435
  %v4692 = vadd.f32 %v2130, %v4436
  %v4693 = vadd.f32 %v2131, %v4437
  %v4694 = vadd.f32 %v2132, %v4438
  %v4695 = vadd.f32 %v2133, %v4439
  %v4696 = vadd.f32 %v2134, %v4440
  %v4697 = vadd.f32 %v2135, %v4441
  %v4698 = vadd.f32 %v2136, %v4442
  %v4699 = vadd.f32 %v2137, %v4443
  %v4700 = vadd.f32 %v2138, %v4444
  %v4701 = vadd.f32 %v2139, %v4445
  %v4702 = vadd.f32 %v2140, %v4446
  %v4703 = vadd.f32 %v2141, %v4447
  %v4704 = vadd.f32 %v2142, %v4448
  %v4705 = vadd.f32 %v2143, %v4449
  %v4706 = vadd.f32 %v2144, %v4450
  %v4707 = vadd.f32 %v2145, %v4451
  %v4708 = vadd.f32 %v2146, %v4452
  %v4709 = vadd.f32 %v2147, %v4453
  %v4710 = vadd.f32 %v2148, %v4454
  %v4711 = vadd.f32 %v2149, %v4455
  %v4712 = vadd.f32 %v2150, %v4456
  %v4713 = vadd.f32 %v2151, %v4457
  %v4714 = vadd.f32 %v2152, %v4458
  %v4715 = vadd.f32 %v2153, %v4459
  %v4716 = vadd.f32 %v2154, %v4460
  %v4717 = vadd.f32 %v2155, %v4461
  %v4718 = vadd.f32 %v2156, %v4462
  %v4719 = vadd.f32 %v2157, %v4463
  %v4720 = vadd.f32 %v2158, %v4464
  %v4721 = vadd.f32 %v2159, %v4465
  %v4722 = vadd.f32 %v2160, %v4466
  %v4723 = vadd.f32 %v2161, %v4467
  %v4724 = vadd.f32 %v2162, %v4468
  %v4725 = vadd.f32 %v2163, %v4469
  %v4726 = vadd.f32 %v2164, %v4470
  %v4727 = vadd.f32 %v2165, %v4471
  %v4728 = vadd.f32 %v2166, %v4472
  %v4729 = vadd.f32 %v2167, %v4473
  %v4730 = vadd.f32 %v2168, %v4474
  %v4731 = vadd.f32 %v2169, %v4475
  %v4732 = vadd.f32 %v2170, %v4476
  %v4733 = vadd.f32 %v2171, %v4477
  %v4734 = vadd.f32 %v2172, %v4478
  %v4735 = vadd.f32 %v2173, %v4479
  %v4736 = vadd.f32 %v2174, %v4480
  %v4737 = vadd.f32 %v2175, %v4481
  %v4738 = vadd.f32 %v2176, %v4482
  %v4739 = vadd.f32 %v2177, %v4483
  %v4740 = vadd.f32 %v2178, %v4484
  %v4741 = vadd.f32 %v2179, %v4485
  %v4742 = vadd.f32 %v2180, %v4486
  %v4743 = vadd.f32 %v2181, %v4487
  %v4744 = vadd.f32 %v2182, %v4488
  %v4745 = vadd.f32 %v2183, %v4489
  %v4746 = vadd.f32 %v2184, %v4490
  %v4747 = vadd.f32 %v2185, %v4491
  %v4748 = vadd.f32 %v2186, %v4492
  %v4749 = vadd.f32 %v2187, %v4493
  %v4750 = vadd.f32 %v2188, %v4494
  %v4751 = vadd.f32 %v2189, %v4495
  %v4752 = vadd.f32 %v2190, %v4496
  %v4753 = vadd.f32 %v2191, %v4497
  %v4754 = vadd.f32 %v2192, %v4498
  %v4755 = vadd.f32 %v2193, %v4499
  %v4756 = vadd.f32 %v2194, %v4500
  %v4757 = vadd.f32 %v2195, %v4501
  %v4758 = vadd.f32 %v2196, %v4502
  %v4759 = vadd.f32 %v2197, %v4503
  %v4760 = vadd.f32 %v2198, %v4504
  %v4761 = vadd.f32 %v2199, %v4505
  %v4762 = vadd.f32 %v2200, %v4506
  %v4763 = vadd.f32 %v2201, %v4507
  %v4764 = vadd.f32 %v2202, %v4508
  %v4765 = vadd.f32 %v2203, %v4509
  %v4766 = vadd.f32 %v2204, %v4510
  %v4767 = vadd.f32 %v2205, %v4511
  %v4768 = vadd.f32 %v2206, %v4512
  %v4769 = vadd.f32 %v2207, %v4513
  %v4770 = vadd.f32 %v2208, %v4514
  %v4771 = vadd.f32 %v2209, %v4515
  %v4772 = vadd.f32 %v2210, %v4516
  %v4773 = vadd.f32 %v2211, %v4517
  %v4774 = vadd.f32 %v2212, %v4518
  %v4775 = vadd.f32 %v2213, %v4519
  %v4776 = vadd.f32 %v2214, %v4520
  %v4777 = vadd.f32 %v2215, %v4521
  %v4778 = vadd.f32 %v2216, %v4522
  %v4779 = vadd.f32 %v2217, %v4523
  %v4780 = vadd.f32 %v2218, %v4524
  %v4781 = vadd.f32 %v2219, %v4525
  %v4782 = vadd.f32 %v2220, %v4526
  %v4783 = vadd.f32 %v2221, %v4527
  %v4784 = vadd.f32 %v2222, %v4528
  %v4785 = vadd.f32 %v2223, %v4529
  %v4786 = vadd.f32 %v2224, %v4530
  %v4787 = vadd.f32 %v2225, %v4531
  %v4788 = vadd.f32 %v2226, %v4532
  %v4789 = vadd.f32 %v2227, %v4533
  %v4790 = vadd.f32 %v2228, %v4534
  %v4791 = vadd.f32 %v2229, %v4535
  %v4792 = vadd.f32 %v2230, %v4536
  %v4793 = vadd.f32 %v2231, %v4537
  %v4794 = vadd.f32 %v2232, %v4538
  %v4795 = vadd.f32 %v2233, %v4539
  %v4796 = vadd.f32 %v2234, %v4540
  %v4797 = vadd.f32 %v2235, %v4541
  %v4798 = vadd.f32 %v2236, %v4542
  %v4799 = vadd.f32 %v2237, %v4543
  %v4800 = vadd.f32 %v2238, %v4544
  %v4801 = vadd.f32 %v2239, %v4545
  %v4802 = vadd.f32 %v2240, %v4546
  %v4803 = vadd.f32 %v2241, %v4547
  %v4804 = vadd.f32 %v2242, %v4548
  %v4805 = vadd.f32 %v2243, %v4549
  %v4806 = vadd.f32 %v2244, %v4550
  %v4807 = vadd.f32 %v2245, %v4551
  %v4808 = vadd.f32 %v2246, %v4552
  %v4809 = vadd.f32 %v2247, %v4553
  %v4810 = vadd.f32 %v2248, %v4554
  %v4811 = vadd.f32 %v2249, %v4555
  %v4812 = vadd.f32 %v2250, %v4556
  %v4813 = vadd.f32 %v2251, %v4557
  %v4814 = vadd.f32 %v2252, %v4558
  %v4815 = vadd.f32 %v2253, %v4559
  %v4816 = vadd.f32 %v2254, %v4560
  %v4817 = vadd.f32 %v2255, %v4561
  %v4818 = vadd.f32 %v2256, %v4562
  %v4819 = vadd.f32 %v2257, %v4563
  %v4820 = vadd.f32 %v2258, %v4564
  %v4821 = vadd.f32 %v2259, %v4565
  %v4822 = vadd.f32 %v2260, %v4566
  %v4823 = vadd.f32 %v2261, %v4567
  %v4824 = vadd.f32 %v2262, %v4568
  %v4825 = vadd.f32 %v2263, %v4569
  %v4826 = vadd.f32 %v2264, %v4570
  %v4827 = vadd.f32 %v2265, %v4571
  %v4828 = vadd.f32 %v2266, %v4572
  %v4829 = vadd.f32 %v2267, %v4573
  %v4830 = vadd.f32 %v2268, %v4574
  %v4831 = vadd.f32 %v2269, %v4575
  %v4832 = vadd.f32 %v2270, %v4576
  %v4833 = vadd.f32 %v2271, %v4577
  %v4834 = vadd.f32 %v2272, %v4578
  %v4835 = vadd.f32 %v2273, %v4579
  %v4836 = vadd.f32 %v2274, %v4580
  %v4837 = vadd.f32 %v2275, %v4581
  %v4838 = vadd.f32 %v2276, %v4582
  %v4839 = vadd.f32 %v2277, %v4583
  %v4840 = vadd.f32 %v2278, %v4584
  %v4841 = vadd.f32 %v2279, %v4585
  %v4842 = vadd.f32 %v2280, %v4586
  %v4843 = vadd.f32 %v2281, %v4587
  %v4844 = vadd.f32 %v2282, %v4588
  %v4845 = vadd.f32 %v2283, %v4589
  %v4846 = vadd.f32 %v2284, %v4590
  %v4847 = vadd.f32 %v2285, %v4591
  %v4848 = vadd.f32 %v2286, %v4592
  %v4849 = vadd.f32 %v2287, %v4593
  %v4850 = vadd.f32 %v2288, %v4594
  %v4851 = vadd.f32 %v2289, %v4595
  %v4852 = vadd.f32 %v2290, %v4596
  %v4853 = vadd.f32 %v2291, %v4597
  %v4854 = vadd.f32 %v2292, %v4598
  %v4855 = vadd.f32 %v2293, %v4599
  %v4856 = vadd.f32 %v2294, %v4600
  %v4857 = vadd.f32 %v2295, %v4601
  %v4858 = vadd.f32 %v2296, %v4602
  %v4859 = vadd.f32 %v2297, %v4603
  %v4860 = vadd.f32 %v2298, %v4604
  %v4861 = vadd.f32 %v2299, %v4605
  %v4862 = vadd.f32 %v2300, %v4606
  %v4863 = vadd.f32 %v2301, %v4607
  %v4864 = vadd.f32 %v2302, %v4608
  %v4865 = vadd.f32 %v2303, %v4609
  %v4866 = vadd.f32 %v2304, %v4610
  %v4867 = vadd.f32 %v2305, %v4611
  %v4868 = vadd.f32 %v2306, %v4612
  %v4869 = vadd.f32 %v2307, %v4613
  %v4870 = vadd.f32 %v2308, %v4614
  %v4871 = vadd.f32 %v2309, %v4615
  %v4872 = vadd.f32 %v2310, %v4616
  %v4873 = vadd.f32 %v2311, %v4617
  %v4874 = vadd.f32 %v2312, %v4618
  %v4875 = vadd.f32 %v2313, %v4619
  %v4876 = vadd.f32 %v2314, %v4620
  %vm4877 = vcmask 130048
  %4878 = vst.msk [vmem:[%s2] sm:$0xff] %vm4877, %v4621
  %4879 = vst.msk [vmem:[%s2 + $0x8] sm:$0xff] %vm4877, %v4622
  %4880 = vst.msk [vmem:[%s2 + $0x10] sm:$0xff] %vm4877, %v4623
  %4881 = vst.msk [vmem:[%s2 + $0x18] sm:$0xff] %vm4877, %v4624
  %4882 = vst.msk [vmem:[%s2 + $0x20] sm:$0xff] %vm4877, %v4625
  %4883 = vst.msk [vmem:[%s2 + $0x28] sm:$0xff] %vm4877, %v4626
  %4884 = vst.msk [vmem:[%s2 + $0x30] sm:$0xff] %vm4877, %v4627
  %4885 = vst.msk [vmem:[%s2 + $0x38] sm:$0xff] %vm4877, %v4628
  %4886 = vst.msk [vmem:[%s2 + $0x40] sm:$0xff] %vm4877, %v4629
  %4887 = vst.msk [vmem:[%s2 + $0x48] sm:$0xff] %vm4877, %v4630
  %4888 = vst.msk [vmem:[%s2 + $0x50] sm:$0xff] %vm4877, %v4631
  %4889 = vst.msk [vmem:[%s2 + $0x58] sm:$0xff] %vm4877, %v4632
  %4890 = vst.msk [vmem:[%s2 + $0x60] sm:$0xff] %vm4877, %v4633
  %4891 = vst.msk [vmem:[%s2 + $0x68] sm:$0xff] %vm4877, %v4634
  %4892 = vst.msk [vmem:[%s2 + $0x70] sm:$0xff] %vm4877, %v4635
  %4893 = vst.msk [vmem:[%s2 + $0x78] sm:$0xff] %vm4877, %v4636
  %4894 = vst.msk [vmem:[%s2 + $0x80] sm:$0xff] %vm4877, %v4637
  %4895 = vst.msk [vmem:[%s2 + $0x88] sm:$0xff] %vm4877, %v4638
  %4896 = vst.msk [vmem:[%s2 + $0x90] sm:$0xff] %vm4877, %v4639
  %4897 = vst.msk [vmem:[%s2 + $0x98] sm:$0xff] %vm4877, %v4640
  %4898 = vst.msk [vmem:[%s2 + $0xa0] sm:$0xff] %vm4877, %v4641
  %4899 = vst.msk [vmem:[%s2 + $0xa8] sm:$0xff] %vm4877, %v4642
  %4900 = vst.msk [vmem:[%s2 + $0xb0] sm:$0xff] %vm4877, %v4643
  %4901 = vst.msk [vmem:[%s2 + $0xb8] sm:$0xff] %vm4877, %v4644
  %4902 = vst.msk [vmem:[%s2 + $0xc0] sm:$0xff] %vm4877, %v4645
  %4903 = vst.msk [vmem:[%s2 + $0xc8] sm:$0xff] %vm4877, %v4646
  %4904 = vst.msk [vmem:[%s2 + $0xd0] sm:$0xff] %vm4877, %v4647
  %4905 = vst.msk [vmem:[%s2 + $0xd8] sm:$0xff] %vm4877, %v4648
  %4906 = vst.msk [vmem:[%s2 + $0xe0] sm:$0xff] %vm4877, %v4649
  %4907 = vst.msk [vmem:[%s2 + $0xe8] sm:$0xff] %vm4877, %v4650
  %4908 = vst.msk [vmem:[%s2 + $0xf0] sm:$0xff] %vm4877, %v4651
  %4909 = vst.msk [vmem:[%s2 + $0xf8] sm:$0xff] %vm4877, %v4652
  %4910 = vst.msk [vmem:[%s2 + $0x100] sm:$0xff] %vm4877, %v4653
  %4911 = vst.msk [vmem:[%s2 + $0x108] sm:$0xff] %vm4877, %v4654
  %4912 = vst.msk [vmem:[%s2 + $0x110] sm:$0xff] %vm4877, %v4655
  %4913 = vst.msk [vmem:[%s2 + $0x118] sm:$0xff] %vm4877, %v4656
  %4914 = vst.msk [vmem:[%s2 + $0x120] sm:$0xff] %vm4877, %v4657
  %4915 = vst.msk [vmem:[%s2 + $0x128] sm:$0xff] %vm4877, %v4658
  %4916 = vst.msk [vmem:[%s2 + $0x130] sm:$0xff] %vm4877, %v4659
  %4917 = vst.msk [vmem:[%s2 + $0x138] sm:$0xff] %vm4877, %v4660
  %4918 = vst.msk [vmem:[%s2 + $0x140] sm:$0xff] %vm4877, %v4661
  %4919 = vst.msk [vmem:[%s2 + $0x148] sm:$0xff] %vm4877, %v4662
  %4920 = vst.msk [vmem:[%s2 + $0x150] sm:$0xff] %vm4877, %v4663
  %4921 = vst.msk [vmem:[%s2 + $0x158] sm:$0xff] %vm4877, %v4664
  %4922 = vst.msk [vmem:[%s2 + $0x160] sm:$0xff] %vm4877, %v4665
  %4923 = vst.msk [vmem:[%s2 + $0x168] sm:$0xff] %vm4877, %v4666
  %4924 = vst.msk [vmem:[%s2 + $0x170] sm:$0xff] %vm4877, %v4667
  %4925 = vst.msk [vmem:[%s2 + $0x178] sm:$0xff] %vm4877, %v4668
  %4926 = vst.msk [vmem:[%s2 + $0x180] sm:$0xff] %vm4877, %v4669
  %4927 = vst.msk [vmem:[%s2 + $0x188] sm:$0xff] %vm4877, %v4670
  %4928 = vst.msk [vmem:[%s2 + $0x190] sm:$0xff] %vm4877, %v4671
  %4929 = vst.msk [vmem:[%s2 + $0x198] sm:$0xff] %vm4877, %v4672
  %4930 = vst.msk [vmem:[%s2 + $0x1a0] sm:$0xff] %vm4877, %v4673
  %4931 = vst.msk [vmem:[%s2 + $0x1a8] sm:$0xff] %vm4877, %v4674
  %4932 = vst.msk [vmem:[%s2 + $0x1b0] sm:$0xff] %vm4877, %v4675
  %4933 = vst.msk [vmem:[%s2 + $0x1b8] sm:$0xff] %vm4877, %v4676
  %4934 = vst.msk [vmem:[%s2 + $0x1c0] sm:$0xff] %vm4877, %v4677
  %4935 = vst.msk [vmem:[%s2 + $0x1c8] sm:$0xff] %vm4877, %v4678
  %4936 = vst.msk [vmem:[%s2 + $0x1d0] sm:$0xff] %vm4877, %v4679
  %4937 = vst.msk [vmem:[%s2 + $0x1d8] sm:$0xff] %vm4877, %v4680
  %4938 = vst.msk [vmem:[%s2 + $0x1e0] sm:$0xff] %vm4877, %v4681
  %4939 = vst.msk [vmem:[%s2 + $0x1e8] sm:$0xff] %vm4877, %v4682
  %4940 = vst.msk [vmem:[%s2 + $0x1f0] sm:$0xff] %vm4877, %v4683
  %4941 = vst.msk [vmem:[%s2 + $0x1f8] sm:$0xff] %vm4877, %v4684
  %4942 = vst.msk [vmem:[%s2 + $0x200] sm:$0xff] %vm4877, %v4685
  %4943 = vst.msk [vmem:[%s2 + $0x208] sm:$0xff] %vm4877, %v4686
  %4944 = vst.msk [vmem:[%s2 + $0x210] sm:$0xff] %vm4877, %v4687
  %4945 = vst.msk [vmem:[%s2 + $0x218] sm:$0xff] %vm4877, %v4688
  %4946 = vst.msk [vmem:[%s2 + $0x220] sm:$0xff] %vm4877, %v4689
  %4947 = vst.msk [vmem:[%s2 + $0x228] sm:$0xff] %vm4877, %v4690
  %4948 = vst.msk [vmem:[%s2 + $0x230] sm:$0xff] %vm4877, %v4691
  %4949 = vst.msk [vmem:[%s2 + $0x238] sm:$0xff] %vm4877, %v4692
  %4950 = vst.msk [vmem:[%s2 + $0x240] sm:$0xff] %vm4877, %v4693
  %4951 = vst.msk [vmem:[%s2 + $0x248] sm:$0xff] %vm4877, %v4694
  %4952 = vst.msk [vmem:[%s2 + $0x250] sm:$0xff] %vm4877, %v4695
  %4953 = vst.msk [vmem:[%s2 + $0x258] sm:$0xff] %vm4877, %v4696
  %4954 = vst.msk [vmem:[%s2 + $0x260] sm:$0xff] %vm4877, %v4697
  %4955 = vst.msk [vmem:[%s2 + $0x268] sm:$0xff] %vm4877, %v4698
  %4956 = vst.msk [vmem:[%s2 + $0x270] sm:$0xff] %vm4877, %v4699
  %4957 = vst.msk [vmem:[%s2 + $0x278] sm:$0xff] %vm4877, %v4700
  %4958 = vst.msk [vmem:[%s2 + $0x280] sm:$0xff] %vm4877, %v4701
  %4959 = vst.msk [vmem:[%s2 + $0x288] sm:$0xff] %vm4877, %v4702
  %4960 = vst.msk [vmem:[%s2 + $0x290] sm:$0xff] %vm4877, %v4703
  %4961 = vst.msk [vmem:[%s2 + $0x298] sm:$0xff] %vm4877, %v4704
  %4962 = vst.msk [vmem:[%s2 + $0x2a0] sm:$0xff] %vm4877, %v4705
  %4963 = vst.msk [vmem:[%s2 + $0x2a8] sm:$0xff] %vm4877, %v4706
  %4964 = vst.msk [vmem:[%s2 + $0x2b0] sm:$0xff] %vm4877, %v4707
  %4965 = vst.msk [vmem:[%s2 + $0x2b8] sm:$0xff] %vm4877, %v4708
  %4966 = vst.msk [vmem:[%s2 + $0x2c0] sm:$0xff] %vm4877, %v4709
  %4967 = vst.msk [vmem:[%s2 + $0x2c8] sm:$0xff] %vm4877, %v4710
  %4968 = vst.msk [vmem:[%s2 + $0x2d0] sm:$0xff] %vm4877, %v4711
  %4969 = vst.msk [vmem:[%s2 + $0x2d8] sm:$0xff] %vm4877, %v4712
  %4970 = vst.msk [vmem:[%s2 + $0x2e0] sm:$0xff] %vm4877, %v4713
  %4971 = vst.msk [vmem:[%s2 + $0x2e8] sm:$0xff] %vm4877, %v4714
  %4972 = vst.msk [vmem:[%s2 + $0x2f0] sm:$0xff] %vm4877, %v4715
  %4973 = vst.msk [vmem:[%s2 + $0x2f8] sm:$0xff] %vm4877, %v4716
  %4974 = vst.msk [vmem:[%s2 + $0x300] sm:$0xff] %vm4877, %v4717
  %4975 = vst.msk [vmem:[%s2 + $0x308] sm:$0xff] %vm4877, %v4718
  %4976 = vst.msk [vmem:[%s2 + $0x310] sm:$0xff] %vm4877, %v4719
  %4977 = vst.msk [vmem:[%s2 + $0x318] sm:$0xff] %vm4877, %v4720
  %4978 = vst.msk [vmem:[%s2 + $0x320] sm:$0xff] %vm4877, %v4721
  %4979 = vst.msk [vmem:[%s2 + $0x328] sm:$0xff] %vm4877, %v4722
  %4980 = vst.msk [vmem:[%s2 + $0x330] sm:$0xff] %vm4877, %v4723
  %4981 = vst.msk [vmem:[%s2 + $0x338] sm:$0xff] %vm4877, %v4724
  %4982 = vst.msk [vmem:[%s2 + $0x340] sm:$0xff] %vm4877, %v4725
  %4983 = vst.msk [vmem:[%s2 + $0x348] sm:$0xff] %vm4877, %v4726
  %4984 = vst.msk [vmem:[%s2 + $0x350] sm:$0xff] %vm4877, %v4727
  %4985 = vst.msk [vmem:[%s2 + $0x358] sm:$0xff] %vm4877, %v4728
  %4986 = vst.msk [vmem:[%s2 + $0x360] sm:$0xff] %vm4877, %v4729
  %4987 = vst.msk [vmem:[%s2 + $0x368] sm:$0xff] %vm4877, %v4730
  %4988 = vst.msk [vmem:[%s2 + $0x370] sm:$0xff] %vm4877, %v4731
  %4989 = vst.msk [vmem:[%s2 + $0x378] sm:$0xff] %vm4877, %v4732
  %4990 = vst.msk [vmem:[%s2 + $0x380] sm:$0xff] %vm4877, %v4733
  %4991 = vst.msk [vmem:[%s2 + $0x388] sm:$0xff] %vm4877, %v4734
  %4992 = vst.msk [vmem:[%s2 + $0x390] sm:$0xff] %vm4877, %v4735
  %4993 = vst.msk [vmem:[%s2 + $0x398] sm:$0xff] %vm4877, %v4736
  %4994 = vst.msk [vmem:[%s2 + $0x3a0] sm:$0xff] %vm4877, %v4737
  %4995 = vst.msk [vmem:[%s2 + $0x3a8] sm:$0xff] %vm4877, %v4738
  %4996 = vst.msk [vmem:[%s2 + $0x3b0] sm:$0xff] %vm4877, %v4739
  %4997 = vst.msk [vmem:[%s2 + $0x3b8] sm:$0xff] %vm4877, %v4740
  %4998 = vst.msk [vmem:[%s2 + $0x3c0] sm:$0xff] %vm4877, %v4741
  %4999 = vst.msk [vmem:[%s2 + $0x3c8] sm:$0xff] %vm4877, %v4742
  %5000 = vst.msk [vmem:[%s2 + $0x3d0] sm:$0xff] %vm4877, %v4743
  %5001 = vst.msk [vmem:[%s2 + $0x3d8] sm:$0xff] %vm4877, %v4744
  %5002 = vst.msk [vmem:[%s2 + $0x3e0] sm:$0xff] %vm4877, %v4745
  %5003 = vst.msk [vmem:[%s2 + $0x3e8] sm:$0xff] %vm4877, %v4746
  %5004 = vst.msk [vmem:[%s2 + $0x3f0] sm:$0xff] %vm4877, %v4747
  %5005 = vst.msk [vmem:[%s2 + $0x3f8] sm:$0xff] %vm4877, %v4748
  %5006 = vst.msk [vmem:[%s2 + $0x400] sm:$0xff] %vm4877, %v4749
  %5007 = vst.msk [vmem:[%s2 + $0x408] sm:$0xff] %vm4877, %v4750
  %5008 = vst.msk [vmem:[%s2 + $0x410] sm:$0xff] %vm4877, %v4751
  %5009 = vst.msk [vmem:[%s2 + $0x418] sm:$0xff] %vm4877, %v4752
  %5010 = vst.msk [vmem:[%s2 + $0x420] sm:$0xff] %vm4877, %v4753
  %5011 = vst.msk [vmem:[%s2 + $0x428] sm:$0xff] %vm4877, %v4754
  %5012 = vst.msk [vmem:[%s2 + $0x430] sm:$0xff] %vm4877, %v4755
  %5013 = vst.msk [vmem:[%s2 + $0x438] sm:$0xff] %vm4877, %v4756
  %5014 = vst.msk [vmem:[%s2 + $0x440] sm:$0xff] %vm4877, %v4757
  %5015 = vst.msk [vmem:[%s2 + $0x448] sm:$0xff] %vm4877, %v4758
  %5016 = vst.msk [vmem:[%s2 + $0x450] sm:$0xff] %vm4877, %v4759
  %5017 = vst.msk [vmem:[%s2 + $0x458] sm:$0xff] %vm4877, %v4760
  %5018 = vst.msk [vmem:[%s2 + $0x460] sm:$0xff] %vm4877, %v4761
  %5019 = vst.msk [vmem:[%s2 + $0x468] sm:$0xff] %vm4877, %v4762
  %5020 = vst.msk [vmem:[%s2 + $0x470] sm:$0xff] %vm4877, %v4763
  %5021 = vst.msk [vmem:[%s2 + $0x478] sm:$0xff] %vm4877, %v4764
  %5022 = vst.msk [vmem:[%s2 + $0x480] sm:$0xff] %vm4877, %v4765
  %5023 = vst.msk [vmem:[%s2 + $0x488] sm:$0xff] %vm4877, %v4766
  %5024 = vst.msk [vmem:[%s2 + $0x490] sm:$0xff] %vm4877, %v4767
  %5025 = vst.msk [vmem:[%s2 + $0x498] sm:$0xff] %vm4877, %v4768
  %5026 = vst.msk [vmem:[%s2 + $0x4a0] sm:$0xff] %vm4877, %v4769
  %5027 = vst.msk [vmem:[%s2 + $0x4a8] sm:$0xff] %vm4877, %v4770
  %5028 = vst.msk [vmem:[%s2 + $0x4b0] sm:$0xff] %vm4877, %v4771
  %5029 = vst.msk [vmem:[%s2 + $0x4b8] sm:$0xff] %vm4877, %v4772
  %5030 = vst.msk [vmem:[%s2 + $0x4c0] sm:$0xff] %vm4877, %v4773
  %5031 = vst.msk [vmem:[%s2 + $0x4c8] sm:$0xff] %vm4877, %v4774
  %5032 = vst.msk [vmem:[%s2 + $0x4d0] sm:$0xff] %vm4877, %v4775
  %5033 = vst.msk [vmem:[%s2 + $0x4d8] sm:$0xff] %vm4877, %v4776
  %5034 = vst.msk [vmem:[%s2 + $0x4e0] sm:$0xff] %vm4877, %v4777
  %5035 = vst.msk [vmem:[%s2 + $0x4e8] sm:$0xff] %vm4877, %v4778
  %5036 = vst.msk [vmem:[%s2 + $0x4f0] sm:$0xff] %vm4877, %v4779
  %5037 = vst.msk [vmem:[%s2 + $0x4f8] sm:$0xff] %vm4877, %v4780
  %5038 = vst.msk [vmem:[%s2 + $0x500] sm:$0xff] %vm4877, %v4781
  %5039 = vst.msk [vmem:[%s2 + $0x508] sm:$0xff] %vm4877, %v4782
  %5040 = vst.msk [vmem:[%s2 + $0x510] sm:$0xff] %vm4877, %v4783
  %5041 = vst.msk [vmem:[%s2 + $0x518] sm:$0xff] %vm4877, %v4784
  %5042 = vst.msk [vmem:[%s2 + $0x520] sm:$0xff] %vm4877, %v4785
  %5043 = vst.msk [vmem:[%s2 + $0x528] sm:$0xff] %vm4877, %v4786
  %5044 = vst.msk [vmem:[%s2 + $0x530] sm:$0xff] %vm4877, %v4787
  %5045 = vst.msk [vmem:[%s2 + $0x538] sm:$0xff] %vm4877, %v4788
  %5046 = vst.msk [vmem:[%s2 + $0x540] sm:$0xff] %vm4877, %v4789
  %5047 = vst.msk [vmem:[%s2 + $0x548] sm:$0xff] %vm4877, %v4790
  %5048 = vst.msk [vmem:[%s2 + $0x550] sm:$0xff] %vm4877, %v4791
  %5049 = vst.msk [vmem:[%s2 + $0x558] sm:$0xff] %vm4877, %v4792
  %5050 = vst.msk [vmem:[%s2 + $0x560] sm:$0xff] %vm4877, %v4793
  %5051 = vst.msk [vmem:[%s2 + $0x568] sm:$0xff] %vm4877, %v4794
  %5052 = vst.msk [vmem:[%s2 + $0x570] sm:$0xff] %vm4877, %v4795
  %5053 = vst.msk [vmem:[%s2 + $0x578] sm:$0xff] %vm4877, %v4796
  %5054 = vst.msk [vmem:[%s2 + $0x580] sm:$0xff] %vm4877, %v4797
  %5055 = vst.msk [vmem:[%s2 + $0x588] sm:$0xff] %vm4877, %v4798
  %5056 = vst.msk [vmem:[%s2 + $0x590] sm:$0xff] %vm4877, %v4799
  %5057 = vst.msk [vmem:[%s2 + $0x598] sm:$0xff] %vm4877, %v4800
  %5058 = vst.msk [vmem:[%s2 + $0x5a0] sm:$0xff] %vm4877, %v4801
  %5059 = vst.msk [vmem:[%s2 + $0x5a8] sm:$0xff] %vm4877, %v4802
  %5060 = vst.msk [vmem:[%s2 + $0x5b0] sm:$0xff] %vm4877, %v4803
  %5061 = vst.msk [vmem:[%s2 + $0x5b8] sm:$0xff] %vm4877, %v4804
  %5062 = vst.msk [vmem:[%s2 + $0x5c0] sm:$0xff] %vm4877, %v4805
  %5063 = vst.msk [vmem:[%s2 + $0x5c8] sm:$0xff] %vm4877, %v4806
  %5064 = vst.msk [vmem:[%s2 + $0x5d0] sm:$0xff] %vm4877, %v4807
  %5065 = vst.msk [vmem:[%s2 + $0x5d8] sm:$0xff] %vm4877, %v4808
  %5066 = vst.msk [vmem:[%s2 + $0x5e0] sm:$0xff] %vm4877, %v4809
  %5067 = vst.msk [vmem:[%s2 + $0x5e8] sm:$0xff] %vm4877, %v4810
  %5068 = vst.msk [vmem:[%s2 + $0x5f0] sm:$0xff] %vm4877, %v4811
  %5069 = vst.msk [vmem:[%s2 + $0x5f8] sm:$0xff] %vm4877, %v4812
  %5070 = vst.msk [vmem:[%s2 + $0x600] sm:$0xff] %vm4877, %v4813
  %5071 = vst.msk [vmem:[%s2 + $0x608] sm:$0xff] %vm4877, %v4814
  %5072 = vst.msk [vmem:[%s2 + $0x610] sm:$0xff] %vm4877, %v4815
  %5073 = vst.msk [vmem:[%s2 + $0x618] sm:$0xff] %vm4877, %v4816
  %5074 = vst.msk [vmem:[%s2 + $0x620] sm:$0xff] %vm4877, %v4817
  %5075 = vst.msk [vmem:[%s2 + $0x628] sm:$0xff] %vm4877, %v4818
  %5076 = vst.msk [vmem:[%s2 + $0x630] sm:$0xff] %vm4877, %v4819
  %5077 = vst.msk [vmem:[%s2 + $0x638] sm:$0xff] %vm4877, %v4820
  %5078 = vst.msk [vmem:[%s2 + $0x640] sm:$0xff] %vm4877, %v4821
  %5079 = vst.msk [vmem:[%s2 + $0x648] sm:$0xff] %vm4877, %v4822
  %5080 = vst.msk [vmem:[%s2 + $0x650] sm:$0xff] %vm4877, %v4823
  %5081 = vst.msk [vmem:[%s2 + $0x658] sm:$0xff] %vm4877, %v4824
  %5082 = vst.msk [vmem:[%s2 + $0x660] sm:$0xff] %vm4877, %v4825
  %5083 = vst.msk [vmem:[%s2 + $0x668] sm:$0xff] %vm4877, %v4826
  %5084 = vst.msk [vmem:[%s2 + $0x670] sm:$0xff] %vm4877, %v4827
  %5085 = vst.msk [vmem:[%s2 + $0x678] sm:$0xff] %vm4877, %v4828
  %5086 = vst.msk [vmem:[%s2 + $0x680] sm:$0xff] %vm4877, %v4829
  %5087 = vst.msk [vmem:[%s2 + $0x688] sm:$0xff] %vm4877, %v4830
  %5088 = vst.msk [vmem:[%s2 + $0x690] sm:$0xff] %vm4877, %v4831
  %5089 = vst.msk [vmem:[%s2 + $0x698] sm:$0xff] %vm4877, %v4832
  %5090 = vst.msk [vmem:[%s2 + $0x6a0] sm:$0xff] %vm4877, %v4833
  %5091 = vst.msk [vmem:[%s2 + $0x6a8] sm:$0xff] %vm4877, %v4834
  %5092 = vst.msk [vmem:[%s2 + $0x6b0] sm:$0xff] %vm4877, %v4835
  %5093 = vst.msk [vmem:[%s2 + $0x6b8] sm:$0xff] %vm4877, %v4836
  %5094 = vst.msk [vmem:[%s2 + $0x6c0] sm:$0xff] %vm4877, %v4837
  %5095 = vst.msk [vmem:[%s2 + $0x6c8] sm:$0xff] %vm4877, %v4838
  %5096 = vst.msk [vmem:[%s2 + $0x6d0] sm:$0xff] %vm4877, %v4839
  %5097 = vst.msk [vmem:[%s2 + $0x6d8] sm:$0xff] %vm4877, %v4840
  %5098 = vst.msk [vmem:[%s2 + $0x6e0] sm:$0xff] %vm4877, %v4841
  %5099 = vst.msk [vmem:[%s2 + $0x6e8] sm:$0xff] %vm4877, %v4842
  %5100 = vst.msk [vmem:[%s2 + $0x6f0] sm:$0xff] %vm4877, %v4843
  %5101 = vst.msk [vmem:[%s2 + $0x6f8] sm:$0xff] %vm4877, %v4844
  %5102 = vst.msk [vmem:[%s2 + $0x700] sm:$0xff] %vm4877, %v4845
  %5103 = vst.msk [vmem:[%s2 + $0x708] sm:$0xff] %vm4877, %v4846
  %5104 = vst.msk [vmem:[%s2 + $0x710] sm:$0xff] %vm4877, %v4847
  %5105 = vst.msk [vmem:[%s2 + $0x718] sm:$0xff] %vm4877, %v4848
  %5106 = vst.msk [vmem:[%s2 + $0x720] sm:$0xff] %vm4877, %v4849
  %5107 = vst.msk [vmem:[%s2 + $0x728] sm:$0xff] %vm4877, %v4850
  %5108 = vst.msk [vmem:[%s2 + $0x730] sm:$0xff] %vm4877, %v4851
  %5109 = vst.msk [vmem:[%s2 + $0x738] sm:$0xff] %vm4877, %v4852
  %5110 = vst.msk [vmem:[%s2 + $0x740] sm:$0xff] %vm4877, %v4853
  %5111 = vst.msk [vmem:[%s2 + $0x748] sm:$0xff] %vm4877, %v4854
  %5112 = vst.msk [vmem:[%s2 + $0x750] sm:$0xff] %vm4877, %v4855
  %5113 = vst.msk [vmem:[%s2 + $0x758] sm:$0xff] %vm4877, %v4856
  %5114 = vst.msk [vmem:[%s2 + $0x760] sm:$0xff] %vm4877, %v4857
  %5115 = vst.msk [vmem:[%s2 + $0x768] sm:$0xff] %vm4877, %v4858
  %5116 = vst.msk [vmem:[%s2 + $0x770] sm:$0xff] %vm4877, %v4859
  %5117 = vst.msk [vmem:[%s2 + $0x778] sm:$0xff] %vm4877, %v4860
  %5118 = vst.msk [vmem:[%s2 + $0x780] sm:$0xff] %vm4877, %v4861
  %5119 = vst.msk [vmem:[%s2 + $0x788] sm:$0xff] %vm4877, %v4862
  %5120 = vst.msk [vmem:[%s2 + $0x790] sm:$0xff] %vm4877, %v4863
  %5121 = vst.msk [vmem:[%s2 + $0x798] sm:$0xff] %vm4877, %v4864
  %5122 = vst.msk [vmem:[%s2 + $0x7a0] sm:$0xff] %vm4877, %v4865
  %5123 = vst.msk [vmem:[%s2 + $0x7a8] sm:$0xff] %vm4877, %v4866
  %5124 = vst.msk [vmem:[%s2 + $0x7b0] sm:$0xff] %vm4877, %v4867
  %5125 = vst.msk [vmem:[%s2 + $0x7b8] sm:$0xff] %vm4877, %v4868
  %5126 = vst.msk [vmem:[%s2 + $0x7c0] sm:$0xff] %vm4877, %v4869
  %5127 = vst.msk [vmem:[%s2 + $0x7c8] sm:$0xff] %vm4877, %v4870
  %5128 = vst.msk [vmem:[%s2 + $0x7d0] sm:$0xff] %vm4877, %v4871
  %5129 = vst.msk [vmem:[%s2 + $0x7d8] sm:$0xff] %vm4877, %v4872
  %5130 = vst.msk [vmem:[%s2 + $0x7e0] sm:$0xff] %vm4877, %v4873
  %5131 = vst.msk [vmem:[%s2 + $0x7e8] sm:$0xff] %vm4877, %v4874
  %5132 = vst.msk [vmem:[%s2 + $0x7f0] sm:$0xff] %vm4877, %v4875
  %5133 = vst.msk [vmem:[%s2 + $0x7f8] sm:$0xff] %vm4877, %v4876
  // Predicated region
  $region10: #{position_embedding_random_forward.1} parent=0 // pred_check
    _
  $region11: #{position_embedding_random_forward.1} parent=0 // pred_check_branch
    %5135 = sbr.rel (0) target = $region13
  $region12: #{position_embedding_random_forward.1} parent=0 // pred_region
    _
  $region13: #{position_embedding_random_forward.1} parent=0 // pred_fallthru
    _
  // Predicated region
  $region14: #{position_embedding_random_forward.1} parent=0 // pred_check
    _
  $region15: #{position_embedding_random_forward.1} parent=0 // pred_check_branch
    %5137 = sbr.rel (0) target = $region17
  $region16: #{position_embedding_random_forward.1} parent=0 // pred_region
    _
  $region17: #{position_embedding_random_forward.1} parent=0 // pred_fallthru
    _

</llo_original>
